<compile_context>
chip_gen: v7x
topology: tpu7x:2x2x1
jax: 0.10.0
libtpu: 0.0.40
codegen_flags: <defaults>
</compile_context>

<pallas_src>
import functools

import jax
import jax.numpy as jnp
from jax import lax
from jax.experimental import pallas as pl
from jax.experimental.pallas import tpu as pltpu


def _layer_norm_f32(x, gamma, beta, eps):
    mu = jnp.mean(x, axis=-1, keepdims=True)
    xc = x - mu
    var = jnp.mean(xc * xc, axis=-1, keepdims=True)
    return xc * lax.rsqrt(var + eps) * gamma + beta


def _make_kernel(*, num_groups, group_size, head_dim, eps, use_mask):
    G, Dh = group_size, head_dim
    GDh = G * Dh

    def kernel(*args):
        if use_mask:
            (x_ref, mask_ref, ln1_g_ref, ln1_b_ref, wqkv_ref, bqkv_ref,
             wo_ref, bo_ref, ln2_g_ref, ln2_b_ref, w1_ref, b1_ref,
             w2_ref, b2_ref, out_ref, acc_ref) = args
        else:
            (x_ref, ln1_g_ref, ln1_b_ref, wqkv_ref, bqkv_ref,
             wo_ref, bo_ref, ln2_g_ref, ln2_b_ref, w1_ref, b1_ref,
             w2_ref, b2_ref, out_ref, acc_ref) = args
            mask_ref = None

        # ---- LayerNorm 1 (f32 statistics) ----
        x = x_ref[0].astype(jnp.float32)                       # (S, D)
        h = _layer_norm_f32(x, ln1_g_ref[...], ln1_b_ref[...], eps)
        h_b = h.astype(jnp.bfloat16)                           # MXU operand
        mask = mask_ref[0].astype(jnp.float32) if use_mask else None

        # ---- multi-head self-attention, head groups of G ----
        acc_ref[...] = jnp.zeros_like(acc_ref)                 # (S, D) f32

        def group_body(g, carry):
            # Fused Q/K/V projection for the G heads in this group:
            # (S, D) @ (D, 3*G*Dh), f32 accumulation.  1/sqrt(Dh) is already
            # folded into the Q columns/bias.
            qkv = jnp.dot(h_b, wqkv_ref[g],
                          preferred_element_type=jnp.float32) + bqkv_ref[g]

            ctx_parts = []
            for j in range(G):                                  # static, small
                qh = qkv[:, j * Dh:(j + 1) * Dh].astype(jnp.bfloat16)
                kh = qkv[:, GDh + j * Dh:GDh + (j + 1) * Dh].astype(jnp.bfloat16)
                vh = qkv[:, 2 * GDh + j * Dh:2 * GDh + (j + 1) * Dh].astype(jnp.bfloat16)

                s = lax.dot_general(qh, kh, (((1,), (1,)), ((), ())),
                                    preferred_element_type=jnp.float32)  # (S,S)
                if use_mask:
                    s = s + mask
                s = s - jnp.max(s, axis=-1, keepdims=True)      # f32
                p = jnp.exp(s)                                  # f32, <= 1
                l = jnp.sum(p, axis=-1, keepdims=True)          # f32 (S,1)

                ctx = jnp.dot(p.astype(jnp.bfloat16), vh,
                              preferred_element_type=jnp.float32)  # (S, Dh)
                # Normalize after the matmul: one (S,Dh) multiply instead of an
                # (S,S) divide; reciprocal goes to the EUP slot.
                ctx = ctx * pl.reciprocal(l, approx=True)
                ctx_parts.append(ctx.astype(jnp.bfloat16))

            ctxg = ctx_parts[0] if G == 1 else jnp.concatenate(ctx_parts, axis=-1)
            # Group output projection: (S, G*Dh) @ (G*Dh, D), f32 accumulate.
            acc_ref[...] += jnp.dot(ctxg, wo_ref[g],
                                    preferred_element_type=jnp.float32)
            return carry

        lax.fori_loop(0, num_groups, group_body, 0)

        # ---- residual 1 ----
        x1 = x + acc_ref[...] + bo_ref[...]                     # f32

        # ---- LayerNorm 2 + MLP (quick_gelu, the CLIP default) ----
        h2 = _layer_norm_f32(x1, ln2_g_ref[...], ln2_b_ref[...], eps)
        m = jnp.dot(h2.astype(jnp.bfloat16), w1_ref[...],
                    preferred_element_type=jnp.float32) + b1_ref[...]
        m = m * jax.nn.sigmoid(1.702 * m)                       # f32 quick_gelu
        m = jnp.dot(m.astype(jnp.bfloat16), w2_ref[...],
                    preferred_element_type=jnp.float32) + b2_ref[...]

        # ---- residual 2 ----
        out_ref[0] = (x1 + m).astype(out_ref.dtype)

    return kernel


def prepare_clip_layer_params(q_w, q_b, k_w, k_b, v_w, v_b, o_w, o_b,
                              fc1_w, fc1_b, fc2_w, fc2_b,
                              ln1_gamma, ln1_beta, ln2_gamma, ln2_beta,
                              *, num_heads, heads_per_group=None,
                              matmul_dtype=jnp.bfloat16):
    """One-time weight relayout (call once; NOT in the per-step hot path).

    Torch (out_features, in_features) layout -> kernel layout:
      wqkv : (NG, D, 3*G*Dh)  bf16, [Q|K|V] blocks, 1/sqrt(Dh) folded into Q
      bqkv : (NG, 1, 3*G*Dh)  f32
      wo   : (NG, G*Dh, D)    bf16
      w1/w2: (D,I)/(I,D)      bf16
      biases / LN params      f32
    """
    f32 = jnp.float32
    D = q_w.shape[0]
    Dh = D // num_heads

    if heads_per_group is None:
        heads_per_group = 1
        for g in range(num_heads, 0, -1):
            # largest divisor of H with G*Dh <= 256 (fills the v6e/v7x MXU;
            # pass heads_per_group=2 explicitly on v5e for K=N=128).
            if num_heads % g == 0 and g * Dh <= 256:
                heads_per_group = g
                break
    G = heads_per_group
    assert num_heads % G == 0, "heads_per_group must divide num_heads"
    NG = num_heads // G
    GDh = G * Dh
    scale = float(Dh) ** -0.5

    def split_cols(w_t):                       # (D, D) -> (NG, D, GDh)
        return w_t.reshape(D, NG, GDh).transpose(1, 0, 2)

    wq_t = q_w.T.astype(f32) * scale
    wk_t = k_w.T.astype(f32)
    wv_t = v_w.T.astype(f32)
    wqkv = jnp.concatenate(
        [split_cols(wq_t), split_cols(wk_t), split_cols(wv_t)],
        axis=2).astype(matmul_dtype)                                  # (NG,D,3GDh)
    bqkv = jnp.concatenate(
        [(q_b.astype(f32) * scale).reshape(NG, 1, GDh),
         k_b.astype(f32).reshape(NG, 1, GDh),
         v_b.astype(f32).reshape(NG, 1, GDh)], axis=2)                # (NG,1,3GDh)
    wo = o_w.T.astype(f32).reshape(NG, GDh, D).astype(matmul_dtype)   # (NG,GDh,D)

    I = fc1_w.shape[0]
    params = {
        "ln1_g": ln1_gamma.reshape(1, D).astype(f32),
        "ln1_b": ln1_beta.reshape(1, D).astype(f32),
        "wqkv": wqkv,
        "bqkv": bqkv,
        "wo": wo,
        "bo": o_b.reshape(1, D).astype(f32),
        "ln2_g": ln2_gamma.reshape(1, D).astype(f32),
        "ln2_b": ln2_beta.reshape(1, D).astype(f32),
        "w1": fc1_w.T.astype(matmul_dtype),                           # (D, I)
        "b1": fc1_b.reshape(1, I).astype(f32),
        "w2": fc2_w.T.astype(matmul_dtype),                           # (I, D)
        "b2": fc2_b.reshape(1, D).astype(f32),
    }
    return params


@functools.partial(jax.jit, static_argnames=("num_heads", "eps",
                                              "single_buffer_weights",
                                              "vmem_limit_bytes"))
def clip_encoder_layer(hidden_states, attn_mask, params, *, num_heads,
                       eps=1e-5, single_buffer_weights=True,
                       vmem_limit_bytes=48 * 1024 * 1024):
    """hidden_states [B, S, D] (any float dtype; output matches it).
    attn_mask: additive mask [1, S, S] or [B, S, S] (0 = attend, large negative
    = masked; pass attention_mask + causal_attention_mask collapsed over the
    head dim), or None (vision tower).  `params` from prepare_clip_layer_params.
    """
    B, S, D = hidden_states.shape
    Dh = D // num_heads
    GDh = params["wo"].shape[1]
    G = GDh // Dh
    NG = num_heads // G
    I = params["w1"].shape[1]
    use_mask = attn_mask is not None

    kernel = _make_kernel(num_groups=NG, group_size=G, head_dim=Dh,
                          eps=float(eps), use_mask=use_mask)

    def wspec(shape):
        # Constant index_map -> resident across the grid; single-buffer it so
        # bf16 weights fit v7x's 64 MiB VMEM.
        nd = len(shape)
        idx = (lambda b: (0,) * nd)
        if single_buffer_weights:
            return pl.BlockSpec(shape, idx, pipeline_mode=pl.Buffered(1))
        return pl.BlockSpec(shape, idx)

    in_specs = [pl.BlockSpec((1, S, D), lambda b: (b, 0, 0))]
    operands = [hidden_states]
    if use_mask:
        if attn_mask.shape[0] == 1:
            in_specs.append(wspec((1, S, S)))          # broadcast over batch
        else:
            in_specs.append(pl.BlockSpec((1, S, S), lambda b: (b, 0, 0)))
        operands.append(attn_mask)

    weight_order = [("ln1_g", (1, D)), ("ln1_b", (1, D)),
                    ("wqkv", (NG, D, 3 * GDh)), ("bqkv", (NG, 1, 3 * GDh)),
                    ("wo", (NG, GDh, D)), ("bo", (1, D)),
                    ("ln2_g", (1, D)), ("ln2_b", (1, D)),
                    ("w1", (D, I)), ("b1", (1, I)),
                    ("w2", (I, D)), ("b2", (1, D))]
    for name, shape in weight_order:
        in_specs.append(wspec(shape))
        operands.append(params[name])

    out = pl.pallas_call(
        kernel,
        out_shape=jax.ShapeDtypeStruct((B, S, D), hidden_states.dtype),
        grid_spec=pltpu.PrefetchScalarGridSpec(
            num_scalar_prefetch=0,
            grid=(B,),
            in_specs=in_specs,
            out_specs=pl.BlockSpec((1, S, D), lambda b: (b, 0, 0)),
            scratch_shapes=[pltpu.VMEM((S, D), jnp.float32)],   # attn accumulator
        ),
        compiler_params=pltpu.CompilerParams(
            dimension_semantics=("parallel",),
            vmem_limit_bytes=vmem_limit_bytes),
    )(*operands)
    return out


def _reference(hidden_states, attn_mask,
               ln1_gamma, ln1_beta,
               q_w, q_b, k_w, k_b, v_w, v_b, o_w, o_b,
               ln2_gamma, ln2_beta,
               fc1_w, fc1_b, fc2_w, fc2_b,
               *, num_heads, eps=1e-5):
    """Pure-JAX f32 reference matching the PyTorch CLIPEncoderLayer (eager)."""
    B, S, D = hidden_states.shape
    Dh = D // num_heads
    scale = float(Dh) ** -0.5

    def ln(x, g, b):
        mu = x.mean(-1, keepdims=True)
        var = ((x - mu) ** 2).mean(-1, keepdims=True)
        return (x - mu) / jnp.sqrt(var + eps) * g + b

    residual = hidden_states
    h = ln(hidden_states, ln1_gamma, ln1_beta)
    q = (h @ q_w.T + q_b) * scale
    k = h @ k_w.T + k_b
    v = h @ v_w.T + v_b

    def split(t):
        return t.reshape(B, S, num_heads, Dh).transpose(0, 2, 1, 3)

    q, k, v = split(q), split(k), split(v)
    w = jnp.einsum("bhqd,bhkd->bhqk", q, k)
    if attn_mask is not None:
        w = w + attn_mask[:, None, :, :]
    w = jax.nn.softmax(w, axis=-1)
    ctx = jnp.einsum("bhqk,bhkd->bhqd", w, v)
    ctx = ctx.transpose(0, 2, 1, 3).reshape(B, S, D)
    attn_out = ctx @ o_w.T + o_b
    x1 = residual + attn_out

    h2 = ln(x1, ln2_gamma, ln2_beta)
    m = h2 @ fc1_w.T + fc1_b
    m = m * jax.nn.sigmoid(1.702 * m)       # quick_gelu
    m = m @ fc2_w.T + fc2_b
    return x1 + m


if __name__ == "__main__":
    B, S, D = 2, 8, 32
    num_heads = 4
    I = 64
    eps = 1e-5

    key = jax.random.PRNGKey(0)
    ks = jax.random.split(key, 17)

    def w(k, shape, s=0.05):
        return jax.random.normal(k, shape, jnp.float32) * s

    hidden_states = jax.random.normal(ks[0], (B, S, D), jnp.float32)
    q_w, q_b = w(ks[1], (D, D)), w(ks[2], (D,))
    k_w, k_b = w(ks[3], (D, D)), w(ks[4], (D,))
    v_w, v_b = w(ks[5], (D, D)), w(ks[6], (D,))
    o_w, o_b = w(ks[7], (D, D)), w(ks[8], (D,))
    fc1_w, fc1_b = w(ks[9], (I, D)), w(ks[10], (I,))
    fc2_w, fc2_b = w(ks[11], (D, I)), w(ks[12], (D,))
    ln1_g = 1.0 + w(ks[13], (D,))
    ln1_b = w(ks[14], (D,))
    ln2_g = 1.0 + w(ks[15], (D,))
    ln2_b = w(ks[16], (D,))

    # Causal additive mask (CLIP text encoder), batch-broadcast shape (1,S,S).
    causal = jnp.where(jnp.tril(jnp.ones((S, S), dtype=bool)), 0.0, -1e9)
    attn_mask = causal.astype(jnp.float32)[None]

    # One-time weight relayout (outside the per-call hot path).
    params = prepare_clip_layer_params(
        q_w, q_b, k_w, k_b, v_w, v_b, o_w, o_b,
        fc1_w, fc1_b, fc2_w, fc2_b,
        ln1_g, ln1_b, ln2_g, ln2_b,
        num_heads=num_heads)
    params = jax.block_until_ready(params)

    def run(single_buffer):
        return clip_encoder_layer(hidden_states, attn_mask, params,
                                  num_heads=num_heads, eps=eps,
                                  single_buffer_weights=single_buffer)

    try:
        out = jax.block_until_ready(run(True))
    except Exception:
        # Fallback: default (double-buffered) weight pipelining.
        out = jax.block_until_ready(run(False))

    ref = _reference(
        hidden_states, attn_mask,
        ln1_g, ln1_b,
        q_w, q_b, k_w, k_b, v_w, v_b, o_w, o_b,
        ln2_g, ln2_b,
        fc1_w, fc1_b, fc2_w, fc2_b,
        num_heads=num_heads, eps=eps)

    assert out.shape == (B, S, D)
    assert out.dtype == hidden_states.dtype
    # bf16 MXU operands (f32 accumulation + f32 LN/softmax/residuals) -> 1e-2.
    max_err = float(jnp.max(jnp.abs(out.astype(jnp.float32) - ref)))
    assert jnp.allclose(out.astype(jnp.float32), ref, atol=1e-2, rtol=1e-2), (
        "mismatch vs reference: max abs err = %g" % max_err)
    print("KERNEL_OK")
</pallas_src>

<mosaic_0001>
module attributes {stable_mosaic.version = 11 : i64} {
  func.func @kernel(%arg0: i32, %arg1: memref<1x8x32xf32, #tpu.memory_space<vmem>>, %arg2: memref<1x8x8xf32, #tpu.memory_space<vmem>>, %arg3: memref<1x32xf32, #tpu.memory_space<vmem>>, %arg4: memref<1x32xf32, #tpu.memory_space<vmem>>, %arg5: memref<1x32x96xbf16, #tpu.memory_space<vmem>>, %arg6: memref<1x1x96xf32, #tpu.memory_space<vmem>>, %arg7: memref<1x32x32xbf16, #tpu.memory_space<vmem>>, %arg8: memref<1x32xf32, #tpu.memory_space<vmem>>, %arg9: memref<1x32xf32, #tpu.memory_space<vmem>>, %arg10: memref<1x32xf32, #tpu.memory_space<vmem>>, %arg11: memref<32x64xbf16, #tpu.memory_space<vmem>>, %arg12: memref<1x64xf32, #tpu.memory_space<vmem>>, %arg13: memref<64x32xbf16, #tpu.memory_space<vmem>>, %arg14: memref<1x32xf32, #tpu.memory_space<vmem>>, %arg15: memref<1x8x32xf32, #tpu.memory_space<vmem>>, %arg16: memref<8x32xf32, #tpu.memory_space<vmem>>) attributes {dimension_semantics = [#tpu.dimension_semantics<parallel>], iteration_bounds = array<i64: 2>, scalar_prefetch = 0 : i64, scratch_operands = 1 : i64, tpu.core_type = #tpu.core_type<tc>, window_params = [{transform_indices = @transform_0, window_bounds = array<i64: 1, 8, 32>}, {pipeline_mode = #tpu.pipeline_mode<synchronous>, transform_indices = @transform_1, window_bounds = array<i64: 1, 8, 8>}, {pipeline_mode = #tpu.pipeline_mode<synchronous>, transform_indices = @transform_2, window_bounds = array<i64: 1, 32>}, {pipeline_mode = #tpu.pipeline_mode<synchronous>, transform_indices = @transform_3, window_bounds = array<i64: 1, 32>}, {pipeline_mode = #tpu.pipeline_mode<synchronous>, transform_indices = @transform_4, window_bounds = array<i64: 1, 32, 96>}, {pipeline_mode = #tpu.pipeline_mode<synchronous>, transform_indices = @transform_5, window_bounds = array<i64: 1, 1, 96>}, {pipeline_mode = #tpu.pipeline_mode<synchronous>, transform_indices = @transform_6, window_bounds = array<i64: 1, 32, 32>}, {pipeline_mode = #tpu.pipeline_mode<synchronous>, transform_indices = @transform_7, window_bounds = array<i64: 1, 32>}, {pipeline_mode = #tpu.pipeline_mode<synchronous>, transform_indices = @transform_8, window_bounds = array<i64: 1, 32>}, {pipeline_mode = #tpu.pipeline_mode<synchronous>, transform_indices = @transform_9, window_bounds = array<i64: 1, 32>}, {pipeline_mode = #tpu.pipeline_mode<synchronous>, transform_indices = @transform_10, window_bounds = array<i64: 32, 64>}, {pipeline_mode = #tpu.pipeline_mode<synchronous>, transform_indices = @transform_11, window_bounds = array<i64: 1, 64>}, {pipeline_mode = #tpu.pipeline_mode<synchronous>, transform_indices = @transform_12, window_bounds = array<i64: 64, 32>}, {pipeline_mode = #tpu.pipeline_mode<synchronous>, transform_indices = @transform_13, window_bounds = array<i64: 1, 32>}, {transform_indices = @transform_14, window_bounds = array<i64: 1, 8, 32>}]} {
    %c0 = arith.constant 0 : index
    %c0_0 = arith.constant 0 : index
    %c0_1 = arith.constant 0 : index
    %0 = vector.load %arg1[%c0, %c0_0, %c0_1] : memref<1x8x32xf32, #tpu.memory_space<vmem>>, vector<1x8x32xf32>
    %1 = vector.shape_cast %0 : vector<1x8x32xf32> to vector<8x32xf32>
    %c0_2 = arith.constant 0 : index
    %c0_3 = arith.constant 0 : index
    %2 = vector.load %arg3[%c0_2, %c0_3] : memref<1x32xf32, #tpu.memory_space<vmem>>, vector<1x32xf32>
    %c0_4 = arith.constant 0 : index
    %c0_5 = arith.constant 0 : index
    %3 = vector.load %arg4[%c0_4, %c0_5] : memref<1x32xf32, #tpu.memory_space<vmem>>, vector<1x32xf32>
    %cst = arith.constant dense<0.000000e+00> : vector<8xf32>
    %4 = vector.multi_reduction <add>, %1, %cst [1] : vector<8x32xf32> to vector<8xf32>
    %5 = vector.shape_cast %4 : vector<8xf32> to vector<8x1xf32>
    %cst_6 = arith.constant 3.200000e+01 : f32
    %6 = vector.broadcast %cst_6 : f32 to vector<8x1xf32>
    %7 = arith.divf %5, %6 : vector<8x1xf32>
    %8 = vector.broadcast %7 : vector<8x1xf32> to vector<8x32xf32>
    %9 = arith.subf %1, %8 : vector<8x32xf32>
    %10 = arith.mulf %9, %9 : vector<8x32xf32>
    %cst_7 = arith.constant dense<0.000000e+00> : vector<8xf32>
    %11 = vector.multi_reduction <add>, %10, %cst_7 [1] : vector<8x32xf32> to vector<8xf32>
    %12 = vector.shape_cast %11 : vector<8xf32> to vector<8x1xf32>
    %cst_8 = arith.constant 3.200000e+01 : f32
    %13 = vector.broadcast %cst_8 : f32 to vector<8x1xf32>
    %14 = arith.divf %12, %13 : vector<8x1xf32>
    %cst_9 = arith.constant 9.99999974E-6 : f32
    %15 = vector.broadcast %cst_9 : f32 to vector<8x1xf32>
    %16 = arith.addf %14, %15 : vector<8x1xf32>
    %17 = math.rsqrt %16 : vector<8x1xf32>
    %18 = vector.broadcast %17 : vector<8x1xf32> to vector<8x32xf32>
    %19 = arith.mulf %9, %18 : vector<8x32xf32>
    %20 = vector.broadcast %2 : vector<1x32xf32> to vector<8x32xf32>
    %21 = arith.mulf %19, %20 : vector<8x32xf32>
    %22 = vector.broadcast %3 : vector<1x32xf32> to vector<8x32xf32>
    %23 = arith.addf %21, %22 : vector<8x32xf32>
    %24 = arith.truncf %23 : vector<8x32xf32> to vector<8x32xbf16>
    %c0_10 = arith.constant 0 : index
    %c0_11 = arith.constant 0 : index
    %c0_12 = arith.constant 0 : index
    %25 = vector.load %arg2[%c0_10, %c0_11, %c0_12] : memref<1x8x8xf32, #tpu.memory_space<vmem>>, vector<1x8x8xf32>
    %26 = vector.shape_cast %25 : vector<1x8x8xf32> to vector<8x8xf32>
    %cst_13 = arith.constant 0.000000e+00 : f32
    %27 = vector.broadcast %cst_13 : f32 to vector<8x32xf32>
    %c0_14 = arith.constant 0 : index
    %c0_15 = arith.constant 0 : index
    %28 = vector.load %arg16[%c0_14, %c0_15] : memref<8x32xf32, #tpu.memory_space<vmem>>, vector<8x32xf32>
    tpu.vector_store %arg16[%c0_14, %c0_15], %27 {strides = array<i32>} : memref<8x32xf32, #tpu.memory_space<vmem>>, vector<8x32xf32>,
    %c0_i32 = arith.constant 0 : i32
    %29 = arith.index_cast %c0_i32 : i32 to index
    %c0_16 = arith.constant 0 : index
    %c0_17 = arith.constant 0 : index
    %30 = vector.load %arg5[%29, %c0_16, %c0_17] : memref<1x32x96xbf16, #tpu.memory_space<vmem>>, vector<1x32x96xbf16>
    %31 = vector.shape_cast %30 : vector<1x32x96xbf16> to vector<32x96xbf16>
    %cst_18 = arith.constant dense<0.000000e+00> : vector<8x96xf32>
    %32 = tpu.matmul %24, %31, %cst_18 {dimension_numbers = #tpu.dot_dimension_numbers<[1], [0], [0], [1], [0, 0, 1, 1], [], []>} : vector<8x32xbf16>, vector<32x96xbf16>, vector<8x96xf32> -> vector<8x96xf32>
    %33 = arith.index_cast %c0_i32 : i32 to index
    %c0_19 = arith.constant 0 : index
    %c0_20 = arith.constant 0 : index
    %34 = vector.load %arg6[%33, %c0_19, %c0_20] : memref<1x1x96xf32, #tpu.memory_space<vmem>>, vector<1x1x96xf32>
    %35 = vector.shape_cast %34 : vector<1x1x96xf32> to vector<1x96xf32>
    %36 = vector.broadcast %35 : vector<1x96xf32> to vector<8x96xf32>
    %37 = arith.addf %32, %36 : vector<8x96xf32>
    %38 = vector.extract_strided_slice %37 {offsets = [0, 0], sizes = [8, 8], strides = [1, 1]} : vector<8x96xf32> to vector<8x8xf32>
    %39 = arith.truncf %38 : vector<8x8xf32> to vector<8x8xbf16>
    %40 = vector.extract_strided_slice %37 {offsets = [0, 32], sizes = [8, 8], strides = [1, 1]} : vector<8x96xf32> to vector<8x8xf32>
    %41 = arith.truncf %40 : vector<8x8xf32> to vector<8x8xbf16>
    %42 = vector.extract_strided_slice %37 {offsets = [0, 64], sizes = [8, 8], strides = [1, 1]} : vector<8x96xf32> to vector<8x8xf32>
    %43 = arith.truncf %42 : vector<8x8xf32> to vector<8x8xbf16>
    %cst_21 = arith.constant dense<0.000000e+00> : vector<8x8xf32>
    %44 = tpu.matmul %39, %41, %cst_21 {dimension_numbers = #tpu.dot_dimension_numbers<[1], [1], [0], [0], [0, 0, 1, 0], [], []>} : vector<8x8xbf16>, vector<8x8xbf16>, vector<8x8xf32> -> vector<8x8xf32>
    %45 = arith.addf %44, %26 : vector<8x8xf32>
    %cst_22 = arith.constant dense<0xFF800000> : vector<8xf32>
    %46 = vector.multi_reduction <maximumf>, %45, %cst_22 [1] : vector<8x8xf32> to vector<8xf32>
    %47 = vector.shape_cast %46 : vector<8xf32> to vector<8x1xf32>
    %48 = vector.broadcast %47 : vector<8x1xf32> to vector<8x8xf32>
    %49 = arith.subf %45, %48 : vector<8x8xf32>
    %50 = math.exp %49 : vector<8x8xf32>
    %cst_23 = arith.constant dense<0.000000e+00> : vector<8xf32>
    %51 = vector.multi_reduction <add>, %50, %cst_23 [1] : vector<8x8xf32> to vector<8xf32>
    %52 = vector.shape_cast %51 : vector<8xf32> to vector<8x1xf32>
    %53 = arith.truncf %50 : vector<8x8xf32> to vector<8x8xbf16>
    %cst_24 = arith.constant dense<0.000000e+00> : vector<8x8xf32>
    %54 = tpu.matmul %53, %43, %cst_24 {dimension_numbers = #tpu.dot_dimension_numbers<[1], [0], [0], [1], [0, 0, 1, 1], [], []>} : vector<8x8xbf16>, vector<8x8xbf16>, vector<8x8xf32> -> vector<8x8xf32>
    %55 = tpu.reciprocal %52 {approx = true} : vector<8x1xf32> -> vector<8x1xf32>
    %56 = vector.broadcast %55 : vector<8x1xf32> to vector<8x8xf32>
    %57 = arith.mulf %54, %56 : vector<8x8xf32>
    %58 = arith.truncf %57 : vector<8x8xf32> to vector<8x8xbf16>
    %59 = vector.extract_strided_slice %37 {offsets = [0, 8], sizes = [8, 8], strides = [1, 1]} : vector<8x96xf32> to vector<8x8xf32>
    %60 = arith.truncf %59 : vector<8x8xf32> to vector<8x8xbf16>
    %61 = vector.extract_strided_slice %37 {offsets = [0, 40], sizes = [8, 8], strides = [1, 1]} : vector<8x96xf32> to vector<8x8xf32>
    %62 = arith.truncf %61 : vector<8x8xf32> to vector<8x8xbf16>
    %63 = vector.extract_strided_slice %37 {offsets = [0, 72], sizes = [8, 8], strides = [1, 1]} : vector<8x96xf32> to vector<8x8xf32>
    %64 = arith.truncf %63 : vector<8x8xf32> to vector<8x8xbf16>
    %cst_25 = arith.constant dense<0.000000e+00> : vector<8x8xf32>
    %65 = tpu.matmul %60, %62, %cst_25 {dimension_numbers = #tpu.dot_dimension_numbers<[1], [1], [0], [0], [0, 0, 1, 0], [], []>} : vector<8x8xbf16>, vector<8x8xbf16>, vector<8x8xf32> -> vector<8x8xf32>
    %66 = arith.addf %65, %26 : vector<8x8xf32>
    %cst_26 = arith.constant dense<0xFF800000> : vector<8xf32>
    %67 = vector.multi_reduction <maximumf>, %66, %cst_26 [1] : vector<8x8xf32> to vector<8xf32>
    %68 = vector.shape_cast %67 : vector<8xf32> to vector<8x1xf32>
    %69 = vector.broadcast %68 : vector<8x1xf32> to vector<8x8xf32>
    %70 = arith.subf %66, %69 : vector<8x8xf32>
    %71 = math.exp %70 : vector<8x8xf32>
    %cst_27 = arith.constant dense<0.000000e+00> : vector<8xf32>
    %72 = vector.multi_reduction <add>, %71, %cst_27 [1] : vector<8x8xf32> to vector<8xf32>
    %73 = vector.shape_cast %72 : vector<8xf32> to vector<8x1xf32>
    %74 = arith.truncf %71 : vector<8x8xf32> to vector<8x8xbf16>
    %cst_28 = arith.constant dense<0.000000e+00> : vector<8x8xf32>
    %75 = tpu.matmul %74, %64, %cst_28 {dimension_numbers = #tpu.dot_dimension_numbers<[1], [0], [0], [1], [0, 0, 1, 1], [], []>} : vector<8x8xbf16>, vector<8x8xbf16>, vector<8x8xf32> -> vector<8x8xf32>
    %76 = tpu.reciprocal %73 {approx = true} : vector<8x1xf32> -> vector<8x1xf32>
    %77 = vector.broadcast %76 : vector<8x1xf32> to vector<8x8xf32>
    %78 = arith.mulf %75, %77 : vector<8x8xf32>
    %79 = arith.truncf %78 : vector<8x8xf32> to vector<8x8xbf16>
    %80 = vector.extract_strided_slice %37 {offsets = [0, 16], sizes = [8, 8], strides = [1, 1]} : vector<8x96xf32> to vector<8x8xf32>
    %81 = arith.truncf %80 : vector<8x8xf32> to vector<8x8xbf16>
    %82 = vector.extract_strided_slice %37 {offsets = [0, 48], sizes = [8, 8], strides = [1, 1]} : vector<8x96xf32> to vector<8x8xf32>
    %83 = arith.truncf %82 : vector<8x8xf32> to vector<8x8xbf16>
    %84 = vector.extract_strided_slice %37 {offsets = [0, 80], sizes = [8, 8], strides = [1, 1]} : vector<8x96xf32> to vector<8x8xf32>
    %85 = arith.truncf %84 : vector<8x8xf32> to vector<8x8xbf16>
    %cst_29 = arith.constant dense<0.000000e+00> : vector<8x8xf32>
    %86 = tpu.matmul %81, %83, %cst_29 {dimension_numbers = #tpu.dot_dimension_numbers<[1], [1], [0], [0], [0, 0, 1, 0], [], []>} : vector<8x8xbf16>, vector<8x8xbf16>, vector<8x8xf32> -> vector<8x8xf32>
    %87 = arith.addf %86, %26 : vector<8x8xf32>
    %cst_30 = arith.constant dense<0xFF800000> : vector<8xf32>
    %88 = vector.multi_reduction <maximumf>, %87, %cst_30 [1] : vector<8x8xf32> to vector<8xf32>
    %89 = vector.shape_cast %88 : vector<8xf32> to vector<8x1xf32>
    %90 = vector.broadcast %89 : vector<8x1xf32> to vector<8x8xf32>
    %91 = arith.subf %87, %90 : vector<8x8xf32>
    %92 = math.exp %91 : vector<8x8xf32>
    %cst_31 = arith.constant dense<0.000000e+00> : vector<8xf32>
    %93 = vector.multi_reduction <add>, %92, %cst_31 [1] : vector<8x8xf32> to vector<8xf32>
    %94 = vector.shape_cast %93 : vector<8xf32> to vector<8x1xf32>
    %95 = arith.truncf %92 : vector<8x8xf32> to vector<8x8xbf16>
    %cst_32 = arith.constant dense<0.000000e+00> : vector<8x8xf32>
    %96 = tpu.matmul %95, %85, %cst_32 {dimension_numbers = #tpu.dot_dimension_numbers<[1], [0], [0], [1], [0, 0, 1, 1], [], []>} : vector<8x8xbf16>, vector<8x8xbf16>, vector<8x8xf32> -> vector<8x8xf32>
    %97 = tpu.reciprocal %94 {approx = true} : vector<8x1xf32> -> vector<8x1xf32>
    %98 = vector.broadcast %97 : vector<8x1xf32> to vector<8x8xf32>
    %99 = arith.mulf %96, %98 : vector<8x8xf32>
    %100 = arith.truncf %99 : vector<8x8xf32> to vector<8x8xbf16>
    %101 = vector.extract_strided_slice %37 {offsets = [0, 24], sizes = [8, 8], strides = [1, 1]} : vector<8x96xf32> to vector<8x8xf32>
    %102 = arith.truncf %101 : vector<8x8xf32> to vector<8x8xbf16>
    %103 = vector.extract_strided_slice %37 {offsets = [0, 56], sizes = [8, 8], strides = [1, 1]} : vector<8x96xf32> to vector<8x8xf32>
    %104 = arith.truncf %103 : vector<8x8xf32> to vector<8x8xbf16>
    %105 = vector.extract_strided_slice %37 {offsets = [0, 88], sizes = [8, 8], strides = [1, 1]} : vector<8x96xf32> to vector<8x8xf32>
    %106 = arith.truncf %105 : vector<8x8xf32> to vector<8x8xbf16>
    %cst_33 = arith.constant dense<0.000000e+00> : vector<8x8xf32>
    %107 = tpu.matmul %102, %104, %cst_33 {dimension_numbers = #tpu.dot_dimension_numbers<[1], [1], [0], [0], [0, 0, 1, 0], [], []>} : vector<8x8xbf16>, vector<8x8xbf16>, vector<8x8xf32> -> vector<8x8xf32>
    %108 = arith.addf %107, %26 : vector<8x8xf32>
    %cst_34 = arith.constant dense<0xFF800000> : vector<8xf32>
    %109 = vector.multi_reduction <maximumf>, %108, %cst_34 [1] : vector<8x8xf32> to vector<8xf32>
    %110 = vector.shape_cast %109 : vector<8xf32> to vector<8x1xf32>
    %111 = vector.broadcast %110 : vector<8x1xf32> to vector<8x8xf32>
    %112 = arith.subf %108, %111 : vector<8x8xf32>
    %113 = math.exp %112 : vector<8x8xf32>
    %cst_35 = arith.constant dense<0.000000e+00> : vector<8xf32>
    %114 = vector.multi_reduction <add>, %113, %cst_35 [1] : vector<8x8xf32> to vector<8xf32>
    %115 = vector.shape_cast %114 : vector<8xf32> to vector<8x1xf32>
    %116 = arith.truncf %113 : vector<8x8xf32> to vector<8x8xbf16>
    %cst_36 = arith.constant dense<0.000000e+00> : vector<8x8xf32>
    %117 = tpu.matmul %116, %106, %cst_36 {dimension_numbers = #tpu.dot_dimension_numbers<[1], [0], [0], [1], [0, 0, 1, 1], [], []>} : vector<8x8xbf16>, vector<8x8xbf16>, vector<8x8xf32> -> vector<8x8xf32>
    %118 = tpu.reciprocal %115 {approx = true} : vector<8x1xf32> -> vector<8x1xf32>
    %119 = vector.broadcast %118 : vector<8x1xf32> to vector<8x8xf32>
    %120 = arith.mulf %117, %119 : vector<8x8xf32>
    %121 = arith.truncf %120 : vector<8x8xf32> to vector<8x8xbf16>
    %122 = tpu.concatenate %58, %79, %100, %121 in 1 : vector<8x8xbf16>, vector<8x8xbf16>, vector<8x8xbf16>, vector<8x8xbf16> -> vector<8x32xbf16>
    %c0_37 = arith.constant 0 : index
    %c0_38 = arith.constant 0 : index
    %123 = vector.load %arg16[%c0_37, %c0_38] : memref<8x32xf32, #tpu.memory_space<vmem>>, vector<8x32xf32>
    %124 = arith.index_cast %c0_i32 : i32 to index
    %c0_39 = arith.constant 0 : index
    %c0_40 = arith.constant 0 : index
    %125 = vector.load %arg7[%124, %c0_39, %c0_40] : memref<1x32x32xbf16, #tpu.memory_space<vmem>>, vector<1x32x32xbf16>
    %126 = vector.shape_cast %125 : vector<1x32x32xbf16> to vector<32x32xbf16>
    %cst_41 = arith.constant dense<0.000000e+00> : vector<8x32xf32>
    %127 = tpu.matmul %122, %126, %cst_41 {dimension_numbers = #tpu.dot_dimension_numbers<[1], [0], [0], [1], [0, 0, 1, 1], [], []>} : vector<8x32xbf16>, vector<32x32xbf16>, vector<8x32xf32> -> vector<8x32xf32>
    %128 = arith.addf %123, %127 : vector<8x32xf32>
    %c0_42 = arith.constant 0 : index
    %c0_43 = arith.constant 0 : index
    %129 = vector.load %arg16[%c0_42, %c0_43] : memref<8x32xf32, #tpu.memory_space<vmem>>, vector<8x32xf32>
    tpu.vector_store %arg16[%c0_42, %c0_43], %128 {strides = array<i32>} : memref<8x32xf32, #tpu.memory_space<vmem>>, vector<8x32xf32>,
    %c1_i32 = arith.constant 1 : i32
    %c0_44 = arith.constant 0 : index
    %c0_45 = arith.constant 0 : index
    %130 = vector.load %arg16[%c0_44, %c0_45] : memref<8x32xf32, #tpu.memory_space<vmem>>, vector<8x32xf32>
    %131 = arith.addf %1, %130 : vector<8x32xf32>
    %c0_46 = arith.constant 0 : index
    %c0_47 = arith.constant 0 : index
    %132 = vector.load %arg8[%c0_46, %c0_47] : memref<1x32xf32, #tpu.memory_space<vmem>>, vector<1x32xf32>
    %133 = vector.broadcast %132 : vector<1x32xf32> to vector<8x32xf32>
    %134 = arith.addf %131, %133 : vector<8x32xf32>
    %c0_48 = arith.constant 0 : index
    %c0_49 = arith.constant 0 : index
    %135 = vector.load %arg9[%c0_48, %c0_49] : memref<1x32xf32, #tpu.memory_space<vmem>>, vector<1x32xf32>
    %c0_50 = arith.constant 0 : index
    %c0_51 = arith.constant 0 : index
    %136 = vector.load %arg10[%c0_50, %c0_51] : memref<1x32xf32, #tpu.memory_space<vmem>>, vector<1x32xf32>
    %cst_52 = arith.constant dense<0.000000e+00> : vector<8xf32>
    %137 = vector.multi_reduction <add>, %134, %cst_52 [1] : vector<8x32xf32> to vector<8xf32>
    %138 = vector.shape_cast %137 : vector<8xf32> to vector<8x1xf32>
    %cst_53 = arith.constant 3.200000e+01 : f32
    %139 = vector.broadcast %cst_53 : f32 to vector<8x1xf32>
    %140 = arith.divf %138, %139 : vector<8x1xf32>
    %141 = vector.broadcast %140 : vector<8x1xf32> to vector<8x32xf32>
    %142 = arith.subf %134, %141 : vector<8x32xf32>
    %143 = arith.mulf %142, %142 : vector<8x32xf32>
    %cst_54 = arith.constant dense<0.000000e+00> : vector<8xf32>
    %144 = vector.multi_reduction <add>, %143, %cst_54 [1] : vector<8x32xf32> to vector<8xf32>
    %145 = vector.shape_cast %144 : vector<8xf32> to vector<8x1xf32>
    %cst_55 = arith.constant 3.200000e+01 : f32
    %146 = vector.broadcast %cst_55 : f32 to vector<8x1xf32>
    %147 = arith.divf %145, %146 : vector<8x1xf32>
    %cst_56 = arith.constant 9.99999974E-6 : f32
    %148 = vector.broadcast %cst_56 : f32 to vector<8x1xf32>
    %149 = arith.addf %147, %148 : vector<8x1xf32>
    %150 = math.rsqrt %149 : vector<8x1xf32>
    %151 = vector.broadcast %150 : vector<8x1xf32> to vector<8x32xf32>
    %152 = arith.mulf %142, %151 : vector<8x32xf32>
    %153 = vector.broadcast %135 : vector<1x32xf32> to vector<8x32xf32>
    %154 = arith.mulf %152, %153 : vector<8x32xf32>
    %155 = vector.broadcast %136 : vector<1x32xf32> to vector<8x32xf32>
    %156 = arith.addf %154, %155 : vector<8x32xf32>
    %157 = arith.truncf %156 : vector<8x32xf32> to vector<8x32xbf16>
    %c0_57 = arith.constant 0 : index
    %c0_58 = arith.constant 0 : index
    %158 = vector.load %arg11[%c0_57, %c0_58] : memref<32x64xbf16, #tpu.memory_space<vmem>>, vector<32x64xbf16>
    %cst_59 = arith.constant dense<0.000000e+00> : vector<8x64xf32>
    %159 = tpu.matmul %157, %158, %cst_59 {dimension_numbers = #tpu.dot_dimension_numbers<[1], [0], [0], [1], [0, 0, 1, 1], [], []>} : vector<8x32xbf16>, vector<32x64xbf16>, vector<8x64xf32> -> vector<8x64xf32>
    %c0_60 = arith.constant 0 : index
    %c0_61 = arith.constant 0 : index
    %160 = vector.load %arg12[%c0_60, %c0_61] : memref<1x64xf32, #tpu.memory_space<vmem>>, vector<1x64xf32>
    %161 = vector.broadcast %160 : vector<1x64xf32> to vector<8x64xf32>
    %162 = arith.addf %159, %161 : vector<8x64xf32>
    %cst_62 = arith.constant 1.702000e+00 : f32
    %163 = vector.broadcast %cst_62 : f32 to vector<8x64xf32>
    %164 = arith.mulf %163, %162 : vector<8x64xf32>
    %165 = arith.negf %164 : vector<8x64xf32>
    %166 = math.exp %165 : vector<8x64xf32>
    %cst_63 = arith.constant 1.000000e+00 : f32
    %167 = vector.broadcast %cst_63 : f32 to vector<8x64xf32>
    %168 = arith.addf %167, %166 : vector<8x64xf32>
    %169 = arith.divf %167, %168 : vector<8x64xf32>
    %170 = arith.mulf %162, %169 : vector<8x64xf32>
    %171 = arith.truncf %170 : vector<8x64xf32> to vector<8x64xbf16>
    %c0_64 = arith.constant 0 : index
    %c0_65 = arith.constant 0 : index
    %172 = vector.load %arg13[%c0_64, %c0_65] : memref<64x32xbf16, #tpu.memory_space<vmem>>, vector<64x32xbf16>
    %cst_66 = arith.constant dense<0.000000e+00> : vector<8x32xf32>
    %173 = tpu.matmul %171, %172, %cst_66 {dimension_numbers = #tpu.dot_dimension_numbers<[1], [0], [0], [1], [0, 0, 1, 1], [], []>} : vector<8x64xbf16>, vector<64x32xbf16>, vector<8x32xf32> -> vector<8x32xf32>
    %c0_67 = arith.constant 0 : index
    %c0_68 = arith.constant 0 : index
    %174 = vector.load %arg14[%c0_67, %c0_68] : memref<1x32xf32, #tpu.memory_space<vmem>>, vector<1x32xf32>
    %175 = vector.broadcast %174 : vector<1x32xf32> to vector<8x32xf32>
    %176 = arith.addf %173, %175 : vector<8x32xf32>
    %177 = arith.addf %134, %176 : vector<8x32xf32>
    %c0_69 = arith.constant 0 : index
    %c0_70 = arith.constant 0 : index
    %c0_71 = arith.constant 0 : index
    %178 = vector.load %arg15[%c0_69, %c0_70, %c0_71] : memref<1x8x32xf32, #tpu.memory_space<vmem>>, vector<1x8x32xf32>
    %179 = vector.shape_cast %178 : vector<1x8x32xf32> to vector<8x32xf32>
    %180 = vector.shape_cast %177 : vector<8x32xf32> to vector<1x8x32xf32>
    tpu.vector_store %arg15[%c0_69, %c0_70, %c0_71], %180 {strides = array<i32>} : memref<1x8x32xf32, #tpu.memory_space<vmem>>, vector<1x8x32xf32>,
    return
  }
  func.func @transform_0(%arg0: i32) -> (i32, i32, i32) {
    %c0_i32 = arith.constant 0 : i32
    %c0_i32_0 = arith.constant 0 : i32
    %c0_i32_1 = arith.constant 0 : i32
    return %arg0, %c0_i32, %c0_i32_0 : i32, i32, i32
  }
  func.func @transform_1(%arg0: i32) -> (i32, i32, i32) {
    %c0_i32 = arith.constant 0 : i32
    %c0_i32_0 = arith.constant 0 : i32
    %c0_i32_1 = arith.constant 0 : i32
    %c0_i32_2 = arith.constant 0 : i32
    return %c0_i32, %c0_i32_0, %c0_i32_1 : i32, i32, i32
  }
  func.func @transform_2(%arg0: i32) -> (i32, i32) {
    %c0_i32 = arith.constant 0 : i32
    %c0_i32_0 = arith.constant 0 : i32
    %c0_i32_1 = arith.constant 0 : i32
    return %c0_i32, %c0_i32_0 : i32, i32
  }
  func.func @transform_3(%arg0: i32) -> (i32, i32) {
    %c0_i32 = arith.constant 0 : i32
    %c0_i32_0 = arith.constant 0 : i32
    %c0_i32_1 = arith.constant 0 : i32
    return %c0_i32, %c0_i32_0 : i32, i32
  }
  func.func @transform_4(%arg0: i32) -> (i32, i32, i32) {
    %c0_i32 = arith.constant 0 : i32
    %c0_i32_0 = arith.constant 0 : i32
    %c0_i32_1 = arith.constant 0 : i32
    %c0_i32_2 = arith.constant 0 : i32
    return %c0_i32, %c0_i32_0, %c0_i32_1 : i32, i32, i32
  }
  func.func @transform_5(%arg0: i32) -> (i32, i32, i32) {
    %c0_i32 = arith.constant 0 : i32
    %c0_i32_0 = arith.constant 0 : i32
    %c0_i32_1 = arith.constant 0 : i32
    %c0_i32_2 = arith.constant 0 : i32
    return %c0_i32, %c0_i32_0, %c0_i32_1 : i32, i32, i32
  }
  func.func @transform_6(%arg0: i32) -> (i32, i32, i32) {
    %c0_i32 = arith.constant 0 : i32
    %c0_i32_0 = arith.constant 0 : i32
    %c0_i32_1 = arith.constant 0 : i32
    %c0_i32_2 = arith.constant 0 : i32
    return %c0_i32, %c0_i32_0, %c0_i32_1 : i32, i32, i32
  }
  func.func @transform_7(%arg0: i32) -> (i32, i32) {
    %c0_i32 = arith.constant 0 : i32
    %c0_i32_0 = arith.constant 0 : i32
    %c0_i32_1 = arith.constant 0 : i32
    return %c0_i32, %c0_i32_0 : i32, i32
  }
  func.func @transform_8(%arg0: i32) -> (i32, i32) {
    %c0_i32 = arith.constant 0 : i32
    %c0_i32_0 = arith.constant 0 : i32
    %c0_i32_1 = arith.constant 0 : i32
    return %c0_i32, %c0_i32_0 : i32, i32
  }
  func.func @transform_9(%arg0: i32) -> (i32, i32) {
    %c0_i32 = arith.constant 0 : i32
    %c0_i32_0 = arith.constant 0 : i32
    %c0_i32_1 = arith.constant 0 : i32
    return %c0_i32, %c0_i32_0 : i32, i32
  }
  func.func @transform_10(%arg0: i32) -> (i32, i32) {
    %c0_i32 = arith.constant 0 : i32
    %c0_i32_0 = arith.constant 0 : i32
    %c0_i32_1 = arith.constant 0 : i32
    return %c0_i32, %c0_i32_0 : i32, i32
  }
  func.func @transform_11(%arg0: i32) -> (i32, i32) {
    %c0_i32 = arith.constant 0 : i32
    %c0_i32_0 = arith.constant 0 : i32
    %c0_i32_1 = arith.constant 0 : i32
    return %c0_i32, %c0_i32_0 : i32, i32
  }
  func.func @transform_12(%arg0: i32) -> (i32, i32) {
    %c0_i32 = arith.constant 0 : i32
    %c0_i32_0 = arith.constant 0 : i32
    %c0_i32_1 = arith.constant 0 : i32
    return %c0_i32, %c0_i32_0 : i32, i32
  }
  func.func @transform_13(%arg0: i32) -> (i32, i32) {
    %c0_i32 = arith.constant 0 : i32
    %c0_i32_0 = arith.constant 0 : i32
    %c0_i32_1 = arith.constant 0 : i32
    return %c0_i32, %c0_i32_0 : i32, i32
  }
  func.func @transform_14(%arg0: i32) -> (i32, i32, i32) {
    %c0_i32 = arith.constant 0 : i32
    %c0_i32_0 = arith.constant 0 : i32
    %c0_i32_1 = arith.constant 0 : i32
    return %arg0, %c0_i32, %c0_i32_0 : i32, i32, i32
  }
}

module attributes {stable_mosaic.version = 11 : i64} {
  func.func @kernel(%arg0: i32, %arg1: memref<1x8x32xf32, #tpu.memory_space<vmem>>, %arg2: memref<1x8x8xf32, #tpu.memory_space<vmem>>, %arg3: memref<1x32xf32, #tpu.memory_space<vmem>>, %arg4: memref<1x32xf32, #tpu.memory_space<vmem>>, %arg5: memref<1x32x96xbf16, #tpu.memory_space<vmem>>, %arg6: memref<1x1x96xf32, #tpu.memory_space<vmem>>, %arg7: memref<1x32x32xbf16, #tpu.memory_space<vmem>>, %arg8: memref<1x32xf32, #tpu.memory_space<vmem>>, %arg9: memref<1x32xf32, #tpu.memory_space<vmem>>, %arg10: memref<1x32xf32, #tpu.memory_space<vmem>>, %arg11: memref<32x64xbf16, #tpu.memory_space<vmem>>, %arg12: memref<1x64xf32, #tpu.memory_space<vmem>>, %arg13: memref<64x32xbf16, #tpu.memory_space<vmem>>, %arg14: memref<1x32xf32, #tpu.memory_space<vmem>>, %arg15: memref<1x8x32xf32, #tpu.memory_space<vmem>>, %arg16: memref<8x32xf32, #tpu.memory_space<vmem>>) attributes {dimension_semantics = [#tpu.dimension_semantics<parallel>], iteration_bounds = array<i64: 2>, scalar_prefetch = 0 : i64, scratch_operands = 1 : i64, tpu.core_type = #tpu.core_type<tc>, window_params = [{transform_indices = @transform_0, window_bounds = array<i64: 1, 8, 32>}, {pipeline_mode = #tpu.pipeline_mode<synchronous>, transform_indices = @transform_1, window_bounds = array<i64: 1, 8, 8>}, {pipeline_mode = #tpu.pipeline_mode<synchronous>, transform_indices = @transform_2, window_bounds = array<i64: 1, 32>}, {pipeline_mode = #tpu.pipeline_mode<synchronous>, transform_indices = @transform_3, window_bounds = array<i64: 1, 32>}, {pipeline_mode = #tpu.pipeline_mode<synchronous>, transform_indices = @transform_4, window_bounds = array<i64: 1, 32, 96>}, {pipeline_mode = #tpu.pipeline_mode<synchronous>, transform_indices = @transform_5, window_bounds = array<i64: 1, 1, 96>}, {pipeline_mode = #tpu.pipeline_mode<synchronous>, transform_indices = @transform_6, window_bounds = array<i64: 1, 32, 32>}, {pipeline_mode = #tpu.pipeline_mode<synchronous>, transform_indices = @transform_7, window_bounds = array<i64: 1, 32>}, {pipeline_mode = #tpu.pipeline_mode<synchronous>, transform_indices = @transform_8, window_bounds = array<i64: 1, 32>}, {pipeline_mode = #tpu.pipeline_mode<synchronous>, transform_indices = @transform_9, window_bounds = array<i64: 1, 32>}, {pipeline_mode = #tpu.pipeline_mode<synchronous>, transform_indices = @transform_10, window_bounds = array<i64: 32, 64>}, {pipeline_mode = #tpu.pipeline_mode<synchronous>, transform_indices = @transform_11, window_bounds = array<i64: 1, 64>}, {pipeline_mode = #tpu.pipeline_mode<synchronous>, transform_indices = @transform_12, window_bounds = array<i64: 64, 32>}, {pipeline_mode = #tpu.pipeline_mode<synchronous>, transform_indices = @transform_13, window_bounds = array<i64: 1, 32>}, {transform_indices = @transform_14, window_bounds = array<i64: 1, 8, 32>}]} {
    %c0 = arith.constant 0 : index
    %c0_0 = arith.constant 0 : index
    %c0_1 = arith.constant 0 : index
    %0 = vector.load %arg1[%c0, %c0_0, %c0_1] : memref<1x8x32xf32, #tpu.memory_space<vmem>>, vector<1x8x32xf32>
    %1 = vector.shape_cast %0 : vector<1x8x32xf32> to vector<8x32xf32>
    %c0_2 = arith.constant 0 : index
    %c0_3 = arith.constant 0 : index
    %2 = vector.load %arg3[%c0_2, %c0_3] : memref<1x32xf32, #tpu.memory_space<vmem>>, vector<1x32xf32>
    %c0_4 = arith.constant 0 : index
    %c0_5 = arith.constant 0 : index
    %3 = vector.load %arg4[%c0_4, %c0_5] : memref<1x32xf32, #tpu.memory_space<vmem>>, vector<1x32xf32>
    %cst = arith.constant dense<0.000000e+00> : vector<8xf32>
    %4 = vector.multi_reduction <add>, %1, %cst [1] : vector<8x32xf32> to vector<8xf32>
    %5 = vector.shape_cast %4 : vector<8xf32> to vector<8x1xf32>
    %cst_6 = arith.constant 3.200000e+01 : f32
    %6 = vector.broadcast %cst_6 : f32 to vector<8x1xf32>
    %7 = arith.divf %5, %6 : vector<8x1xf32>
    %8 = vector.broadcast %7 : vector<8x1xf32> to vector<8x32xf32>
    %9 = arith.subf %1, %8 : vector<8x32xf32>
    %10 = arith.mulf %9, %9 : vector<8x32xf32>
    %cst_7 = arith.constant dense<0.000000e+00> : vector<8xf32>
    %11 = vector.multi_reduction <add>, %10, %cst_7 [1] : vector<8x32xf32> to vector<8xf32>
    %12 = vector.shape_cast %11 : vector<8xf32> to vector<8x1xf32>
    %cst_8 = arith.constant 3.200000e+01 : f32
    %13 = vector.broadcast %cst_8 : f32 to vector<8x1xf32>
    %14 = arith.divf %12, %13 : vector<8x1xf32>
    %cst_9 = arith.constant 9.99999974E-6 : f32
    %15 = vector.broadcast %cst_9 : f32 to vector<8x1xf32>
    %16 = arith.addf %14, %15 : vector<8x1xf32>
    %17 = math.rsqrt %16 : vector<8x1xf32>
    %18 = vector.broadcast %17 : vector<8x1xf32> to vector<8x32xf32>
    %19 = arith.mulf %9, %18 : vector<8x32xf32>
    %20 = vector.broadcast %2 : vector<1x32xf32> to vector<8x32xf32>
    %21 = arith.mulf %19, %20 : vector<8x32xf32>
    %22 = vector.broadcast %3 : vector<1x32xf32> to vector<8x32xf32>
    %23 = arith.addf %21, %22 : vector<8x32xf32>
    %24 = arith.truncf %23 : vector<8x32xf32> to vector<8x32xbf16>
    %c0_10 = arith.constant 0 : index
    %c0_11 = arith.constant 0 : index
    %c0_12 = arith.constant 0 : index
    %25 = vector.load %arg2[%c0_10, %c0_11, %c0_12] : memref<1x8x8xf32, #tpu.memory_space<vmem>>, vector<1x8x8xf32>
    %26 = vector.shape_cast %25 : vector<1x8x8xf32> to vector<8x8xf32>
    %cst_13 = arith.constant 0.000000e+00 : f32
    %27 = vector.broadcast %cst_13 : f32 to vector<8x32xf32>
    %c0_14 = arith.constant 0 : index
    %c0_15 = arith.constant 0 : index
    %28 = vector.load %arg16[%c0_14, %c0_15] : memref<8x32xf32, #tpu.memory_space<vmem>>, vector<8x32xf32>
    tpu.vector_store %arg16[%c0_14, %c0_15], %27 {strides = array<i32>} : memref<8x32xf32, #tpu.memory_space<vmem>>, vector<8x32xf32>,
    %c0_i32 = arith.constant 0 : i32
    %29 = arith.index_cast %c0_i32 : i32 to index
    %c0_16 = arith.constant 0 : index
    %c0_17 = arith.constant 0 : index
    %30 = vector.load %arg5[%29, %c0_16, %c0_17] : memref<1x32x96xbf16, #tpu.memory_space<vmem>>, vector<1x32x96xbf16>
    %31 = vector.shape_cast %30 : vector<1x32x96xbf16> to vector<32x96xbf16>
    %cst_18 = arith.constant dense<0.000000e+00> : vector<8x96xf32>
    %32 = tpu.matmul %24, %31, %cst_18 {dimension_numbers = #tpu.dot_dimension_numbers<[1], [0], [0], [1], [0, 0, 1, 1], [], []>} : vector<8x32xbf16>, vector<32x96xbf16>, vector<8x96xf32> -> vector<8x96xf32>
    %33 = arith.index_cast %c0_i32 : i32 to index
    %c0_19 = arith.constant 0 : index
    %c0_20 = arith.constant 0 : index
    %34 = vector.load %arg6[%33, %c0_19, %c0_20] : memref<1x1x96xf32, #tpu.memory_space<vmem>>, vector<1x1x96xf32>
    %35 = vector.shape_cast %34 : vector<1x1x96xf32> to vector<1x96xf32>
    %36 = vector.broadcast %35 : vector<1x96xf32> to vector<8x96xf32>
    %37 = arith.addf %32, %36 : vector<8x96xf32>
    %38 = vector.extract_strided_slice %37 {offsets = [0, 0], sizes = [8, 8], strides = [1, 1]} : vector<8x96xf32> to vector<8x8xf32>
    %39 = arith.truncf %38 : vector<8x8xf32> to vector<8x8xbf16>
    %40 = vector.extract_strided_slice %37 {offsets = [0, 32], sizes = [8, 8], strides = [1, 1]} : vector<8x96xf32> to vector<8x8xf32>
    %41 = arith.truncf %40 : vector<8x8xf32> to vector<8x8xbf16>
    %42 = vector.extract_strided_slice %37 {offsets = [0, 64], sizes = [8, 8], strides = [1, 1]} : vector<8x96xf32> to vector<8x8xf32>
    %43 = arith.truncf %42 : vector<8x8xf32> to vector<8x8xbf16>
    %cst_21 = arith.constant dense<0.000000e+00> : vector<8x8xf32>
    %44 = tpu.matmul %39, %41, %cst_21 {dimension_numbers = #tpu.dot_dimension_numbers<[1], [1], [0], [0], [0, 0, 1, 0], [], []>} : vector<8x8xbf16>, vector<8x8xbf16>, vector<8x8xf32> -> vector<8x8xf32>
    %45 = arith.addf %44, %26 : vector<8x8xf32>
    %cst_22 = arith.constant dense<0xFF800000> : vector<8xf32>
    %46 = vector.multi_reduction <maximumf>, %45, %cst_22 [1] : vector<8x8xf32> to vector<8xf32>
    %47 = vector.shape_cast %46 : vector<8xf32> to vector<8x1xf32>
    %48 = vector.broadcast %47 : vector<8x1xf32> to vector<8x8xf32>
    %49 = arith.subf %45, %48 : vector<8x8xf32>
    %50 = math.exp %49 : vector<8x8xf32>
    %cst_23 = arith.constant dense<0.000000e+00> : vector<8xf32>
    %51 = vector.multi_reduction <add>, %50, %cst_23 [1] : vector<8x8xf32> to vector<8xf32>
    %52 = vector.shape_cast %51 : vector<8xf32> to vector<8x1xf32>
    %53 = arith.truncf %50 : vector<8x8xf32> to vector<8x8xbf16>
    %cst_24 = arith.constant dense<0.000000e+00> : vector<8x8xf32>
    %54 = tpu.matmul %53, %43, %cst_24 {dimension_numbers = #tpu.dot_dimension_numbers<[1], [0], [0], [1], [0, 0, 1, 1], [], []>} : vector<8x8xbf16>, vector<8x8xbf16>, vector<8x8xf32> -> vector<8x8xf32>
    %55 = tpu.reciprocal %52 {approx = true} : vector<8x1xf32> -> vector<8x1xf32>
    %56 = vector.broadcast %55 : vector<8x1xf32> to vector<8x8xf32>
    %57 = arith.mulf %54, %56 : vector<8x8xf32>
    %58 = arith.truncf %57 : vector<8x8xf32> to vector<8x8xbf16>
    %59 = vector.extract_strided_slice %37 {offsets = [0, 8], sizes = [8, 8], strides = [1, 1]} : vector<8x96xf32> to vector<8x8xf32>
    %60 = arith.truncf %59 : vector<8x8xf32> to vector<8x8xbf16>
    %61 = vector.extract_strided_slice %37 {offsets = [0, 40], sizes = [8, 8], strides = [1, 1]} : vector<8x96xf32> to vector<8x8xf32>
    %62 = arith.truncf %61 : vector<8x8xf32> to vector<8x8xbf16>
    %63 = vector.extract_strided_slice %37 {offsets = [0, 72], sizes = [8, 8], strides = [1, 1]} : vector<8x96xf32> to vector<8x8xf32>
    %64 = arith.truncf %63 : vector<8x8xf32> to vector<8x8xbf16>
    %cst_25 = arith.constant dense<0.000000e+00> : vector<8x8xf32>
    %65 = tpu.matmul %60, %62, %cst_25 {dimension_numbers = #tpu.dot_dimension_numbers<[1], [1], [0], [0], [0, 0, 1, 0], [], []>} : vector<8x8xbf16>, vector<8x8xbf16>, vector<8x8xf32> -> vector<8x8xf32>
    %66 = arith.addf %65, %26 : vector<8x8xf32>
    %cst_26 = arith.constant dense<0xFF800000> : vector<8xf32>
    %67 = vector.multi_reduction <maximumf>, %66, %cst_26 [1] : vector<8x8xf32> to vector<8xf32>
    %68 = vector.shape_cast %67 : vector<8xf32> to vector<8x1xf32>
    %69 = vector.broadcast %68 : vector<8x1xf32> to vector<8x8xf32>
    %70 = arith.subf %66, %69 : vector<8x8xf32>
    %71 = math.exp %70 : vector<8x8xf32>
    %cst_27 = arith.constant dense<0.000000e+00> : vector<8xf32>
    %72 = vector.multi_reduction <add>, %71, %cst_27 [1] : vector<8x8xf32> to vector<8xf32>
    %73 = vector.shape_cast %72 : vector<8xf32> to vector<8x1xf32>
    %74 = arith.truncf %71 : vector<8x8xf32> to vector<8x8xbf16>
    %cst_28 = arith.constant dense<0.000000e+00> : vector<8x8xf32>
    %75 = tpu.matmul %74, %64, %cst_28 {dimension_numbers = #tpu.dot_dimension_numbers<[1], [0], [0], [1], [0, 0, 1, 1], [], []>} : vector<8x8xbf16>, vector<8x8xbf16>, vector<8x8xf32> -> vector<8x8xf32>
    %76 = tpu.reciprocal %73 {approx = true} : vector<8x1xf32> -> vector<8x1xf32>
    %77 = vector.broadcast %76 : vector<8x1xf32> to vector<8x8xf32>
    %78 = arith.mulf %75, %77 : vector<8x8xf32>
    %79 = arith.truncf %78 : vector<8x8xf32> to vector<8x8xbf16>
    %80 = vector.extract_strided_slice %37 {offsets = [0, 16], sizes = [8, 8], strides = [1, 1]} : vector<8x96xf32> to vector<8x8xf32>
    %81 = arith.truncf %80 : vector<8x8xf32> to vector<8x8xbf16>
    %82 = vector.extract_strided_slice %37 {offsets = [0, 48], sizes = [8, 8], strides = [1, 1]} : vector<8x96xf32> to vector<8x8xf32>
    %83 = arith.truncf %82 : vector<8x8xf32> to vector<8x8xbf16>
    %84 = vector.extract_strided_slice %37 {offsets = [0, 80], sizes = [8, 8], strides = [1, 1]} : vector<8x96xf32> to vector<8x8xf32>
    %85 = arith.truncf %84 : vector<8x8xf32> to vector<8x8xbf16>
    %cst_29 = arith.constant dense<0.000000e+00> : vector<8x8xf32>
    %86 = tpu.matmul %81, %83, %cst_29 {dimension_numbers = #tpu.dot_dimension_numbers<[1], [1], [0], [0], [0, 0, 1, 0], [], []>} : vector<8x8xbf16>, vector<8x8xbf16>, vector<8x8xf32> -> vector<8x8xf32>
    %87 = arith.addf %86, %26 : vector<8x8xf32>
    %cst_30 = arith.constant dense<0xFF800000> : vector<8xf32>
    %88 = vector.multi_reduction <maximumf>, %87, %cst_30 [1] : vector<8x8xf32> to vector<8xf32>
    %89 = vector.shape_cast %88 : vector<8xf32> to vector<8x1xf32>
    %90 = vector.broadcast %89 : vector<8x1xf32> to vector<8x8xf32>
    %91 = arith.subf %87, %90 : vector<8x8xf32>
    %92 = math.exp %91 : vector<8x8xf32>
    %cst_31 = arith.constant dense<0.000000e+00> : vector<8xf32>
    %93 = vector.multi_reduction <add>, %92, %cst_31 [1] : vector<8x8xf32> to vector<8xf32>
    %94 = vector.shape_cast %93 : vector<8xf32> to vector<8x1xf32>
    %95 = arith.truncf %92 : vector<8x8xf32> to vector<8x8xbf16>
    %cst_32 = arith.constant dense<0.000000e+00> : vector<8x8xf32>
    %96 = tpu.matmul %95, %85, %cst_32 {dimension_numbers = #tpu.dot_dimension_numbers<[1], [0], [0], [1], [0, 0, 1, 1], [], []>} : vector<8x8xbf16>, vector<8x8xbf16>, vector<8x8xf32> -> vector<8x8xf32>
    %97 = tpu.reciprocal %94 {approx = true} : vector<8x1xf32> -> vector<8x1xf32>
    %98 = vector.broadcast %97 : vector<8x1xf32> to vector<8x8xf32>
    %99 = arith.mulf %96, %98 : vector<8x8xf32>
    %100 = arith.truncf %99 : vector<8x8xf32> to vector<8x8xbf16>
    %101 = vector.extract_strided_slice %37 {offsets = [0, 24], sizes = [8, 8], strides = [1, 1]} : vector<8x96xf32> to vector<8x8xf32>
    %102 = arith.truncf %101 : vector<8x8xf32> to vector<8x8xbf16>
    %103 = vector.extract_strided_slice %37 {offsets = [0, 56], sizes = [8, 8], strides = [1, 1]} : vector<8x96xf32> to vector<8x8xf32>
    %104 = arith.truncf %103 : vector<8x8xf32> to vector<8x8xbf16>
    %105 = vector.extract_strided_slice %37 {offsets = [0, 88], sizes = [8, 8], strides = [1, 1]} : vector<8x96xf32> to vector<8x8xf32>
    %106 = arith.truncf %105 : vector<8x8xf32> to vector<8x8xbf16>
    %cst_33 = arith.constant dense<0.000000e+00> : vector<8x8xf32>
    %107 = tpu.matmul %102, %104, %cst_33 {dimension_numbers = #tpu.dot_dimension_numbers<[1], [1], [0], [0], [0, 0, 1, 0], [], []>} : vector<8x8xbf16>, vector<8x8xbf16>, vector<8x8xf32> -> vector<8x8xf32>
    %108 = arith.addf %107, %26 : vector<8x8xf32>
    %cst_34 = arith.constant dense<0xFF800000> : vector<8xf32>
    %109 = vector.multi_reduction <maximumf>, %108, %cst_34 [1] : vector<8x8xf32> to vector<8xf32>
    %110 = vector.shape_cast %109 : vector<8xf32> to vector<8x1xf32>
    %111 = vector.broadcast %110 : vector<8x1xf32> to vector<8x8xf32>
    %112 = arith.subf %108, %111 : vector<8x8xf32>
    %113 = math.exp %112 : vector<8x8xf32>
    %cst_35 = arith.constant dense<0.000000e+00> : vector<8xf32>
    %114 = vector.multi_reduction <add>, %113, %cst_35 [1] : vector<8x8xf32> to vector<8xf32>
    %115 = vector.shape_cast %114 : vector<8xf32> to vector<8x1xf32>
    %116 = arith.truncf %113 : vector<8x8xf32> to vector<8x8xbf16>
    %cst_36 = arith.constant dense<0.000000e+00> : vector<8x8xf32>
    %117 = tpu.matmul %116, %106, %cst_36 {dimension_numbers = #tpu.dot_dimension_numbers<[1], [0], [0], [1], [0, 0, 1, 1], [], []>} : vector<8x8xbf16>, vector<8x8xbf16>, vector<8x8xf32> -> vector<8x8xf32>
    %118 = tpu.reciprocal %115 {approx = true} : vector<8x1xf32> -> vector<8x1xf32>
    %119 = vector.broadcast %118 : vector<8x1xf32> to vector<8x8xf32>
    %120 = arith.mulf %117, %119 : vector<8x8xf32>
    %121 = arith.truncf %120 : vector<8x8xf32> to vector<8x8xbf16>
    %122 = tpu.concatenate %58, %79, %100, %121 in 1 : vector<8x8xbf16>, vector<8x8xbf16>, vector<8x8xbf16>, vector<8x8xbf16> -> vector<8x32xbf16>
    %c0_37 = arith.constant 0 : index
    %c0_38 = arith.constant 0 : index
    %123 = vector.load %arg16[%c0_37, %c0_38] : memref<8x32xf32, #tpu.memory_space<vmem>>, vector<8x32xf32>
    %124 = arith.index_cast %c0_i32 : i32 to index
    %c0_39 = arith.constant 0 : index
    %c0_40 = arith.constant 0 : index
    %125 = vector.load %arg7[%124, %c0_39, %c0_40] : memref<1x32x32xbf16, #tpu.memory_space<vmem>>, vector<1x32x32xbf16>
    %126 = vector.shape_cast %125 : vector<1x32x32xbf16> to vector<32x32xbf16>
    %cst_41 = arith.constant dense<0.000000e+00> : vector<8x32xf32>
    %127 = tpu.matmul %122, %126, %cst_41 {dimension_numbers = #tpu.dot_dimension_numbers<[1], [0], [0], [1], [0, 0, 1, 1], [], []>} : vector<8x32xbf16>, vector<32x32xbf16>, vector<8x32xf32> -> vector<8x32xf32>
    %128 = arith.addf %123, %127 : vector<8x32xf32>
    %c0_42 = arith.constant 0 : index
    %c0_43 = arith.constant 0 : index
    %129 = vector.load %arg16[%c0_42, %c0_43] : memref<8x32xf32, #tpu.memory_space<vmem>>, vector<8x32xf32>
    tpu.vector_store %arg16[%c0_42, %c0_43], %128 {strides = array<i32>} : memref<8x32xf32, #tpu.memory_space<vmem>>, vector<8x32xf32>,
    %c1_i32 = arith.constant 1 : i32
    %c0_44 = arith.constant 0 : index
    %c0_45 = arith.constant 0 : index
    %130 = vector.load %arg16[%c0_44, %c0_45] : memref<8x32xf32, #tpu.memory_space<vmem>>, vector<8x32xf32>
    %131 = arith.addf %1, %130 : vector<8x32xf32>
    %c0_46 = arith.constant 0 : index
    %c0_47 = arith.constant 0 : index
    %132 = vector.load %arg8[%c0_46, %c0_47] : memref<1x32xf32, #tpu.memory_space<vmem>>, vector<1x32xf32>
    %133 = vector.broadcast %132 : vector<1x32xf32> to vector<8x32xf32>
    %134 = arith.addf %131, %133 : vector<8x32xf32>
    %c0_48 = arith.constant 0 : index
    %c0_49 = arith.constant 0 : index
    %135 = vector.load %arg9[%c0_48, %c0_49] : memref<1x32xf32, #tpu.memory_space<vmem>>, vector<1x32xf32>
    %c0_50 = arith.constant 0 : index
    %c0_51 = arith.constant 0 : index
    %136 = vector.load %arg10[%c0_50, %c0_51] : memref<1x32xf32, #tpu.memory_space<vmem>>, vector<1x32xf32>
    %cst_52 = arith.constant dense<0.000000e+00> : vector<8xf32>
    %137 = vector.multi_reduction <add>, %134, %cst_52 [1] : vector<8x32xf32> to vector<8xf32>
    %138 = vector.shape_cast %137 : vector<8xf32> to vector<8x1xf32>
    %cst_53 = arith.constant 3.200000e+01 : f32
    %139 = vector.broadcast %cst_53 : f32 to vector<8x1xf32>
    %140 = arith.divf %138, %139 : vector<8x1xf32>
    %141 = vector.broadcast %140 : vector<8x1xf32> to vector<8x32xf32>
    %142 = arith.subf %134, %141 : vector<8x32xf32>
    %143 = arith.mulf %142, %142 : vector<8x32xf32>
    %cst_54 = arith.constant dense<0.000000e+00> : vector<8xf32>
    %144 = vector.multi_reduction <add>, %143, %cst_54 [1] : vector<8x32xf32> to vector<8xf32>
    %145 = vector.shape_cast %144 : vector<8xf32> to vector<8x1xf32>
    %cst_55 = arith.constant 3.200000e+01 : f32
    %146 = vector.broadcast %cst_55 : f32 to vector<8x1xf32>
    %147 = arith.divf %145, %146 : vector<8x1xf32>
    %cst_56 = arith.constant 9.99999974E-6 : f32
    %148 = vector.broadcast %cst_56 : f32 to vector<8x1xf32>
    %149 = arith.addf %147, %148 : vector<8x1xf32>
    %150 = math.rsqrt %149 : vector<8x1xf32>
    %151 = vector.broadcast %150 : vector<8x1xf32> to vector<8x32xf32>
    %152 = arith.mulf %142, %151 : vector<8x32xf32>
    %153 = vector.broadcast %135 : vector<1x32xf32> to vector<8x32xf32>
    %154 = arith.mulf %152, %153 : vector<8x32xf32>
    %155 = vector.broadcast %136 : vector<1x32xf32> to vector<8x32xf32>
    %156 = arith.addf %154, %155 : vector<8x32xf32>
    %157 = arith.truncf %156 : vector<8x32xf32> to vector<8x32xbf16>
    %c0_57 = arith.constant 0 : index
    %c0_58 = arith.constant 0 : index
    %158 = vector.load %arg11[%c0_57, %c0_58] : memref<32x64xbf16, #tpu.memory_space<vmem>>, vector<32x64xbf16>
    %cst_59 = arith.constant dense<0.000000e+00> : vector<8x64xf32>
    %159 = tpu.matmul %157, %158, %cst_59 {dimension_numbers = #tpu.dot_dimension_numbers<[1], [0], [0], [1], [0, 0, 1, 1], [], []>} : vector<8x32xbf16>, vector<32x64xbf16>, vector<8x64xf32> -> vector<8x64xf32>
    %c0_60 = arith.constant 0 : index
    %c0_61 = arith.constant 0 : index
    %160 = vector.load %arg12[%c0_60, %c0_61] : memref<1x64xf32, #tpu.memory_space<vmem>>, vector<1x64xf32>
    %161 = vector.broadcast %160 : vector<1x64xf32> to vector<8x64xf32>
    %162 = arith.addf %159, %161 : vector<8x64xf32>
    %cst_62 = arith.constant 1.702000e+00 : f32
    %163 = vector.broadcast %cst_62 : f32 to vector<8x64xf32>
    %164 = arith.mulf %163, %162 : vector<8x64xf32>
    %165 = arith.negf %164 : vector<8x64xf32>
    %166 = math.exp %165 : vector<8x64xf32>
    %cst_63 = arith.constant 1.000000e+00 : f32
    %167 = vector.broadcast %cst_63 : f32 to vector<8x64xf32>
    %168 = arith.addf %167, %166 : vector<8x64xf32>
    %169 = arith.divf %167, %168 : vector<8x64xf32>
    %170 = arith.mulf %162, %169 : vector<8x64xf32>
    %171 = arith.truncf %170 : vector<8x64xf32> to vector<8x64xbf16>
    %c0_64 = arith.constant 0 : index
    %c0_65 = arith.constant 0 : index
    %172 = vector.load %arg13[%c0_64, %c0_65] : memref<64x32xbf16, #tpu.memory_space<vmem>>, vector<64x32xbf16>
    %cst_66 = arith.constant dense<0.000000e+00> : vector<8x32xf32>
    %173 = tpu.matmul %171, %172, %cst_66 {dimension_numbers = #tpu.dot_dimension_numbers<[1], [0], [0], [1], [0, 0, 1, 1], [], []>} : vector<8x64xbf16>, vector<64x32xbf16>, vector<8x32xf32> -> vector<8x32xf32>
    %c0_67 = arith.constant 0 : index
    %c0_68 = arith.constant 0 : index
    %174 = vector.load %arg14[%c0_67, %c0_68] : memref<1x32xf32, #tpu.memory_space<vmem>>, vector<1x32xf32>
    %175 = vector.broadcast %174 : vector<1x32xf32> to vector<8x32xf32>
    %176 = arith.addf %173, %175 : vector<8x32xf32>
    %177 = arith.addf %134, %176 : vector<8x32xf32>
    %c0_69 = arith.constant 0 : index
    %c0_70 = arith.constant 0 : index
    %c0_71 = arith.constant 0 : index
    %178 = vector.load %arg15[%c0_69, %c0_70, %c0_71] : memref<1x8x32xf32, #tpu.memory_space<vmem>>, vector<1x8x32xf32>
    %179 = vector.shape_cast %178 : vector<1x8x32xf32> to vector<8x32xf32>
    %180 = vector.shape_cast %177 : vector<8x32xf32> to vector<1x8x32xf32>
    tpu.vector_store %arg15[%c0_69, %c0_70, %c0_71], %180 {strides = array<i32>} : memref<1x8x32xf32, #tpu.memory_space<vmem>>, vector<1x8x32xf32>,
    return
  }
  func.func @transform_0(%arg0: i32) -> (i32, i32, i32) {
    %c0_i32 = arith.constant 0 : i32
    %c0_i32_0 = arith.constant 0 : i32
    %c0_i32_1 = arith.constant 0 : i32
    return %arg0, %c0_i32, %c0_i32_0 : i32, i32, i32
  }
  func.func @transform_1(%arg0: i32) -> (i32, i32, i32) {
    %c0_i32 = arith.constant 0 : i32
    %c0_i32_0 = arith.constant 0 : i32
    %c0_i32_1 = arith.constant 0 : i32
    %c0_i32_2 = arith.constant 0 : i32
    return %c0_i32, %c0_i32_0, %c0_i32_1 : i32, i32, i32
  }
  func.func @transform_2(%arg0: i32) -> (i32, i32) {
    %c0_i32 = arith.constant 0 : i32
    %c0_i32_0 = arith.constant 0 : i32
    %c0_i32_1 = arith.constant 0 : i32
    return %c0_i32, %c0_i32_0 : i32, i32
  }
  func.func @transform_3(%arg0: i32) -> (i32, i32) {
    %c0_i32 = arith.constant 0 : i32
    %c0_i32_0 = arith.constant 0 : i32
    %c0_i32_1 = arith.constant 0 : i32
    return %c0_i32, %c0_i32_0 : i32, i32
  }
  func.func @transform_4(%arg0: i32) -> (i32, i32, i32) {
    %c0_i32 = arith.constant 0 : i32
    %c0_i32_0 = arith.constant 0 : i32
    %c0_i32_1 = arith.constant 0 : i32
    %c0_i32_2 = arith.constant 0 : i32
    return %c0_i32, %c0_i32_0, %c0_i32_1 : i32, i32, i32
  }
  func.func @transform_5(%arg0: i32) -> (i32, i32, i32) {
    %c0_i32 = arith.constant 0 : i32
    %c0_i32_0 = arith.constant 0 : i32
    %c0_i32_1 = arith.constant 0 : i32
    %c0_i32_2 = arith.constant 0 : i32
    return %c0_i32, %c0_i32_0, %c0_i32_1 : i32, i32, i32
  }
  func.func @transform_6(%arg0: i32) -> (i32, i32, i32) {
    %c0_i32 = arith.constant 0 : i32
    %c0_i32_0 = arith.constant 0 : i32
    %c0_i32_1 = arith.constant 0 : i32
    %c0_i32_2 = arith.constant 0 : i32
    return %c0_i32, %c0_i32_0, %c0_i32_1 : i32, i32, i32
  }
  func.func @transform_7(%arg0: i32) -> (i32, i32) {
    %c0_i32 = arith.constant 0 : i32
    %c0_i32_0 = arith.constant 0 : i32
    %c0_i32_1 = arith.constant 0 : i32
    return %c0_i32, %c0_i32_0 : i32, i32
  }
  func.func @transform_8(%arg0: i32) -> (i32, i32) {
    %c0_i32 = arith.constant 0 : i32
    %c0_i32_0 = arith.constant 0 : i32
    %c0_i32_1 = arith.constant 0 : i32
    return %c0_i32, %c0_i32_0 : i32, i32
  }
  func.func @transform_9(%arg0: i32) -> (i32, i32) {
    %c0_i32 = arith.constant 0 : i32
    %c0_i32_0 = arith.constant 0 : i32
    %c0_i32_1 = arith.constant 0 : i32
    return %c0_i32, %c0_i32_0 : i32, i32
  }
  func.func @transform_10(%arg0: i32) -> (i32, i32) {
    %c0_i32 = arith.constant 0 : i32
    %c0_i32_0 = arith.constant 0 : i32
    %c0_i32_1 = arith.constant 0 : i32
    return %c0_i32, %c0_i32_0 : i32, i32
  }
  func.func @transform_11(%arg0: i32) -> (i32, i32) {
    %c0_i32 = arith.constant 0 : i32
    %c0_i32_0 = arith.constant 0 : i32
    %c0_i32_1 = arith.constant 0 : i32
    return %c0_i32, %c0_i32_0 : i32, i32
  }
  func.func @transform_12(%arg0: i32) -> (i32, i32) {
    %c0_i32 = arith.constant 0 : i32
    %c0_i32_0 = arith.constant 0 : i32
    %c0_i32_1 = arith.constant 0 : i32
    return %c0_i32, %c0_i32_0 : i32, i32
  }
  func.func @transform_13(%arg0: i32) -> (i32, i32) {
    %c0_i32 = arith.constant 0 : i32
    %c0_i32_0 = arith.constant 0 : i32
    %c0_i32_1 = arith.constant 0 : i32
    return %c0_i32, %c0_i32_0 : i32, i32
  }
  func.func @transform_14(%arg0: i32) -> (i32, i32, i32) {
    %c0_i32 = arith.constant 0 : i32
    %c0_i32_0 = arith.constant 0 : i32
    %c0_i32_1 = arith.constant 0 : i32
    return %arg0, %c0_i32, %c0_i32_0 : i32, i32, i32
  }
}

</mosaic_0001>

<llo_original>
// kernel: clip_encoder_layer.1
$region0: #{clip_encoder_layer.1}
  #allocation0 [shape = 'u32[]', space=smem, size = 0x4, offset = 0x4, fixed_abs, tag = 'smem constant byte address 0x4 - core index']
  #allocation1 [shape = 'u32[144,128]{1,0:T(1,128)}', space=vmem, size = 0x12000, scoped, tag = 'internal scratch']
  #allocation2 [shape = 'f32[8,32]{1,0:T(8,128)}', space=vmem, size = 0x1000, scoped, tag = 'scratch operand']
  %s0 = inlined_call_operand.vmem [shape: f32[2,8,32], index: 0, kind: input, shape index: {}]
  %s1 = inlined_call_operand.hbm [shape: f32[1,8,8], index: 1, kind: input, shape index: {}]
  %s2 = inlined_call_operand.vmem [shape: f32[1,32], index: 2, kind: input, shape index: {}]
  %s3 = inlined_call_operand.vmem [shape: f32[1,32], index: 3, kind: input, shape index: {}]
  %s4 = inlined_call_operand.vmem [shape: bf16[1,32,96], index: 4, kind: input, shape index: {}]
  %s5 = inlined_call_operand.hbm [shape: f32[1,1,96], index: 5, kind: input, shape index: {}]
  %s6 = inlined_call_operand.vmem [shape: bf16[1,32,32], index: 6, kind: input, shape index: {}]
  %s7 = inlined_call_operand.hbm [shape: f32[1,32], index: 7, kind: input, shape index: {}]
  %s8 = inlined_call_operand.hbm [shape: f32[1,32], index: 8, kind: input, shape index: {}]
  %s9 = inlined_call_operand.hbm [shape: f32[1,32], index: 9, kind: input, shape index: {}]
  %s10 = inlined_call_operand.vmem [shape: bf16[32,64], index: 10, kind: input, shape index: {}]
  %s11 = inlined_call_operand.hbm [shape: f32[1,64], index: 11, kind: input, shape index: {}]
  %s12 = inlined_call_operand.vmem [shape: bf16[64,32], index: 12, kind: input, shape index: {}]
  %s13 = inlined_call_operand.hbm [shape: f32[1,32], index: 13, kind: input, shape index: {}]
  %s14 = inlined_call_operand.hbm [shape: f32[2,8,32], index: 14, kind: output, shape index: {}]
  %s15 = sld [smem:[#allocation0]]
  $region117: #{clip_encoder_layer.1} parent=0
    _
  %s17 = ssub.s32 1, %s15
  %s18 = scalar_select 0, %s17, %s15
  $region1: #{clip_encoder_layer.1} parent=0
    #allocation3 [shape = 'u8[4096]{0}', space=vmem, size = 0x1000, scoped, tag = 'input window, operand 1, single buffered']
    #allocation4 [shape = 's32[2]{0}', space=sflag, size = 0x8, scoped, tag = 'scoped memory for clip_encoder_layer.1']
    #allocation5 [shape = 's32[2]{0}', space=sflag, size = 0x8, scoped, tag = 'scoped memory for clip_encoder_layer.1']
    #allocation6 [shape = 'u8[512]{0}', space=vmem, size = 0x400, scoped, tag = 'input window, operand 5, single buffered']
    #allocation7 [shape = 's32[1]{0}', space=sflag, size = 0x4, scoped, tag = 'scoped memory for clip_encoder_layer.1']
    #allocation8 [shape = 'u8[512]{0}', space=vmem, size = 0x400, scoped, tag = 'input window, operand 7, single buffered']
    #allocation9 [shape = 'u8[512]{0}', space=vmem, size = 0x400, scoped, tag = 'input window, operand 8, single buffered']
    #allocation10 [shape = 's32[1]{0}', space=sflag, size = 0x4, scoped, tag = 'scoped memory for clip_encoder_layer.1']
    #allocation11 [shape = 'u8[512]{0}', space=vmem, size = 0x400, scoped, tag = 'input window, operand 9, single buffered']
    #allocation12 [shape = 'u8[512]{0}', space=vmem, size = 0x400, scoped, tag = 'input window, operand 11, single buffered']
    #allocation13 [shape = 's32[1]{0}', space=sflag, size = 0x4, scoped, tag = 'scoped memory for clip_encoder_layer.1']
    #allocation14 [shape = 'u8[512]{0}', space=vmem, size = 0x400, scoped, tag = 'input window, operand 13, single buffered']
    #allocation15 [shape = 'u8[8192]{0}', space=vmem, size = 0x2000, scoped, tag = 'output window, operand 0']
    %19 = vsyncpa [#allocation4], 0
    %20 = vsyncpa [#allocation7], 0
    %21 = vsyncpa [#allocation10], 0
    %22 = vsyncpa [#allocation13], 0
    %23 = vsyncpa [#allocation5], 0
    %s24 = scalar_lea.sflag [#allocation5], 1
    %25 = vsyncpa %s24, 0
    loop: start=0, step=1, limit=4
    $region2: #{clip_encoder_layer.1} parent=1 // loop_pre_header
      _
    $region3: #{clip_encoder_layer.1} parent=1 // loop_header
      %s27 = sphi 0, %s31
      %p28 = scmp.ge.s32.totalorder %s27, 4
      %s37 = sphi 0, %s39
      %s40 = sphi 0, %s37
      %s41 = sphi 0, %s40
      %s57 = sphi 0, %s41
      %s61 = sphi 0, %s61
      %s63 = sphi 0, %s61
      %s64 = sphi 0, %s63
      %s78 = sphi 0, %s64
      %s82 = sphi 0, %s82
      %s84 = sphi 0, %s82
      %s85 = sphi 0, %s84
      %s99 = sphi 0, %s85
      %s103 = sphi 0, %s103
      %s105 = sphi 0, %s103
      %s106 = sphi 0, %s105
      %s120 = sphi 0, %s106
      %s124 = sphi 0, %s124
      %s126 = sphi 0, %s124
      %s127 = sphi 0, %s126
      %s141 = sphi 0, %s127
      %s145 = sphi 0, %s145
      %s147 = sphi 0, %s145
      %s148 = sphi 0, %s147
      %s162 = sphi 0, %s148
      %s166 = sphi 0, %s166
      %s168 = sphi 0, %s166
      %s169 = sphi 0, %s168
      %s183 = sphi 0, %s169
      %s187 = sphi 0, %s187
      %s189 = sphi 0, %s187
      %s190 = sphi 0, %s189
      %s204 = sphi 0, %s190
      %s208 = sphi 0, %s208
      %s210 = sphi 0, %s208
      %s211 = sphi 0, %s210
      %s225 = sphi 0, %s211
      %s229 = sphi 0, %s229
      %s231 = sphi 0, %s229
      %s232 = sphi 0, %s231
      %s246 = sphi 0, %s232
      %s250 = sphi 0, %s250
      %s252 = sphi 0, %s250
      %s253 = sphi 0, %s252
      %s267 = sphi 0, %s253
      %s271 = sphi 0, %s271
      %s273 = sphi 0, %s271
      %s274 = sphi 0, %s273
      %s288 = sphi 0, %s274
      %s292 = sphi 0, %s292
      %s294 = sphi 0, %s292
      %s295 = sphi 0, %s294
      %s309 = sphi 0, %s295
      %s313 = sphi 0, %s313
      %s315 = sphi 0, %s313
      %s316 = sphi 0, %s315
      %s330 = sphi 0, %s316
      %s336 = sphi 0, %s338
      %s339 = sphi 0, %s336
      %s340 = sphi 0, %s339
      %s356 = sphi 0, %s340
    $region4: #{clip_encoder_layer.1} parent=1 // loop_header_branch
      %30 = sbr.rel (%p28) target = $region8
    $region5: #{clip_encoder_layer.1} parent=1 // loop_body
      %s32 = ssub.s32 %s27, 1
      %s33 = ssub.s32 %s27, 2
      %s34 = sadd.s32 %s27, 1
      %s35 = ssub.s32 %s27, %s34
      %p36 = scmp.eq.s32.totalorder %s35, 0
      %s38 = sadd.s32 %s37, 1
      %s39 = scalar_select %p36, %s37, %s38
      %p42 = pneg %p36
      %p43 = scmp.eq.s32.totalorder %s27, 1
      %p44 = por %p42, %p43
      %p45 = scmp.ne.s32.totalorder %s37, %s40
      %p46 = scmp.eq.s32.totalorder %s27, 0
      %p47 = por %p45, %p46
      %p48 = scmp.ne.s32.totalorder %s37, %s40
      %p49 = scmp.eq.s32.totalorder %s32, 1
      %p50 = por %p48, %p49
      %p51 = scmp.ne.s32.totalorder %s40, %s41
      %p52 = scmp.eq.s32.totalorder %s32, 0
      %p53 = por %p51, %p52
      %p54 = scmp.ne.s32.totalorder %s40, %s41
      %p55 = scmp.eq.s32.totalorder %s33, 1
      %p56 = por %p54, %p55
      %p58 = scmp.ne.s32.totalorder %s41, %s57
      %p59 = scmp.eq.s32.totalorder %s33, 0
      %p60 = por %p58, %p59
      %s62 = sadd.s32 %s61, 1
      %p65 = scmp.eq.s32.totalorder %s27, 1
      %p66 = scmp.ne.s32.totalorder %s61, %s63
      %p67 = scmp.eq.s32.totalorder %s27, 0
      %p68 = por %p66, %p67
      %p69 = scmp.ne.s32.totalorder %s61, %s63
      %p70 = scmp.eq.s32.totalorder %s32, 1
      %p71 = por %p69, %p70
      %p72 = scmp.ne.s32.totalorder %s63, %s64
      %p73 = scmp.eq.s32.totalorder %s32, 0
      %p74 = por %p72, %p73
      %p75 = scmp.ne.s32.totalorder %s63, %s64
      %p76 = scmp.eq.s32.totalorder %s33, 1
      %p77 = por %p75, %p76
      %p79 = scmp.ne.s32.totalorder %s64, %s78
      %p80 = scmp.eq.s32.totalorder %s33, 0
      %p81 = por %p79, %p80
      %s83 = sadd.s32 %s82, 1
      %p86 = scmp.eq.s32.totalorder %s27, 1
      %p87 = scmp.ne.s32.totalorder %s82, %s84
      %p88 = scmp.eq.s32.totalorder %s27, 0
      %p89 = por %p87, %p88
      %p90 = scmp.ne.s32.totalorder %s82, %s84
      %p91 = scmp.eq.s32.totalorder %s32, 1
      %p92 = por %p90, %p91
      %p93 = scmp.ne.s32.totalorder %s84, %s85
      %p94 = scmp.eq.s32.totalorder %s32, 0
      %p95 = por %p93, %p94
      %p96 = scmp.ne.s32.totalorder %s84, %s85
      %p97 = scmp.eq.s32.totalorder %s33, 1
      %p98 = por %p96, %p97
      %p100 = scmp.ne.s32.totalorder %s85, %s99
      %p101 = scmp.eq.s32.totalorder %s33, 0
      %p102 = por %p100, %p101
      %s104 = sadd.s32 %s103, 1
      %p107 = scmp.eq.s32.totalorder %s27, 1
      %p108 = scmp.ne.s32.totalorder %s103, %s105
      %p109 = scmp.eq.s32.totalorder %s27, 0
      %p110 = por %p108, %p109
      %p111 = scmp.ne.s32.totalorder %s103, %s105
      %p112 = scmp.eq.s32.totalorder %s32, 1
      %p113 = por %p111, %p112
      %p114 = scmp.ne.s32.totalorder %s105, %s106
      %p115 = scmp.eq.s32.totalorder %s32, 0
      %p116 = por %p114, %p115
      %p117 = scmp.ne.s32.totalorder %s105, %s106
      %p118 = scmp.eq.s32.totalorder %s33, 1
      %p119 = por %p117, %p118
      %p121 = scmp.ne.s32.totalorder %s106, %s120
      %p122 = scmp.eq.s32.totalorder %s33, 0
      %p123 = por %p121, %p122
      %s125 = sadd.s32 %s124, 1
      %p128 = scmp.eq.s32.totalorder %s27, 1
      %p129 = scmp.ne.s32.totalorder %s124, %s126
      %p130 = scmp.eq.s32.totalorder %s27, 0
      %p131 = por %p129, %p130
      %p132 = scmp.ne.s32.totalorder %s124, %s126
      %p133 = scmp.eq.s32.totalorder %s32, 1
      %p134 = por %p132, %p133
      %p135 = scmp.ne.s32.totalorder %s126, %s127
      %p136 = scmp.eq.s32.totalorder %s32, 0
      %p137 = por %p135, %p136
      %p138 = scmp.ne.s32.totalorder %s126, %s127
      %p139 = scmp.eq.s32.totalorder %s33, 1
      %p140 = por %p138, %p139
      %p142 = scmp.ne.s32.totalorder %s127, %s141
      %p143 = scmp.eq.s32.totalorder %s33, 0
      %p144 = por %p142, %p143
      %s146 = sadd.s32 %s145, 1
      %p149 = scmp.eq.s32.totalorder %s27, 1
      %p150 = scmp.ne.s32.totalorder %s145, %s147
      %p151 = scmp.eq.s32.totalorder %s27, 0
      %p152 = por %p150, %p151
      %p153 = scmp.ne.s32.totalorder %s145, %s147
      %p154 = scmp.eq.s32.totalorder %s32, 1
      %p155 = por %p153, %p154
      %p156 = scmp.ne.s32.totalorder %s147, %s148
      %p157 = scmp.eq.s32.totalorder %s32, 0
      %p158 = por %p156, %p157
      %p159 = scmp.ne.s32.totalorder %s147, %s148
      %p160 = scmp.eq.s32.totalorder %s33, 1
      %p161 = por %p159, %p160
      %p163 = scmp.ne.s32.totalorder %s148, %s162
      %p164 = scmp.eq.s32.totalorder %s33, 0
      %p165 = por %p163, %p164
      %s167 = sadd.s32 %s166, 1
      %p170 = scmp.eq.s32.totalorder %s27, 1
      %p171 = scmp.ne.s32.totalorder %s166, %s168
      %p172 = scmp.eq.s32.totalorder %s27, 0
      %p173 = por %p171, %p172
      %p174 = scmp.ne.s32.totalorder %s166, %s168
      %p175 = scmp.eq.s32.totalorder %s32, 1
      %p176 = por %p174, %p175
      %p177 = scmp.ne.s32.totalorder %s168, %s169
      %p178 = scmp.eq.s32.totalorder %s32, 0
      %p179 = por %p177, %p178
      %p180 = scmp.ne.s32.totalorder %s168, %s169
      %p181 = scmp.eq.s32.totalorder %s33, 1
      %p182 = por %p180, %p181
      %p184 = scmp.ne.s32.totalorder %s169, %s183
      %p185 = scmp.eq.s32.totalorder %s33, 0
      %p186 = por %p184, %p185
      %s188 = sadd.s32 %s187, 1
      %p191 = scmp.eq.s32.totalorder %s27, 1
      %p192 = scmp.ne.s32.totalorder %s187, %s189
      %p193 = scmp.eq.s32.totalorder %s27, 0
      %p194 = por %p192, %p193
      %p195 = scmp.ne.s32.totalorder %s187, %s189
      %p196 = scmp.eq.s32.totalorder %s32, 1
      %p197 = por %p195, %p196
      %p198 = scmp.ne.s32.totalorder %s189, %s190
      %p199 = scmp.eq.s32.totalorder %s32, 0
      %p200 = por %p198, %p199
      %p201 = scmp.ne.s32.totalorder %s189, %s190
      %p202 = scmp.eq.s32.totalorder %s33, 1
      %p203 = por %p201, %p202
      %p205 = scmp.ne.s32.totalorder %s190, %s204
      %p206 = scmp.eq.s32.totalorder %s33, 0
      %p207 = por %p205, %p206
      %s209 = sadd.s32 %s208, 1
      %p212 = scmp.eq.s32.totalorder %s27, 1
      %p213 = scmp.ne.s32.totalorder %s208, %s210
      %p214 = scmp.eq.s32.totalorder %s27, 0
      %p215 = por %p213, %p214
      %p216 = scmp.ne.s32.totalorder %s208, %s210
      %p217 = scmp.eq.s32.totalorder %s32, 1
      %p218 = por %p216, %p217
      %p219 = scmp.ne.s32.totalorder %s210, %s211
      %p220 = scmp.eq.s32.totalorder %s32, 0
      %p221 = por %p219, %p220
      %p222 = scmp.ne.s32.totalorder %s210, %s211
      %p223 = scmp.eq.s32.totalorder %s33, 1
      %p224 = por %p222, %p223
      %p226 = scmp.ne.s32.totalorder %s211, %s225
      %p227 = scmp.eq.s32.totalorder %s33, 0
      %p228 = por %p226, %p227
      %s230 = sadd.s32 %s229, 1
      %p233 = scmp.eq.s32.totalorder %s27, 1
      %p234 = scmp.ne.s32.totalorder %s229, %s231
      %p235 = scmp.eq.s32.totalorder %s27, 0
      %p236 = por %p234, %p235
      %p237 = scmp.ne.s32.totalorder %s229, %s231
      %p238 = scmp.eq.s32.totalorder %s32, 1
      %p239 = por %p237, %p238
      %p240 = scmp.ne.s32.totalorder %s231, %s232
      %p241 = scmp.eq.s32.totalorder %s32, 0
      %p242 = por %p240, %p241
      %p243 = scmp.ne.s32.totalorder %s231, %s232
      %p244 = scmp.eq.s32.totalorder %s33, 1
      %p245 = por %p243, %p244
      %p247 = scmp.ne.s32.totalorder %s232, %s246
      %p248 = scmp.eq.s32.totalorder %s33, 0
      %p249 = por %p247, %p248
      %s251 = sadd.s32 %s250, 1
      %p254 = scmp.eq.s32.totalorder %s27, 1
      %p255 = scmp.ne.s32.totalorder %s250, %s252
      %p256 = scmp.eq.s32.totalorder %s27, 0
      %p257 = por %p255, %p256
      %p258 = scmp.ne.s32.totalorder %s250, %s252
      %p259 = scmp.eq.s32.totalorder %s32, 1
      %p260 = por %p258, %p259
      %p261 = scmp.ne.s32.totalorder %s252, %s253
      %p262 = scmp.eq.s32.totalorder %s32, 0
      %p263 = por %p261, %p262
      %p264 = scmp.ne.s32.totalorder %s252, %s253
      %p265 = scmp.eq.s32.totalorder %s33, 1
      %p266 = por %p264, %p265
      %p268 = scmp.ne.s32.totalorder %s253, %s267
      %p269 = scmp.eq.s32.totalorder %s33, 0
      %p270 = por %p268, %p269
      %s272 = sadd.s32 %s271, 1
      %p275 = scmp.eq.s32.totalorder %s27, 1
      %p276 = scmp.ne.s32.totalorder %s271, %s273
      %p277 = scmp.eq.s32.totalorder %s27, 0
      %p278 = por %p276, %p277
      %p279 = scmp.ne.s32.totalorder %s271, %s273
      %p280 = scmp.eq.s32.totalorder %s32, 1
      %p281 = por %p279, %p280
      %p282 = scmp.ne.s32.totalorder %s273, %s274
      %p283 = scmp.eq.s32.totalorder %s32, 0
      %p284 = por %p282, %p283
      %p285 = scmp.ne.s32.totalorder %s273, %s274
      %p286 = scmp.eq.s32.totalorder %s33, 1
      %p287 = por %p285, %p286
      %p289 = scmp.ne.s32.totalorder %s274, %s288
      %p290 = scmp.eq.s32.totalorder %s33, 0
      %p291 = por %p289, %p290
      %s293 = sadd.s32 %s292, 1
      %p296 = scmp.eq.s32.totalorder %s27, 1
      %p297 = scmp.ne.s32.totalorder %s292, %s294
      %p298 = scmp.eq.s32.totalorder %s27, 0
      %p299 = por %p297, %p298
      %p300 = scmp.ne.s32.totalorder %s292, %s294
      %p301 = scmp.eq.s32.totalorder %s32, 1
      %p302 = por %p300, %p301
      %p303 = scmp.ne.s32.totalorder %s294, %s295
      %p304 = scmp.eq.s32.totalorder %s32, 0
      %p305 = por %p303, %p304
      %p306 = scmp.ne.s32.totalorder %s294, %s295
      %p307 = scmp.eq.s32.totalorder %s33, 1
      %p308 = por %p306, %p307
      %p310 = scmp.ne.s32.totalorder %s295, %s309
      %p311 = scmp.eq.s32.totalorder %s33, 0
      %p312 = por %p310, %p311
      %s314 = sadd.s32 %s313, 1
      %p317 = scmp.eq.s32.totalorder %s27, 1
      %p318 = scmp.ne.s32.totalorder %s313, %s315
      %p319 = scmp.eq.s32.totalorder %s27, 0
      %p320 = por %p318, %p319
      %p321 = scmp.ne.s32.totalorder %s313, %s315
      %p322 = scmp.eq.s32.totalorder %s32, 1
      %p323 = por %p321, %p322
      %p324 = scmp.ne.s32.totalorder %s315, %s316
      %p325 = scmp.eq.s32.totalorder %s32, 0
      %p326 = por %p324, %p325
      %p327 = scmp.ne.s32.totalorder %s315, %s316
      %p328 = scmp.eq.s32.totalorder %s33, 1
      %p329 = por %p327, %p328
      %p331 = scmp.ne.s32.totalorder %s316, %s330
      %p332 = scmp.eq.s32.totalorder %s33, 0
      %p333 = por %p331, %p332
      %s334 = ssub.s32 %s27, %s34
      %p335 = scmp.eq.s32.totalorder %s334, 0
      %s337 = sadd.s32 %s336, 1
      %s338 = scalar_select %p335, %s336, %s337
      %p341 = pneg %p335
      %p342 = scmp.eq.s32.totalorder %s27, 1
      %p343 = por %p341, %p342
      %p344 = scmp.ne.s32.totalorder %s336, %s339
      %p345 = scmp.eq.s32.totalorder %s27, 0
      %p346 = por %p344, %p345
      %p347 = scmp.ne.s32.totalorder %s336, %s339
      %p348 = scmp.eq.s32.totalorder %s32, 1
      %p349 = por %p347, %p348
      %p350 = scmp.ne.s32.totalorder %s339, %s340
      %p351 = scmp.eq.s32.totalorder %s32, 0
      %p352 = por %p350, %p351
      %p353 = scmp.ne.s32.totalorder %s339, %s340
      %p354 = scmp.eq.s32.totalorder %s33, 1
      %p355 = por %p353, %p354
      %p357 = scmp.ne.s32.totalorder %s340, %s356
      %p358 = scmp.eq.s32.totalorder %s33, 0
      %p359 = por %p357, %p358
      %p360 = scmp.le.s32.totalorder 1, %s27
      %p361 = scmp.lt.s32.totalorder %s27, 3
      %p362 = pnand %p360, %p361
      %p363 = pneg %p362
      // Predicated region
      $region9: #{clip_encoder_layer.1} parent=5 // pred_check
        _
      $region10: #{clip_encoder_layer.1} parent=5 // pred_check_branch
        %365 = sbr.rel (%p362) target = $region12
      $region11: #{clip_encoder_layer.1} parent=5 // pred_region
        %s366 = ssub.s32 %s27, 1
        // Predicated region
        $region13: #{clip_encoder_layer.1} parent=11 // pred_check
          %p367 = pneg %p74
        $region14: #{clip_encoder_layer.1} parent=11 // pred_check_branch
          %369 = sbr.rel (%p367) target = $region16
        $region15: #{clip_encoder_layer.1} parent=11 // pred_region
          %s371 = ssub.s32 128, 128
          %372 = vsyncadd [#allocation4], %s371
          %s374 = sshll.u32 [#allocation3], 4
          %s375 = int_to_ptr.vmem [resolvable:$true] %s374
          %377 = dma.hbm_to_vmem [thread:$0]  %s1, 128, %s375, [#allocation4]
        $region16: #{clip_encoder_layer.1} parent=11 // pred_fallthru
          _
        // Predicated region
        $region17: #{clip_encoder_layer.1} parent=11 // pred_check
          %p378 = pneg %p95
        $region18: #{clip_encoder_layer.1} parent=11 // pred_check_branch
          %380 = sbr.rel (%p378) target = $region20
        $region19: #{clip_encoder_layer.1} parent=11 // pred_region
          _
        $region20: #{clip_encoder_layer.1} parent=11 // pred_fallthru
          _
        // Predicated region
        $region21: #{clip_encoder_layer.1} parent=11 // pred_check
          %p381 = pneg %p116
        $region22: #{clip_encoder_layer.1} parent=11 // pred_check_branch
          %383 = sbr.rel (%p381) target = $region24
        $region23: #{clip_encoder_layer.1} parent=11 // pred_region
          _
        $region24: #{clip_encoder_layer.1} parent=11 // pred_fallthru
          _
        // Predicated region
        $region25: #{clip_encoder_layer.1} parent=11 // pred_check
          %p384 = pneg %p137
        $region26: #{clip_encoder_layer.1} parent=11 // pred_check_branch
          %386 = sbr.rel (%p384) target = $region28
        $region27: #{clip_encoder_layer.1} parent=11 // pred_region
          _
        $region28: #{clip_encoder_layer.1} parent=11 // pred_fallthru
          _
        // Predicated region
        $region29: #{clip_encoder_layer.1} parent=11 // pred_check
          %p387 = pneg %p158
        $region30: #{clip_encoder_layer.1} parent=11 // pred_check_branch
          %389 = sbr.rel (%p387) target = $region32
        $region31: #{clip_encoder_layer.1} parent=11 // pred_region
          %s391 = ssub.s32 16, 16
          %392 = vsyncadd [#allocation7], %s391
          %s394 = sshll.u32 [#allocation6], 4
          %s395 = int_to_ptr.vmem [resolvable:$true] %s394
          %397 = dma.hbm_to_vmem [thread:$0]  %s5, 16, %s395, [#allocation7]
        $region32: #{clip_encoder_layer.1} parent=11 // pred_fallthru
          _
        // Predicated region
        $region33: #{clip_encoder_layer.1} parent=11 // pred_check
          %p398 = pneg %p179
        $region34: #{clip_encoder_layer.1} parent=11 // pred_check_branch
          %400 = sbr.rel (%p398) target = $region36
        $region35: #{clip_encoder_layer.1} parent=11 // pred_region
          _
        $region36: #{clip_encoder_layer.1} parent=11 // pred_fallthru
          _
        // Predicated region
        $region37: #{clip_encoder_layer.1} parent=11 // pred_check
          %p401 = pneg %p200
        $region38: #{clip_encoder_layer.1} parent=11 // pred_check_branch
          %403 = sbr.rel (%p401) target = $region40
        $region39: #{clip_encoder_layer.1} parent=11 // pred_region
          %s405 = ssub.s32 16, 16
          %406 = vsyncadd [#allocation7], %s405
          %s408 = sshll.u32 [#allocation8], 4
          %s409 = int_to_ptr.vmem [resolvable:$true] %s408
          %411 = dma.hbm_to_vmem [thread:$0]  %s7, 16, %s409, [#allocation7]
        $region40: #{clip_encoder_layer.1} parent=11 // pred_fallthru
          _
        // Predicated region
        $region41: #{clip_encoder_layer.1} parent=11 // pred_check
          %p412 = pneg %p221
        $region42: #{clip_encoder_layer.1} parent=11 // pred_check_branch
          %414 = sbr.rel (%p412) target = $region44
        $region43: #{clip_encoder_layer.1} parent=11 // pred_region
          %s416 = ssub.s32 16, 16
          %417 = vsyncadd [#allocation10], %s416
          %s419 = sshll.u32 [#allocation9], 4
          %s420 = int_to_ptr.vmem [resolvable:$true] %s419
          %422 = dma.hbm_to_vmem [thread:$0]  %s8, 16, %s420, [#allocation10]
        $region44: #{clip_encoder_layer.1} parent=11 // pred_fallthru
          _
        // Predicated region
        $region45: #{clip_encoder_layer.1} parent=11 // pred_check
          %p423 = pneg %p242
        $region46: #{clip_encoder_layer.1} parent=11 // pred_check_branch
          %425 = sbr.rel (%p423) target = $region48
        $region47: #{clip_encoder_layer.1} parent=11 // pred_region
          %s427 = ssub.s32 16, 16
          %428 = vsyncadd [#allocation10], %s427
          %s430 = sshll.u32 [#allocation11], 4
          %s431 = int_to_ptr.vmem [resolvable:$true] %s430
          %433 = dma.hbm_to_vmem [thread:$0]  %s9, 16, %s431, [#allocation10]
        $region48: #{clip_encoder_layer.1} parent=11 // pred_fallthru
          _
        // Predicated region
        $region49: #{clip_encoder_layer.1} parent=11 // pred_check
          %p434 = pneg %p263
        $region50: #{clip_encoder_layer.1} parent=11 // pred_check_branch
          %436 = sbr.rel (%p434) target = $region52
        $region51: #{clip_encoder_layer.1} parent=11 // pred_region
          _
        $region52: #{clip_encoder_layer.1} parent=11 // pred_fallthru
          _
        // Predicated region
        $region53: #{clip_encoder_layer.1} parent=11 // pred_check
          %p437 = pneg %p284
        $region54: #{clip_encoder_layer.1} parent=11 // pred_check_branch
          %439 = sbr.rel (%p437) target = $region56
        $region55: #{clip_encoder_layer.1} parent=11 // pred_region
          %s441 = ssub.s32 16, 16
          %442 = vsyncadd [#allocation13], %s441
          %s444 = sshll.u32 [#allocation12], 4
          %s445 = int_to_ptr.vmem [resolvable:$true] %s444
          %447 = dma.hbm_to_vmem [thread:$0]  %s11, 16, %s445, [#allocation13]
        $region56: #{clip_encoder_layer.1} parent=11 // pred_fallthru
          _
        // Predicated region
        $region57: #{clip_encoder_layer.1} parent=11 // pred_check
          %p448 = pneg %p305
        $region58: #{clip_encoder_layer.1} parent=11 // pred_check_branch
          %450 = sbr.rel (%p448) target = $region60
        $region59: #{clip_encoder_layer.1} parent=11 // pred_region
          _
        $region60: #{clip_encoder_layer.1} parent=11 // pred_fallthru
          _
        // Predicated region
        $region61: #{clip_encoder_layer.1} parent=11 // pred_check
          %p451 = pneg %p326
        $region62: #{clip_encoder_layer.1} parent=11 // pred_check_branch
          %453 = sbr.rel (%p451) target = $region64
        $region63: #{clip_encoder_layer.1} parent=11 // pred_region
          %s455 = ssub.s32 16, 16
          %456 = vsyncadd [#allocation13], %s455
          %s458 = sshll.u32 [#allocation14], 4
          %s459 = int_to_ptr.vmem [resolvable:$true] %s458
          %461 = dma.hbm_to_vmem [thread:$0]  %s13, 16, %s459, [#allocation13]
        $region64: #{clip_encoder_layer.1} parent=11 // pred_fallthru
          _
      $region12: #{clip_encoder_layer.1} parent=5 // pred_fallthru
        _
      %p462 = scmp.lt.s32.totalorder %s27, 2
      // Predicated region
      $region65: #{clip_encoder_layer.1} parent=5 // pred_check
        %p463 = pneg %p462
      $region66: #{clip_encoder_layer.1} parent=5 // pred_check_branch
        %465 = sbr.rel (%p463) target = $region68
      $region67: #{clip_encoder_layer.1} parent=5 // pred_region
        // Predicated region
        $region69: #{clip_encoder_layer.1} parent=67 // pred_check
          %p466 = pneg %p47
        $region70: #{clip_encoder_layer.1} parent=67 // pred_check_branch
          %468 = sbr.rel (%p466) target = $region72
        $region71: #{clip_encoder_layer.1} parent=67 // pred_region
          %p469 = scmp.lt.s32.totalorder %s27, 1
          %s470 = scalar_select %p469, %s27, 1
          %s471 = smul.addr %s470, 8
          %s472 = scalar_lea.vmem %s0, %s471
        $region72: #{clip_encoder_layer.1} parent=67 // pred_fallthru
          _
      $region68: #{clip_encoder_layer.1} parent=5 // pred_fallthru
        _
      %p473 = scmp.le.s32.totalorder 1, %s27
      %p474 = scmp.lt.s32.totalorder %s27, 3
      %p475 = pnand %p473, %p474
      %p476 = pneg %p475
      // Predicated region
      $region73: #{clip_encoder_layer.1} parent=5 // pred_check
        _
      $region74: #{clip_encoder_layer.1} parent=5 // pred_check_branch
        %478 = sbr.rel (%p475) target = $region76
      $region75: #{clip_encoder_layer.1} parent=5 // pred_region
        %s479 = ssub.s32 %s27, 1
        // Predicated region
        $region77: #{clip_encoder_layer.1} parent=75 // pred_check
          %p480 = pneg %p74
        $region78: #{clip_encoder_layer.1} parent=75 // pred_check_branch
          %482 = sbr.rel (%p480) target = $region80
        $region79: #{clip_encoder_layer.1} parent=75 // pred_region
          %483 = dma.done [#allocation4], 128
        $region80: #{clip_encoder_layer.1} parent=75 // pred_fallthru
          _
        // Predicated region
        $region81: #{clip_encoder_layer.1} parent=75 // pred_check
          %p484 = pneg %p158
        $region82: #{clip_encoder_layer.1} parent=75 // pred_check_branch
          %486 = sbr.rel (%p484) target = $region84
        $region83: #{clip_encoder_layer.1} parent=75 // pred_region
          %487 = dma.done [#allocation7], 16
        $region84: #{clip_encoder_layer.1} parent=75 // pred_fallthru
          _
        // Predicated region
        $region85: #{clip_encoder_layer.1} parent=75 // pred_check
          %p488 = pneg %p200
        $region86: #{clip_encoder_layer.1} parent=75 // pred_check_branch
          %490 = sbr.rel (%p488) target = $region88
        $region87: #{clip_encoder_layer.1} parent=75 // pred_region
          %491 = dma.done [#allocation7], 16
        $region88: #{clip_encoder_layer.1} parent=75 // pred_fallthru
          _
        // Predicated region
        $region89: #{clip_encoder_layer.1} parent=75 // pred_check
          %p492 = pneg %p221
        $region90: #{clip_encoder_layer.1} parent=75 // pred_check_branch
          %494 = sbr.rel (%p492) target = $region92
        $region91: #{clip_encoder_layer.1} parent=75 // pred_region
          %495 = dma.done [#allocation10], 16
        $region92: #{clip_encoder_layer.1} parent=75 // pred_fallthru
          _
        // Predicated region
        $region93: #{clip_encoder_layer.1} parent=75 // pred_check
          %p496 = pneg %p242
        $region94: #{clip_encoder_layer.1} parent=75 // pred_check_branch
          %498 = sbr.rel (%p496) target = $region96
        $region95: #{clip_encoder_layer.1} parent=75 // pred_region
          %499 = dma.done [#allocation10], 16
        $region96: #{clip_encoder_layer.1} parent=75 // pred_fallthru
          _
        // Predicated region
        $region97: #{clip_encoder_layer.1} parent=75 // pred_check
          %p500 = pneg %p284
        $region98: #{clip_encoder_layer.1} parent=75 // pred_check_branch
          %502 = sbr.rel (%p500) target = $region100
        $region99: #{clip_encoder_layer.1} parent=75 // pred_region
          %503 = dma.done [#allocation13], 16
        $region100: #{clip_encoder_layer.1} parent=75 // pred_fallthru
          _
        // Predicated region
        $region101: #{clip_encoder_layer.1} parent=75 // pred_check
          %p504 = pneg %p326
        $region102: #{clip_encoder_layer.1} parent=75 // pred_check_branch
          %506 = sbr.rel (%p504) target = $region104
        $region103: #{clip_encoder_layer.1} parent=75 // pred_region
          %507 = dma.done [#allocation13], 16
        $region104: #{clip_encoder_layer.1} parent=75 // pred_fallthru
          _
        %p508 = scmp.lt.s32.totalorder %s32, 1
        %s509 = scalar_select %p508, %s32, 1
        %s510 = smul.addr %s509, 8
        %s511 = scalar_lea.vmem %s0, %s510
        %p512 = pneg %p53
        %p513 = pneg %p50
        %p514 = pneg %p74
        %p515 = pneg %p71
        %p516 = pneg %p95
        %p517 = pneg %p92
        %p518 = pneg %p116
        %p519 = pneg %p113
        %p520 = pneg %p137
        %p521 = pneg %p134
        %p522 = pneg %p158
        %p523 = pneg %p155
        %p524 = pneg %p179
        %p525 = pneg %p176
        %p526 = pneg %p200
        %p527 = pneg %p197
        %p528 = pneg %p221
        %p529 = pneg %p218
        %p530 = pneg %p242
        %p531 = pneg %p239
        %p532 = pneg %p263
        %p533 = pneg %p260
        %p534 = pneg %p284
        %p535 = pneg %p281
        %p536 = pneg %p305
        %p537 = pneg %p302
        %p538 = pneg %p326
        %p539 = pneg %p323
        %p540 = pneg %p352
        %p541 = pneg %p349
        %s542 = sand.u32 %s339, 1
        %s543 = scalar_lea.sflag [#allocation5], %s542
        %s544 = sand.u32 %s339, 1
        %s545 = smul.addr %s544, 8
        %s546 = scalar_lea.vmem [#allocation15], %s545
        %p547 = scmp.lt.s32.totalorder %s32, 1
        %s548 = scalar_select %p547, %s32, 1
        %s549 = smul.addr %s548, 8
        %s550 = scalar_lea.vmem %s0, %s549
        %v552 = vld [vmem:[%s550] sm:$0xff]
        %v553 = vld [vmem:[%s2] sm:$0x1]
        %v554 = vld [vmem:[%s3] sm:$0x1]
        %vm555 = vcmask 261120
        %v556 = vsel %vm555, %v552, 0.0
        %557 = vadd.xlane.f32.xlu0 %v556
        %v558 = vpop.xlane.xlu0 %557
        %v559 = vrcp.pop 32.0
        %v560 = vmul.f32 %v558, %v559
        %v561 = vsub.f32 %v552, %v560
        %v562 = vmul.f32 %v561, %v561
        %v563 = vsel %vm555, %v562, 0.0
        %564 = vadd.xlane.f32.xlu0 %v563
        %v565 = vpop.xlane.xlu0 %564
        %v566 = vmul.f32 %v565, %v559
        %v567 = vadd.f32 %v566, 1e-05
        %v568 = vrsqrt.pop %v567
        %v569 = vmul.f32 %v561, %v568
        %v571 = vlaneseq
        %v572 = vshrl.u32 %v571, 7
        %v573 = vsub.s32 0, %v572
        %v574 = vrot.slane %v553, %v573
        %v576 = vmul.f32 %v569, %v574
        %v578 = vlaneseq
        %v579 = vshrl.u32 %v578, 7
        %v580 = vsub.s32 0, %v579
        %v581 = vrot.slane %v554, %v580
        %v583 = vadd.f32 %v576, %v581
        %v584 = vpack.c.bf16 %v583, %v583
        %v585 = vld [vmem:[#allocation3] sm:$0xff]
        %586 = vst.msk [vmem:[#allocation2] sm:$0xff] %vm555, 0.0
        %v587 = vld [vmem:[%s4] sm:$0xf]
        %v588 = vld [vmem:[%s4 + $0x4] sm:$0xf]
        %v589 = vld [vmem:[%s4 + $0x8] sm:$0xf]
        %v590 = vld [vmem:[%s4 + $0xc] sm:$0xf]
        %v591 = vld [vmem:[#allocation6] sm:$0x1]
        %v593 = vlaneseq
        %v594 = vshrl.u32 %v593, 7
        %v595 = vsub.s32 0, %v594
        %v596 = vrot.slane %v591, %v595
        %v602 = vunpack.c.l.b16 %v587
        %v603 = vunpack.c.l.b16 %v588
        %v604 = vunpack.c.l.b16 %v589
        %v605 = vunpack.c.l.b16 %v590
        %v606 = vpack.c.b16 %v603, %v602
        %v607 = vpack.c.b16 %v605, %v604
        %v611 = vsel %vm555, %v584, 0
        %613 = vmatprep.subr.bf16.mxu0 0
        %614 = vmatpush1.bf16.msra.mxu0 %v606
        %615 = vmatprep.subr.bf16.mxu0 0
        %616 = vmatpush1.bf16.msra.mxu0 %v607
        %617 = vmatprep.subr.bf16.mxu0 0
        %618 = vmatpush1.bf16.msra.mxu0 0
        %619 = vmatprep.subr.bf16.mxu0 0
        %620 = vmatpush1.bf16.msra.mxu0 0
        %621 = vmatprep.subr.bf16.mxu0 0
        %622 = vmatpush1.bf16.msra.mxu0 0
        %623 = vmatprep.subr.bf16.mxu0 0
        %624 = vmatpush1.bf16.msra.mxu0 0
        %625 = vmatprep.subr.bf16.mxu0 0
        %626 = vmatpush1.bf16.msra.mxu0 0
        %627 = vmatprep.subr.bf16.mxu0 0
        %628 = vmatpush1.bf16.msra.mxu0 0
        %629 = vmatprep.subr.bf16.mxu0 0
        %630 = vmatpush1.bf16.msra.mxu0 0
        %631 = vmatprep.subr.bf16.mxu0 0
        %632 = vmatpush1.bf16.msra.mxu0 0
        %633 = vmatprep.subr.bf16.mxu0 0
        %634 = vmatpush1.bf16.msra.mxu0 0
        %635 = vmatprep.subr.bf16.mxu0 0
        %636 = vmatpush1.bf16.msra.mxu0 0
        %637 = vmatprep.subr.bf16.mxu0 0
        %638 = vmatpush1.bf16.msra.mxu0 0
        %639 = vmatprep.subr.bf16.mxu0 0
        %640 = vmatpush1.bf16.msra.mxu0 0
        %641 = vmatprep.subr.bf16.mxu0 0
        %642 = vmatpush1.bf16.msra.mxu0 0
        %643 = vmatprep.subr.bf16.mxu0 0
        %644 = vmatpush1.bf16.msra.mxu0 0
        %645 = vmatprep.mubr.bf16.mxu0 0
        %646 = vmatmul.mubr.bf16.gmra.mrb[0].mxu0 %v611
        %v647 = vpop.f32.mrb[0].mxu0
        %v648 = vadd.f32 %v596, %v647
        %v649 = vpop.f32.mrb[0].mxu0
        %v650 = vpop.f32.mrb[0].mxu0
        %v651 = vpop.f32.mrb[0].mxu0
        %652 = vdwg.mxu0
        %v653 = vpack.c.bf16 %v648, %v648
        %655 = vrot.lane.b32.xlu0 %v653, 96
        %v656 = vpop.permute.xlu0 %655
        %vm657 = vcmask 64512
        %v659 = vsel %vm657, %v653, 0
        %v662 = vsel %vm657, %v656, 0
        %664 = vmatprep.subr.bf16.mxu0 0
        %665 = vmatpush1.bf16.xpose.msra.mxu0 %v662
        %666 = vmatprep.subr.bf16.mxu0 0
        %667 = vmatpush1.bf16.xpose.msra.mxu0 0
        %668 = vmatprep.subr.bf16.mxu0 0
        %669 = vmatpush1.bf16.xpose.msra.mxu0 0
        %670 = vmatprep.subr.bf16.mxu0 0
        %671 = vmatpush1.bf16.xpose.msra.mxu0 0
        %672 = vmatprep.subr.bf16.mxu0 0
        %673 = vmatpush1.bf16.xpose.msra.mxu0 0
        %674 = vmatprep.subr.bf16.mxu0 0
        %675 = vmatpush1.bf16.xpose.msra.mxu0 0
        %676 = vmatprep.subr.bf16.mxu0 0
        %677 = vmatpush1.bf16.xpose.msra.mxu0 0
        %678 = vmatprep.subr.bf16.mxu0 0
        %679 = vmatpush1.bf16.xpose.msra.mxu0 0
        %680 = vmatprep.subr.bf16.mxu0 0
        %681 = vmatpush1.bf16.xpose.msra.mxu0 0
        %682 = vmatprep.subr.bf16.mxu0 0
        %683 = vmatpush1.bf16.xpose.msra.mxu0 0
        %684 = vmatprep.subr.bf16.mxu0 0
        %685 = vmatpush1.bf16.xpose.msra.mxu0 0
        %686 = vmatprep.subr.bf16.mxu0 0
        %687 = vmatpush1.bf16.xpose.msra.mxu0 0
        %688 = vmatprep.subr.bf16.mxu0 0
        %689 = vmatpush1.bf16.xpose.msra.mxu0 0
        %690 = vmatprep.subr.bf16.mxu0 0
        %691 = vmatpush1.bf16.xpose.msra.mxu0 0
        %692 = vmatprep.subr.bf16.mxu0 0
        %693 = vmatpush1.bf16.xpose.msra.mxu0 0
        %694 = vmatprep.subr.bf16.mxu0 0
        %695 = vmatpush1.bf16.xpose.msra.mxu0 0
        %696 = vmatprep.mubr.bf16.mxu0 0
        %697 = vmatmul.mubr.bf16.gmra.mrb[0].mxu0 %v659
        %v698 = vpop.f32.mrb[0].mxu0
        %v699 = vadd.f32 %v585, %v698
        %v700 = vpop.f32.mrb[0].mxu0
        %v701 = vpop.f32.mrb[0].mxu0
        %v702 = vpop.f32.mrb[0].mxu0
        %703 = vdwg.mxu0
        %v704 = vsel %vm657, %v699, -inf
        %705 = vmax.xlane.f32.xlu0 %v704
        %v706 = vpop.xlane.xlu0 %705
        %v707 = vsub.f32 %v699, %v706
        %v708 = vmul.f32 %v707, 1.442695
        %v709 = vpow.pop %v708
        %v710 = vsel %vm657, %v709, 0.0
        %711 = vadd.xlane.f32.xlu0 %v710
        %v712 = vpop.xlane.xlu0 %711
        %v713 = vpack.c.bf16 %v709, %v709
        %714 = vrot.lane.b32.xlu0 %v653, 64
        %v715 = vpop.permute.xlu0 %714
        %v717 = vsel %vm657, %v713, 0
        %vm719 = vcmask 1043456
        %v721 = vsel %vm719, %v715, 0
        %723 = vmatprep.subr.bf16.mxu0 0
        %724 = vmatpush1.bf16.msra.mxu0 %v721
        %725 = vmatprep.subr.bf16.mxu0 0
        %726 = vmatpush1.bf16.msra.mxu0 0
        %727 = vmatprep.subr.bf16.mxu0 0
        %728 = vmatpush1.bf16.msra.mxu0 0
        %729 = vmatprep.subr.bf16.mxu0 0
        %730 = vmatpush1.bf16.msra.mxu0 0
        %731 = vmatprep.subr.bf16.mxu0 0
        %732 = vmatpush1.bf16.msra.mxu0 0
        %733 = vmatprep.subr.bf16.mxu0 0
        %734 = vmatpush1.bf16.msra.mxu0 0
        %735 = vmatprep.subr.bf16.mxu0 0
        %736 = vmatpush1.bf16.msra.mxu0 0
        %737 = vmatprep.subr.bf16.mxu0 0
        %738 = vmatpush1.bf16.msra.mxu0 0
        %739 = vmatprep.subr.bf16.mxu0 0
        %740 = vmatpush1.bf16.msra.mxu0 0
        %741 = vmatprep.subr.bf16.mxu0 0
        %742 = vmatpush1.bf16.msra.mxu0 0
        %743 = vmatprep.subr.bf16.mxu0 0
        %744 = vmatpush1.bf16.msra.mxu0 0
        %745 = vmatprep.subr.bf16.mxu0 0
        %746 = vmatpush1.bf16.msra.mxu0 0
        %747 = vmatprep.subr.bf16.mxu0 0
        %748 = vmatpush1.bf16.msra.mxu0 0
        %749 = vmatprep.subr.bf16.mxu0 0
        %750 = vmatpush1.bf16.msra.mxu0 0
        %751 = vmatprep.subr.bf16.mxu0 0
        %752 = vmatpush1.bf16.msra.mxu0 0
        %753 = vmatprep.subr.bf16.mxu0 0
        %754 = vmatpush1.bf16.msra.mxu0 0
        %755 = vmatprep.mubr.bf16.mxu0 0
        %756 = vmatmul.mubr.bf16.gmra.mrb[0].mxu0 %v717
        %v757 = vpop.f32.mrb[0].mxu0
        %v758 = vadd.f32 0.0, %v757
        %v759 = vpop.f32.mrb[0].mxu0
        %v760 = vpop.f32.mrb[0].mxu0
        %v761 = vpop.f32.mrb[0].mxu0
        %762 = vdwg.mxu0
        %v763 = vrcp.pop %v712
        %v764 = vmul.f32 %v758, %v763
        %v765 = vpack.c.bf16 %v764, %v764
        %766 = vrot.lane.b32.xlu0 %v653, 120
        %v767 = vpop.permute.xlu0 %766
        %768 = vrot.lane.b32.xlu0 %v653, 88
        %v769 = vpop.permute.xlu0 %768
        %v771 = vsel %vm657, %v767, 0
        %v774 = vsel %vm657, %v769, 0
        %776 = vmatprep.subr.bf16.mxu0 0
        %777 = vmatpush1.bf16.xpose.msra.mxu0 %v774
        %778 = vmatprep.subr.bf16.mxu0 0
        %779 = vmatpush1.bf16.xpose.msra.mxu0 0
        %780 = vmatprep.subr.bf16.mxu0 0
        %781 = vmatpush1.bf16.xpose.msra.mxu0 0
        %782 = vmatprep.subr.bf16.mxu0 0
        %783 = vmatpush1.bf16.xpose.msra.mxu0 0
        %784 = vmatprep.subr.bf16.mxu0 0
        %785 = vmatpush1.bf16.xpose.msra.mxu0 0
        %786 = vmatprep.subr.bf16.mxu0 0
        %787 = vmatpush1.bf16.xpose.msra.mxu0 0
        %788 = vmatprep.subr.bf16.mxu0 0
        %789 = vmatpush1.bf16.xpose.msra.mxu0 0
        %790 = vmatprep.subr.bf16.mxu0 0
        %791 = vmatpush1.bf16.xpose.msra.mxu0 0
        %792 = vmatprep.subr.bf16.mxu0 0
        %793 = vmatpush1.bf16.xpose.msra.mxu0 0
        %794 = vmatprep.subr.bf16.mxu0 0
        %795 = vmatpush1.bf16.xpose.msra.mxu0 0
        %796 = vmatprep.subr.bf16.mxu0 0
        %797 = vmatpush1.bf16.xpose.msra.mxu0 0
        %798 = vmatprep.subr.bf16.mxu0 0
        %799 = vmatpush1.bf16.xpose.msra.mxu0 0
        %800 = vmatprep.subr.bf16.mxu0 0
        %801 = vmatpush1.bf16.xpose.msra.mxu0 0
        %802 = vmatprep.subr.bf16.mxu0 0
        %803 = vmatpush1.bf16.xpose.msra.mxu0 0
        %804 = vmatprep.subr.bf16.mxu0 0
        %805 = vmatpush1.bf16.xpose.msra.mxu0 0
        %806 = vmatprep.subr.bf16.mxu0 0
        %807 = vmatpush1.bf16.xpose.msra.mxu0 0
        %808 = vmatprep.mubr.bf16.mxu0 0
        %809 = vmatmul.mubr.bf16.gmra.mrb[0].mxu0 %v771
        %v810 = vpop.f32.mrb[0].mxu0
        %v811 = vadd.f32 %v585, %v810
        %v812 = vpop.f32.mrb[0].mxu0
        %v813 = vpop.f32.mrb[0].mxu0
        %v814 = vpop.f32.mrb[0].mxu0
        %815 = vdwg.mxu0
        %v816 = vsel %vm657, %v811, -inf
        %817 = vmax.xlane.f32.xlu0 %v816
        %v818 = vpop.xlane.xlu0 %817
        %v819 = vsub.f32 %v811, %v818
        %v820 = vmul.f32 %v819, 1.442695
        %v821 = vpow.pop %v820
        %v822 = vsel %vm657, %v821, 0.0
        %823 = vadd.xlane.f32.xlu0 %v822
        %v824 = vpop.xlane.xlu0 %823
        %v825 = vpack.c.bf16 %v821, %v821
        %826 = vrot.lane.b32.xlu0 %v653, 56
        %v827 = vpop.permute.xlu0 %826
        %v829 = vsel %vm657, %v825, 0
        %v832 = vsel %vm719, %v827, 0
        %834 = vmatprep.subr.bf16.mxu0 0
        %835 = vmatpush1.bf16.msra.mxu0 %v832
        %836 = vmatprep.subr.bf16.mxu0 0
        %837 = vmatpush1.bf16.msra.mxu0 0
        %838 = vmatprep.subr.bf16.mxu0 0
        %839 = vmatpush1.bf16.msra.mxu0 0
        %840 = vmatprep.subr.bf16.mxu0 0
        %841 = vmatpush1.bf16.msra.mxu0 0
        %842 = vmatprep.subr.bf16.mxu0 0
        %843 = vmatpush1.bf16.msra.mxu0 0
        %844 = vmatprep.subr.bf16.mxu0 0
        %845 = vmatpush1.bf16.msra.mxu0 0
        %846 = vmatprep.subr.bf16.mxu0 0
        %847 = vmatpush1.bf16.msra.mxu0 0
        %848 = vmatprep.subr.bf16.mxu0 0
        %849 = vmatpush1.bf16.msra.mxu0 0
        %850 = vmatprep.subr.bf16.mxu0 0
        %851 = vmatpush1.bf16.msra.mxu0 0
        %852 = vmatprep.subr.bf16.mxu0 0
        %853 = vmatpush1.bf16.msra.mxu0 0
        %854 = vmatprep.subr.bf16.mxu0 0
        %855 = vmatpush1.bf16.msra.mxu0 0
        %856 = vmatprep.subr.bf16.mxu0 0
        %857 = vmatpush1.bf16.msra.mxu0 0
        %858 = vmatprep.subr.bf16.mxu0 0
        %859 = vmatpush1.bf16.msra.mxu0 0
        %860 = vmatprep.subr.bf16.mxu0 0
        %861 = vmatpush1.bf16.msra.mxu0 0
        %862 = vmatprep.subr.bf16.mxu0 0
        %863 = vmatpush1.bf16.msra.mxu0 0
        %864 = vmatprep.subr.bf16.mxu0 0
        %865 = vmatpush1.bf16.msra.mxu0 0
        %866 = vmatprep.mubr.bf16.mxu0 0
        %867 = vmatmul.mubr.bf16.gmra.mrb[0].mxu0 %v829
        %v868 = vpop.f32.mrb[0].mxu0
        %v869 = vadd.f32 0.0, %v868
        %v870 = vpop.f32.mrb[0].mxu0
        %v871 = vpop.f32.mrb[0].mxu0
        %v872 = vpop.f32.mrb[0].mxu0
        %873 = vdwg.mxu0
        %v874 = vrcp.pop %v824
        %v875 = vmul.f32 %v869, %v874
        %v876 = vpack.c.bf16 %v875, %v875
        %877 = vrot.lane.b32.xlu0 %v653, 112
        %v878 = vpop.permute.xlu0 %877
        %879 = vrot.lane.b32.xlu0 %v653, 80
        %v880 = vpop.permute.xlu0 %879
        %v882 = vsel %vm657, %v878, 0
        %v885 = vsel %vm657, %v880, 0
        %887 = vmatprep.subr.bf16.mxu0 0
        %888 = vmatpush1.bf16.xpose.msra.mxu0 %v885
        %889 = vmatprep.subr.bf16.mxu0 0
        %890 = vmatpush1.bf16.xpose.msra.mxu0 0
        %891 = vmatprep.subr.bf16.mxu0 0
        %892 = vmatpush1.bf16.xpose.msra.mxu0 0
        %893 = vmatprep.subr.bf16.mxu0 0
        %894 = vmatpush1.bf16.xpose.msra.mxu0 0
        %895 = vmatprep.subr.bf16.mxu0 0
        %896 = vmatpush1.bf16.xpose.msra.mxu0 0
        %897 = vmatprep.subr.bf16.mxu0 0
        %898 = vmatpush1.bf16.xpose.msra.mxu0 0
        %899 = vmatprep.subr.bf16.mxu0 0
        %900 = vmatpush1.bf16.xpose.msra.mxu0 0
        %901 = vmatprep.subr.bf16.mxu0 0
        %902 = vmatpush1.bf16.xpose.msra.mxu0 0
        %903 = vmatprep.subr.bf16.mxu0 0
        %904 = vmatpush1.bf16.xpose.msra.mxu0 0
        %905 = vmatprep.subr.bf16.mxu0 0
        %906 = vmatpush1.bf16.xpose.msra.mxu0 0
        %907 = vmatprep.subr.bf16.mxu0 0
        %908 = vmatpush1.bf16.xpose.msra.mxu0 0
        %909 = vmatprep.subr.bf16.mxu0 0
        %910 = vmatpush1.bf16.xpose.msra.mxu0 0
        %911 = vmatprep.subr.bf16.mxu0 0
        %912 = vmatpush1.bf16.xpose.msra.mxu0 0
        %913 = vmatprep.subr.bf16.mxu0 0
        %914 = vmatpush1.bf16.xpose.msra.mxu0 0
        %915 = vmatprep.subr.bf16.mxu0 0
        %916 = vmatpush1.bf16.xpose.msra.mxu0 0
        %917 = vmatprep.subr.bf16.mxu0 0
        %918 = vmatpush1.bf16.xpose.msra.mxu0 0
        %919 = vmatprep.mubr.bf16.mxu0 0
        %920 = vmatmul.mubr.bf16.gmra.mrb[0].mxu0 %v882
        %v921 = vpop.f32.mrb[0].mxu0
        %v922 = vadd.f32 %v585, %v921
        %v923 = vpop.f32.mrb[0].mxu0
        %v924 = vpop.f32.mrb[0].mxu0
        %v925 = vpop.f32.mrb[0].mxu0
        %926 = vdwg.mxu0
        %v927 = vsel %vm657, %v922, -inf
        %928 = vmax.xlane.f32.xlu0 %v927
        %v929 = vpop.xlane.xlu0 %928
        %v930 = vsub.f32 %v922, %v929
        %v931 = vmul.f32 %v930, 1.442695
        %v932 = vpow.pop %v931
        %v933 = vsel %vm657, %v932, 0.0
        %934 = vadd.xlane.f32.xlu0 %v933
        %v935 = vpop.xlane.xlu0 %934
        %v936 = vpack.c.bf16 %v932, %v932
        %937 = vrot.lane.b32.xlu0 %v653, 48
        %v938 = vpop.permute.xlu0 %937
        %v940 = vsel %vm657, %v936, 0
        %v943 = vsel %vm719, %v938, 0
        %945 = vmatprep.subr.bf16.mxu0 0
        %946 = vmatpush1.bf16.msra.mxu0 %v943
        %947 = vmatprep.subr.bf16.mxu0 0
        %948 = vmatpush1.bf16.msra.mxu0 0
        %949 = vmatprep.subr.bf16.mxu0 0
        %950 = vmatpush1.bf16.msra.mxu0 0
        %951 = vmatprep.subr.bf16.mxu0 0
        %952 = vmatpush1.bf16.msra.mxu0 0
        %953 = vmatprep.subr.bf16.mxu0 0
        %954 = vmatpush1.bf16.msra.mxu0 0
        %955 = vmatprep.subr.bf16.mxu0 0
        %956 = vmatpush1.bf16.msra.mxu0 0
        %957 = vmatprep.subr.bf16.mxu0 0
        %958 = vmatpush1.bf16.msra.mxu0 0
        %959 = vmatprep.subr.bf16.mxu0 0
        %960 = vmatpush1.bf16.msra.mxu0 0
        %961 = vmatprep.subr.bf16.mxu0 0
        %962 = vmatpush1.bf16.msra.mxu0 0
        %963 = vmatprep.subr.bf16.mxu0 0
        %964 = vmatpush1.bf16.msra.mxu0 0
        %965 = vmatprep.subr.bf16.mxu0 0
        %966 = vmatpush1.bf16.msra.mxu0 0
        %967 = vmatprep.subr.bf16.mxu0 0
        %968 = vmatpush1.bf16.msra.mxu0 0
        %969 = vmatprep.subr.bf16.mxu0 0
        %970 = vmatpush1.bf16.msra.mxu0 0
        %971 = vmatprep.subr.bf16.mxu0 0
        %972 = vmatpush1.bf16.msra.mxu0 0
        %973 = vmatprep.subr.bf16.mxu0 0
        %974 = vmatpush1.bf16.msra.mxu0 0
        %975 = vmatprep.subr.bf16.mxu0 0
        %976 = vmatpush1.bf16.msra.mxu0 0
        %977 = vmatprep.mubr.bf16.mxu0 0
        %978 = vmatmul.mubr.bf16.gmra.mrb[0].mxu0 %v940
        %v979 = vpop.f32.mrb[0].mxu0
        %v980 = vadd.f32 0.0, %v979
        %v981 = vpop.f32.mrb[0].mxu0
        %v982 = vpop.f32.mrb[0].mxu0
        %v983 = vpop.f32.mrb[0].mxu0
        %984 = vdwg.mxu0
        %v985 = vrcp.pop %v935
        %v986 = vmul.f32 %v980, %v985
        %v987 = vpack.c.bf16 %v986, %v986
        %988 = vrot.lane.b32.xlu0 %v653, 104
        %v989 = vpop.permute.xlu0 %988
        %990 = vrot.lane.b32.xlu0 %v653, 72
        %v991 = vpop.permute.xlu0 %990
        %v993 = vsel %vm657, %v989, 0
        %v996 = vsel %vm657, %v991, 0
        %998 = vmatprep.subr.bf16.mxu0 0
        %999 = vmatpush1.bf16.xpose.msra.mxu0 %v996
        %1000 = vmatprep.subr.bf16.mxu0 0
        %1001 = vmatpush1.bf16.xpose.msra.mxu0 0
        %1002 = vmatprep.subr.bf16.mxu0 0
        %1003 = vmatpush1.bf16.xpose.msra.mxu0 0
        %1004 = vmatprep.subr.bf16.mxu0 0
        %1005 = vmatpush1.bf16.xpose.msra.mxu0 0
        %1006 = vmatprep.subr.bf16.mxu0 0
        %1007 = vmatpush1.bf16.xpose.msra.mxu0 0
        %1008 = vmatprep.subr.bf16.mxu0 0
        %1009 = vmatpush1.bf16.xpose.msra.mxu0 0
        %1010 = vmatprep.subr.bf16.mxu0 0
        %1011 = vmatpush1.bf16.xpose.msra.mxu0 0
        %1012 = vmatprep.subr.bf16.mxu0 0
        %1013 = vmatpush1.bf16.xpose.msra.mxu0 0
        %1014 = vmatprep.subr.bf16.mxu0 0
        %1015 = vmatpush1.bf16.xpose.msra.mxu0 0
        %1016 = vmatprep.subr.bf16.mxu0 0
        %1017 = vmatpush1.bf16.xpose.msra.mxu0 0
        %1018 = vmatprep.subr.bf16.mxu0 0
        %1019 = vmatpush1.bf16.xpose.msra.mxu0 0
        %1020 = vmatprep.subr.bf16.mxu0 0
        %1021 = vmatpush1.bf16.xpose.msra.mxu0 0
        %1022 = vmatprep.subr.bf16.mxu0 0
        %1023 = vmatpush1.bf16.xpose.msra.mxu0 0
        %1024 = vmatprep.subr.bf16.mxu0 0
        %1025 = vmatpush1.bf16.xpose.msra.mxu0 0
        %1026 = vmatprep.subr.bf16.mxu0 0
        %1027 = vmatpush1.bf16.xpose.msra.mxu0 0
        %1028 = vmatprep.subr.bf16.mxu0 0
        %1029 = vmatpush1.bf16.xpose.msra.mxu0 0
        %1030 = vmatprep.mubr.bf16.mxu0 0
        %1031 = vmatmul.mubr.bf16.gmra.mrb[0].mxu0 %v993
        %v1032 = vpop.f32.mrb[0].mxu0
        %v1033 = vadd.f32 %v585, %v1032
        %v1034 = vpop.f32.mrb[0].mxu0
        %v1035 = vpop.f32.mrb[0].mxu0
        %v1036 = vpop.f32.mrb[0].mxu0
        %1037 = vdwg.mxu0
        %v1038 = vsel %vm657, %v1033, -inf
        %1039 = vmax.xlane.f32.xlu0 %v1038
        %v1040 = vpop.xlane.xlu0 %1039
        %v1041 = vsub.f32 %v1033, %v1040
        %v1042 = vmul.f32 %v1041, 1.442695
        %v1043 = vpow.pop %v1042
        %v1044 = vsel %vm657, %v1043, 0.0
        %1045 = vadd.xlane.f32.xlu0 %v1044
        %v1046 = vpop.xlane.xlu0 %1045
        %v1047 = vpack.c.bf16 %v1043, %v1043
        %1048 = vrot.lane.b32.xlu0 %v653, 40
        %v1049 = vpop.permute.xlu0 %1048
        %v1051 = vsel %vm657, %v1047, 0
        %v1054 = vsel %vm719, %v1049, 0
        %1056 = vmatprep.subr.bf16.mxu0 0
        %1057 = vmatpush1.bf16.msra.mxu0 %v1054
        %1058 = vmatprep.subr.bf16.mxu0 0
        %1059 = vmatpush1.bf16.msra.mxu0 0
        %1060 = vmatprep.subr.bf16.mxu0 0
        %1061 = vmatpush1.bf16.msra.mxu0 0
        %1062 = vmatprep.subr.bf16.mxu0 0
        %1063 = vmatpush1.bf16.msra.mxu0 0
        %1064 = vmatprep.subr.bf16.mxu0 0
        %1065 = vmatpush1.bf16.msra.mxu0 0
        %1066 = vmatprep.subr.bf16.mxu0 0
        %1067 = vmatpush1.bf16.msra.mxu0 0
        %1068 = vmatprep.subr.bf16.mxu0 0
        %1069 = vmatpush1.bf16.msra.mxu0 0
        %1070 = vmatprep.subr.bf16.mxu0 0
        %1071 = vmatpush1.bf16.msra.mxu0 0
        %1072 = vmatprep.subr.bf16.mxu0 0
        %1073 = vmatpush1.bf16.msra.mxu0 0
        %1074 = vmatprep.subr.bf16.mxu0 0
        %1075 = vmatpush1.bf16.msra.mxu0 0
        %1076 = vmatprep.subr.bf16.mxu0 0
        %1077 = vmatpush1.bf16.msra.mxu0 0
        %1078 = vmatprep.subr.bf16.mxu0 0
        %1079 = vmatpush1.bf16.msra.mxu0 0
        %1080 = vmatprep.subr.bf16.mxu0 0
        %1081 = vmatpush1.bf16.msra.mxu0 0
        %1082 = vmatprep.subr.bf16.mxu0 0
        %1083 = vmatpush1.bf16.msra.mxu0 0
        %1084 = vmatprep.subr.bf16.mxu0 0
        %1085 = vmatpush1.bf16.msra.mxu0 0
        %1086 = vmatprep.subr.bf16.mxu0 0
        %1087 = vmatpush1.bf16.msra.mxu0 0
        %1088 = vmatprep.mubr.bf16.mxu0 0
        %1089 = vmatmul.mubr.bf16.gmra.mrb[0].mxu0 %v1051
        %v1090 = vpop.f32.mrb[0].mxu0
        %v1091 = vadd.f32 0.0, %v1090
        %v1092 = vpop.f32.mrb[0].mxu0
        %v1093 = vpop.f32.mrb[0].mxu0
        %v1094 = vpop.f32.mrb[0].mxu0
        %1095 = vdwg.mxu0
        %v1096 = vrcp.pop %v1046
        %v1097 = vmul.f32 %v1091, %v1096
        %v1098 = vpack.c.bf16 %v1097, %v1097
        %1100 = vrot.lane.b32.xlu0 %v876, 8
        %v1101 = vpop.permute.xlu0 %1100
        %1103 = vrot.lane.b32.xlu0 %v987, 16
        %v1104 = vpop.permute.xlu0 %1103
        %1106 = vrot.lane.b32.xlu0 %v1098, 24
        %v1107 = vpop.permute.xlu0 %1106
        %v1110 = vsel %vm657, %v765, %v1101
        %vm1111 = vcmask 130048
        %v1113 = vsel %vm1111, %v1110, %v1104
        %vm1114 = vcmask 195584
        %v1116 = vsel %vm1114, %v1113, %v1107
        %v1117 = vld [vmem:[#allocation2] sm:$0xff]
        %v1118 = vld [vmem:[%s6] sm:$0xf]
        %v1119 = vld [vmem:[%s6 + $0x4] sm:$0xf]
        %v1120 = vld [vmem:[%s6 + $0x8] sm:$0xf]
        %v1121 = vld [vmem:[%s6 + $0xc] sm:$0xf]
        %v1126 = vunpack.c.l.b16 %v1118
        %v1127 = vunpack.c.l.b16 %v1119
        %v1128 = vunpack.c.l.b16 %v1120
        %v1129 = vunpack.c.l.b16 %v1121
        %v1130 = vpack.c.b16 %v1127, %v1126
        %v1131 = vpack.c.b16 %v1129, %v1128
        %v1134 = vsel %vm555, %v1116, 0
        %1136 = vmatprep.subr.bf16.mxu0 0
        %1137 = vmatpush1.bf16.msra.mxu0 %v1130
        %1138 = vmatprep.subr.bf16.mxu0 0
        %1139 = vmatpush1.bf16.msra.mxu0 %v1131
        %1140 = vmatprep.subr.bf16.mxu0 0
        %1141 = vmatpush1.bf16.msra.mxu0 0
        %1142 = vmatprep.subr.bf16.mxu0 0
        %1143 = vmatpush1.bf16.msra.mxu0 0
        %1144 = vmatprep.subr.bf16.mxu0 0
        %1145 = vmatpush1.bf16.msra.mxu0 0
        %1146 = vmatprep.subr.bf16.mxu0 0
        %1147 = vmatpush1.bf16.msra.mxu0 0
        %1148 = vmatprep.subr.bf16.mxu0 0
        %1149 = vmatpush1.bf16.msra.mxu0 0
        %1150 = vmatprep.subr.bf16.mxu0 0
        %1151 = vmatpush1.bf16.msra.mxu0 0
        %1152 = vmatprep.subr.bf16.mxu0 0
        %1153 = vmatpush1.bf16.msra.mxu0 0
        %1154 = vmatprep.subr.bf16.mxu0 0
        %1155 = vmatpush1.bf16.msra.mxu0 0
        %1156 = vmatprep.subr.bf16.mxu0 0
        %1157 = vmatpush1.bf16.msra.mxu0 0
        %1158 = vmatprep.subr.bf16.mxu0 0
        %1159 = vmatpush1.bf16.msra.mxu0 0
        %1160 = vmatprep.subr.bf16.mxu0 0
        %1161 = vmatpush1.bf16.msra.mxu0 0
        %1162 = vmatprep.subr.bf16.mxu0 0
        %1163 = vmatpush1.bf16.msra.mxu0 0
        %1164 = vmatprep.subr.bf16.mxu0 0
        %1165 = vmatpush1.bf16.msra.mxu0 0
        %1166 = vmatprep.subr.bf16.mxu0 0
        %1167 = vmatpush1.bf16.msra.mxu0 0
        %1168 = vmatprep.mubr.bf16.mxu0 0
        %1169 = vmatmul.mubr.bf16.gmra.mrb[0].mxu0 %v1134
        %v1170 = vpop.f32.mrb[0].mxu0
        %v1171 = vadd.f32 0.0, %v1170
        %v1172 = vpop.f32.mrb[0].mxu0
        %v1173 = vpop.f32.mrb[0].mxu0
        %v1174 = vpop.f32.mrb[0].mxu0
        %1175 = vdwg.mxu0
        %v1176 = vadd.f32 %v1117, %v1171
        %1177 = vst.msk [vmem:[#allocation2] sm:$0xff] %vm555, %v1176
        %v1178 = vld [vmem:[#allocation2] sm:$0xff]
        %v1179 = vadd.f32 %v552, %v1178
        %v1180 = vld [vmem:[#allocation8] sm:$0x1]
        %v1182 = vlaneseq
        %v1183 = vshrl.u32 %v1182, 7
        %v1184 = vsub.s32 0, %v1183
        %v1185 = vrot.slane %v1180, %v1184
        %v1187 = vadd.f32 %v1179, %v1185
        %v1188 = vld [vmem:[#allocation9] sm:$0x1]
        %v1189 = vld [vmem:[#allocation11] sm:$0x1]
        %v1190 = vsel %vm555, %v1187, 0.0
        %1191 = vadd.xlane.f32.xlu0 %v1190
        %v1192 = vpop.xlane.xlu0 %1191
        %v1193 = vmul.f32 %v1192, %v559
        %v1194 = vsub.f32 %v1187, %v1193
        %v1195 = vmul.f32 %v1194, %v1194
        %v1196 = vsel %vm555, %v1195, 0.0
        %1197 = vadd.xlane.f32.xlu0 %v1196
        %v1198 = vpop.xlane.xlu0 %1197
        %v1199 = vmul.f32 %v1198, %v559
        %v1200 = vadd.f32 %v1199, 1e-05
        %v1201 = vrsqrt.pop %v1200
        %v1202 = vmul.f32 %v1194, %v1201
        %v1204 = vlaneseq
        %v1205 = vshrl.u32 %v1204, 7
        %v1206 = vsub.s32 0, %v1205
        %v1207 = vrot.slane %v1188, %v1206
        %v1209 = vmul.f32 %v1202, %v1207
        %v1211 = vlaneseq
        %v1212 = vshrl.u32 %v1211, 7
        %v1213 = vsub.s32 0, %v1212
        %v1214 = vrot.slane %v1189, %v1213
        %v1216 = vadd.f32 %v1209, %v1214
        %v1217 = vpack.c.bf16 %v1216, %v1216
        %v1218 = vld [vmem:[%s10] sm:$0xf]
        %v1219 = vld [vmem:[%s10 + $0x4] sm:$0xf]
        %v1220 = vld [vmem:[%s10 + $0x8] sm:$0xf]
        %v1221 = vld [vmem:[%s10 + $0xc] sm:$0xf]
        %v1222 = vld [vmem:[#allocation12] sm:$0x1]
        %v1224 = vlaneseq
        %v1225 = vshrl.u32 %v1224, 7
        %v1226 = vsub.s32 0, %v1225
        %v1227 = vrot.slane %v1222, %v1226
        %v1233 = vunpack.c.l.b16 %v1218
        %v1234 = vunpack.c.l.b16 %v1219
        %v1235 = vunpack.c.l.b16 %v1220
        %v1236 = vunpack.c.l.b16 %v1221
        %v1237 = vpack.c.b16 %v1234, %v1233
        %v1238 = vpack.c.b16 %v1236, %v1235
        %v1242 = vsel %vm555, %v1217, 0
        %1244 = vmatprep.subr.bf16.mxu0 0
        %1245 = vmatpush1.bf16.msra.mxu0 %v1237
        %1246 = vmatprep.subr.bf16.mxu0 0
        %1247 = vmatpush1.bf16.msra.mxu0 %v1238
        %1248 = vmatprep.subr.bf16.mxu0 0
        %1249 = vmatpush1.bf16.msra.mxu0 0
        %1250 = vmatprep.subr.bf16.mxu0 0
        %1251 = vmatpush1.bf16.msra.mxu0 0
        %1252 = vmatprep.subr.bf16.mxu0 0
        %1253 = vmatpush1.bf16.msra.mxu0 0
        %1254 = vmatprep.subr.bf16.mxu0 0
        %1255 = vmatpush1.bf16.msra.mxu0 0
        %1256 = vmatprep.subr.bf16.mxu0 0
        %1257 = vmatpush1.bf16.msra.mxu0 0
        %1258 = vmatprep.subr.bf16.mxu0 0
        %1259 = vmatpush1.bf16.msra.mxu0 0
        %1260 = vmatprep.subr.bf16.mxu0 0
        %1261 = vmatpush1.bf16.msra.mxu0 0
        %1262 = vmatprep.subr.bf16.mxu0 0
        %1263 = vmatpush1.bf16.msra.mxu0 0
        %1264 = vmatprep.subr.bf16.mxu0 0
        %1265 = vmatpush1.bf16.msra.mxu0 0
        %1266 = vmatprep.subr.bf16.mxu0 0
        %1267 = vmatpush1.bf16.msra.mxu0 0
        %1268 = vmatprep.subr.bf16.mxu0 0
        %1269 = vmatpush1.bf16.msra.mxu0 0
        %1270 = vmatprep.subr.bf16.mxu0 0
        %1271 = vmatpush1.bf16.msra.mxu0 0
        %1272 = vmatprep.subr.bf16.mxu0 0
        %1273 = vmatpush1.bf16.msra.mxu0 0
        %1274 = vmatprep.subr.bf16.mxu0 0
        %1275 = vmatpush1.bf16.msra.mxu0 0
        %1276 = vmatprep.mubr.bf16.mxu0 0
        %1277 = vmatmul.mubr.bf16.gmra.mrb[0].mxu0 %v1242
        %v1278 = vpop.f32.mrb[0].mxu0
        %v1279 = vadd.f32 %v1227, %v1278
        %v1280 = vpop.f32.mrb[0].mxu0
        %v1281 = vpop.f32.mrb[0].mxu0
        %v1282 = vpop.f32.mrb[0].mxu0
        %1283 = vdwg.mxu0
        %v1284 = vmul.f32 %v1279, 1.702
        %v1285 = vxor.u32 %v1284, 2147483648
        %v1286 = vmul.f32 %v1285, 1.442695
        %v1287 = vpow.pop %v1286
        %v1288 = vadd.f32 %v1287, 1.0
        %v1289 = vrcp.pop %v1288
        %v1290 = vmul.f32 1.0, %v1289
        %v1291 = vmul.f32 %v1279, %v1290
        %v1292 = vpack.c.bf16 %v1291, %v1291
        %v1293 = vld [vmem:[%s12] sm:$0xf]
        %v1294 = vld [vmem:[%s12 + $0x4] sm:$0xf]
        %v1295 = vld [vmem:[%s12 + $0x8] sm:$0xf]
        %v1296 = vld [vmem:[%s12 + $0xc] sm:$0xf]
        %v1297 = vld [vmem:[%s12 + $0x10] sm:$0xf]
        %v1298 = vld [vmem:[%s12 + $0x14] sm:$0xf]
        %v1299 = vld [vmem:[%s12 + $0x18] sm:$0xf]
        %v1300 = vld [vmem:[%s12 + $0x1c] sm:$0xf]
        %v1301 = vld [vmem:[#allocation14] sm:$0x1]
        %v1303 = vlaneseq
        %v1304 = vshrl.u32 %v1303, 7
        %v1305 = vsub.s32 0, %v1304
        %v1306 = vrot.slane %v1301, %v1305
        %v1316 = vunpack.c.l.b16 %v1293
        %v1317 = vunpack.c.l.b16 %v1294
        %v1318 = vunpack.c.l.b16 %v1295
        %v1319 = vunpack.c.l.b16 %v1296
        %v1320 = vunpack.c.l.b16 %v1297
        %v1321 = vunpack.c.l.b16 %v1298
        %v1322 = vunpack.c.l.b16 %v1299
        %v1323 = vunpack.c.l.b16 %v1300
        %v1324 = vpack.c.b16 %v1317, %v1316
        %v1325 = vpack.c.b16 %v1319, %v1318
        %v1326 = vpack.c.b16 %v1321, %v1320
        %v1327 = vpack.c.b16 %v1323, %v1322
        %vm1332 = vcmask 523264
        %v1334 = vsel %vm1332, %v1292, 0
        %1336 = vmatprep.subr.bf16.mxu0 0
        %1337 = vmatpush1.bf16.msra.mxu0 %v1324
        %1338 = vmatprep.subr.bf16.mxu0 0
        %1339 = vmatpush1.bf16.msra.mxu0 %v1325
        %1340 = vmatprep.subr.bf16.mxu0 0
        %1341 = vmatpush1.bf16.msra.mxu0 %v1326
        %1342 = vmatprep.subr.bf16.mxu0 0
        %1343 = vmatpush1.bf16.msra.mxu0 %v1327
        %1344 = vmatprep.subr.bf16.mxu0 0
        %1345 = vmatpush1.bf16.msra.mxu0 0
        %1346 = vmatprep.subr.bf16.mxu0 0
        %1347 = vmatpush1.bf16.msra.mxu0 0
        %1348 = vmatprep.subr.bf16.mxu0 0
        %1349 = vmatpush1.bf16.msra.mxu0 0
        %1350 = vmatprep.subr.bf16.mxu0 0
        %1351 = vmatpush1.bf16.msra.mxu0 0
        %1352 = vmatprep.subr.bf16.mxu0 0
        %1353 = vmatpush1.bf16.msra.mxu0 0
        %1354 = vmatprep.subr.bf16.mxu0 0
        %1355 = vmatpush1.bf16.msra.mxu0 0
        %1356 = vmatprep.subr.bf16.mxu0 0
        %1357 = vmatpush1.bf16.msra.mxu0 0
        %1358 = vmatprep.subr.bf16.mxu0 0
        %1359 = vmatpush1.bf16.msra.mxu0 0
        %1360 = vmatprep.subr.bf16.mxu0 0
        %1361 = vmatpush1.bf16.msra.mxu0 0
        %1362 = vmatprep.subr.bf16.mxu0 0
        %1363 = vmatpush1.bf16.msra.mxu0 0
        %1364 = vmatprep.subr.bf16.mxu0 0
        %1365 = vmatpush1.bf16.msra.mxu0 0
        %1366 = vmatprep.subr.bf16.mxu0 0
        %1367 = vmatpush1.bf16.msra.mxu0 0
        %1368 = vmatprep.mubr.bf16.mxu0 0
        %1369 = vmatmul.mubr.bf16.gmra.mrb[0].mxu0 %v1334
        %v1370 = vpop.f32.mrb[0].mxu0
        %v1371 = vadd.f32 %v1306, %v1370
        %v1372 = vpop.f32.mrb[0].mxu0
        %v1373 = vpop.f32.mrb[0].mxu0
        %v1374 = vpop.f32.mrb[0].mxu0
        %1375 = vdwg.mxu0
        %v1376 = vadd.f32 %v1187, %v1371
        %1377 = vst.msk [vmem:[%s546] sm:$0xff] %vm555, %v1376
        %s1378 = sand.u32 %s339, 1
        %s1379 = scalar_lea.sflag [#allocation5], %s1378
        %s1380 = sand.u32 %s339, 1
        %s1381 = smul.addr %s1380, 8
        %s1382 = scalar_lea.vmem [#allocation15], %s1381
        // Predicated region
        $region105: #{clip_encoder_layer.1} parent=75 // pred_check
          %p1383 = pneg %p349
        $region106: #{clip_encoder_layer.1} parent=75 // pred_check_branch
          %1385 = sbr.rel (%p1383) target = $region108
        $region107: #{clip_encoder_layer.1} parent=75 // pred_region
          %s1387 = ssub.s32 128, 128
          %1388 = vsyncadd %s1379, %s1387
          %s1389 = smul.addr %s32, 128
          %s1390 = scalar_lea.hbm %s14, %s1389
          %s1392 = sshll.u32 %s1382, 4
          %s1393 = int_to_ptr.vmem [resolvable:$true] %s1392
          %1395 = dma.vmem_to_hbm [thread:$0]  %s1393, 128, %s1390, %s1379
        $region108: #{clip_encoder_layer.1} parent=75 // pred_fallthru
          _
      $region76: #{clip_encoder_layer.1} parent=5 // pred_fallthru
        _
      %p1396 = scmp.le.s32.totalorder 2, %s27
      // Predicated region
      $region109: #{clip_encoder_layer.1} parent=5 // pred_check
        %p1397 = pneg %p1396
      $region110: #{clip_encoder_layer.1} parent=5 // pred_check_branch
        %1399 = sbr.rel (%p1397) target = $region112
      $region111: #{clip_encoder_layer.1} parent=5 // pred_region
        %s1400 = ssub.s32 %s27, 2
        // Predicated region
        $region113: #{clip_encoder_layer.1} parent=111 // pred_check
          %p1401 = pneg %p355
        $region114: #{clip_encoder_layer.1} parent=111 // pred_check_branch
          %1403 = sbr.rel (%p1401) target = $region116
        $region115: #{clip_encoder_layer.1} parent=111 // pred_region
          %s1404 = sand.u32 %s340, 1
          %s1405 = scalar_lea.sflag [#allocation5], %s1404
          %s1406 = sand.u32 %s340, 1
          %s1407 = smul.addr %s1406, 8
          %s1408 = scalar_lea.vmem [#allocation15], %s1407
          %1409 = dma.done %s1405, 128
        $region116: #{clip_encoder_layer.1} parent=111 // pred_fallthru
          _
      $region112: #{clip_encoder_layer.1} parent=5 // pred_fallthru
        _
    $region6: #{clip_encoder_layer.1} parent=1 // loop_footer
      %s31 = sadd.s32 1, %s27
    $region7: #{clip_encoder_layer.1} parent=1 // loop_footer_branch
      %26 = sbr.rel target = $region3
    $region8: #{clip_encoder_layer.1} parent=1 // loop_exit
      _
    %1410 = vsyncpa [#allocation4], 1
    %s1411 = scalar_lea.sflag [#allocation4], 1
    %1412 = vsyncpa %s1411, 1
    %1413 = vsyncpa [#allocation7], 1
    %1414 = vsyncpa [#allocation10], 1
    %1415 = vsyncpa [#allocation13], 1
    %1416 = vsyncpa [#allocation5], 1
    %s1417 = scalar_lea.sflag [#allocation5], 1
    %1418 = vsyncpa %s1417, 1

// kernel: clip_encoder_layer.1
$region0: #{clip_encoder_layer.1}
  #allocation0 [shape = 'u32[]', space=smem, size = 0x4, offset = 0x4, fixed_abs, tag = 'smem constant byte address 0x4 - core index']
  #allocation1 [shape = 'u32[144,128]{1,0:T(1,128)}', space=vmem, size = 0x12000, scoped, tag = 'internal scratch']
  #allocation2 [shape = 'f32[8,32]{1,0:T(8,128)}', space=vmem, size = 0x1000, scoped, tag = 'scratch operand']
  %s0 = inlined_call_operand.vmem [shape: f32[2,8,32], index: 0, kind: input, shape index: {}]
  %s1 = inlined_call_operand.hbm [shape: f32[1,8,8], index: 1, kind: input, shape index: {}]
  %s2 = inlined_call_operand.vmem [shape: f32[1,32], index: 2, kind: input, shape index: {}]
  %s3 = inlined_call_operand.vmem [shape: f32[1,32], index: 3, kind: input, shape index: {}]
  %s4 = inlined_call_operand.vmem [shape: bf16[1,32,96], index: 4, kind: input, shape index: {}]
  %s5 = inlined_call_operand.hbm [shape: f32[1,1,96], index: 5, kind: input, shape index: {}]
  %s6 = inlined_call_operand.vmem [shape: bf16[1,32,32], index: 6, kind: input, shape index: {}]
  %s7 = inlined_call_operand.hbm [shape: f32[1,32], index: 7, kind: input, shape index: {}]
  %s8 = inlined_call_operand.hbm [shape: f32[1,32], index: 8, kind: input, shape index: {}]
  %s9 = inlined_call_operand.hbm [shape: f32[1,32], index: 9, kind: input, shape index: {}]
  %s10 = inlined_call_operand.vmem [shape: bf16[32,64], index: 10, kind: input, shape index: {}]
  %s11 = inlined_call_operand.hbm [shape: f32[1,64], index: 11, kind: input, shape index: {}]
  %s12 = inlined_call_operand.vmem [shape: bf16[64,32], index: 12, kind: input, shape index: {}]
  %s13 = inlined_call_operand.hbm [shape: f32[1,32], index: 13, kind: input, shape index: {}]
  %s14 = inlined_call_operand.hbm [shape: f32[2,8,32], index: 14, kind: output, shape index: {}]
  %s15 = sld [smem:[#allocation0]]
  $region117: #{clip_encoder_layer.1} parent=0
    _
  %s17 = ssub.s32 1, %s15
  %s18 = scalar_select 0, %s17, %s15
  $region1: #{clip_encoder_layer.1} parent=0
    #allocation3 [shape = 'u8[4096]{0}', space=vmem, size = 0x1000, scoped, tag = 'input window, operand 1, single buffered']
    #allocation4 [shape = 's32[2]{0}', space=sflag, size = 0x8, scoped, tag = 'scoped memory for clip_encoder_layer.1']
    #allocation5 [shape = 's32[2]{0}', space=sflag, size = 0x8, scoped, tag = 'scoped memory for clip_encoder_layer.1']
    #allocation6 [shape = 'u8[512]{0}', space=vmem, size = 0x400, scoped, tag = 'input window, operand 5, single buffered']
    #allocation7 [shape = 's32[1]{0}', space=sflag, size = 0x4, scoped, tag = 'scoped memory for clip_encoder_layer.1']
    #allocation8 [shape = 'u8[512]{0}', space=vmem, size = 0x400, scoped, tag = 'input window, operand 7, single buffered']
    #allocation9 [shape = 'u8[512]{0}', space=vmem, size = 0x400, scoped, tag = 'input window, operand 8, single buffered']
    #allocation10 [shape = 's32[1]{0}', space=sflag, size = 0x4, scoped, tag = 'scoped memory for clip_encoder_layer.1']
    #allocation11 [shape = 'u8[512]{0}', space=vmem, size = 0x400, scoped, tag = 'input window, operand 9, single buffered']
    #allocation12 [shape = 'u8[512]{0}', space=vmem, size = 0x400, scoped, tag = 'input window, operand 11, single buffered']
    #allocation13 [shape = 's32[1]{0}', space=sflag, size = 0x4, scoped, tag = 'scoped memory for clip_encoder_layer.1']
    #allocation14 [shape = 'u8[512]{0}', space=vmem, size = 0x400, scoped, tag = 'input window, operand 13, single buffered']
    #allocation15 [shape = 'u8[8192]{0}', space=vmem, size = 0x2000, scoped, tag = 'output window, operand 0']
    %19 = vsyncpa [#allocation4], 0
    %20 = vsyncpa [#allocation7], 0
    %21 = vsyncpa [#allocation10], 0
    %22 = vsyncpa [#allocation13], 0
    %23 = vsyncpa [#allocation5], 0
    %s24 = scalar_lea.sflag [#allocation5], 1
    %25 = vsyncpa %s24, 0
    loop: start=0, step=1, limit=4
    $region2: #{clip_encoder_layer.1} parent=1 // loop_pre_header
      _
    $region3: #{clip_encoder_layer.1} parent=1 // loop_header
      %s27 = sphi 0, %s31
      %p28 = scmp.ge.s32.totalorder %s27, 4
      %s37 = sphi 0, %s39
      %s40 = sphi 0, %s37
      %s41 = sphi 0, %s40
      %s57 = sphi 0, %s41
      %s61 = sphi 0, %s61
      %s63 = sphi 0, %s61
      %s64 = sphi 0, %s63
      %s78 = sphi 0, %s64
      %s82 = sphi 0, %s82
      %s84 = sphi 0, %s82
      %s85 = sphi 0, %s84
      %s99 = sphi 0, %s85
      %s103 = sphi 0, %s103
      %s105 = sphi 0, %s103
      %s106 = sphi 0, %s105
      %s120 = sphi 0, %s106
      %s124 = sphi 0, %s124
      %s126 = sphi 0, %s124
      %s127 = sphi 0, %s126
      %s141 = sphi 0, %s127
      %s145 = sphi 0, %s145
      %s147 = sphi 0, %s145
      %s148 = sphi 0, %s147
      %s162 = sphi 0, %s148
      %s166 = sphi 0, %s166
      %s168 = sphi 0, %s166
      %s169 = sphi 0, %s168
      %s183 = sphi 0, %s169
      %s187 = sphi 0, %s187
      %s189 = sphi 0, %s187
      %s190 = sphi 0, %s189
      %s204 = sphi 0, %s190
      %s208 = sphi 0, %s208
      %s210 = sphi 0, %s208
      %s211 = sphi 0, %s210
      %s225 = sphi 0, %s211
      %s229 = sphi 0, %s229
      %s231 = sphi 0, %s229
      %s232 = sphi 0, %s231
      %s246 = sphi 0, %s232
      %s250 = sphi 0, %s250
      %s252 = sphi 0, %s250
      %s253 = sphi 0, %s252
      %s267 = sphi 0, %s253
      %s271 = sphi 0, %s271
      %s273 = sphi 0, %s271
      %s274 = sphi 0, %s273
      %s288 = sphi 0, %s274
      %s292 = sphi 0, %s292
      %s294 = sphi 0, %s292
      %s295 = sphi 0, %s294
      %s309 = sphi 0, %s295
      %s313 = sphi 0, %s313
      %s315 = sphi 0, %s313
      %s316 = sphi 0, %s315
      %s330 = sphi 0, %s316
      %s336 = sphi 0, %s338
      %s339 = sphi 0, %s336
      %s340 = sphi 0, %s339
      %s356 = sphi 0, %s340
    $region4: #{clip_encoder_layer.1} parent=1 // loop_header_branch
      %30 = sbr.rel (%p28) target = $region8
    $region5: #{clip_encoder_layer.1} parent=1 // loop_body
      %s32 = ssub.s32 %s27, 1
      %s33 = ssub.s32 %s27, 2
      %s34 = sadd.s32 %s27, 1
      %s35 = ssub.s32 %s27, %s34
      %p36 = scmp.eq.s32.totalorder %s35, 0
      %s38 = sadd.s32 %s37, 1
      %s39 = scalar_select %p36, %s37, %s38
      %p42 = pneg %p36
      %p43 = scmp.eq.s32.totalorder %s27, 1
      %p44 = por %p42, %p43
      %p45 = scmp.ne.s32.totalorder %s37, %s40
      %p46 = scmp.eq.s32.totalorder %s27, 0
      %p47 = por %p45, %p46
      %p48 = scmp.ne.s32.totalorder %s37, %s40
      %p49 = scmp.eq.s32.totalorder %s32, 1
      %p50 = por %p48, %p49
      %p51 = scmp.ne.s32.totalorder %s40, %s41
      %p52 = scmp.eq.s32.totalorder %s32, 0
      %p53 = por %p51, %p52
      %p54 = scmp.ne.s32.totalorder %s40, %s41
      %p55 = scmp.eq.s32.totalorder %s33, 1
      %p56 = por %p54, %p55
      %p58 = scmp.ne.s32.totalorder %s41, %s57
      %p59 = scmp.eq.s32.totalorder %s33, 0
      %p60 = por %p58, %p59
      %s62 = sadd.s32 %s61, 1
      %p65 = scmp.eq.s32.totalorder %s27, 1
      %p66 = scmp.ne.s32.totalorder %s61, %s63
      %p67 = scmp.eq.s32.totalorder %s27, 0
      %p68 = por %p66, %p67
      %p69 = scmp.ne.s32.totalorder %s61, %s63
      %p70 = scmp.eq.s32.totalorder %s32, 1
      %p71 = por %p69, %p70
      %p72 = scmp.ne.s32.totalorder %s63, %s64
      %p73 = scmp.eq.s32.totalorder %s32, 0
      %p74 = por %p72, %p73
      %p75 = scmp.ne.s32.totalorder %s63, %s64
      %p76 = scmp.eq.s32.totalorder %s33, 1
      %p77 = por %p75, %p76
      %p79 = scmp.ne.s32.totalorder %s64, %s78
      %p80 = scmp.eq.s32.totalorder %s33, 0
      %p81 = por %p79, %p80
      %s83 = sadd.s32 %s82, 1
      %p86 = scmp.eq.s32.totalorder %s27, 1
      %p87 = scmp.ne.s32.totalorder %s82, %s84
      %p88 = scmp.eq.s32.totalorder %s27, 0
      %p89 = por %p87, %p88
      %p90 = scmp.ne.s32.totalorder %s82, %s84
      %p91 = scmp.eq.s32.totalorder %s32, 1
      %p92 = por %p90, %p91
      %p93 = scmp.ne.s32.totalorder %s84, %s85
      %p94 = scmp.eq.s32.totalorder %s32, 0
      %p95 = por %p93, %p94
      %p96 = scmp.ne.s32.totalorder %s84, %s85
      %p97 = scmp.eq.s32.totalorder %s33, 1
      %p98 = por %p96, %p97
      %p100 = scmp.ne.s32.totalorder %s85, %s99
      %p101 = scmp.eq.s32.totalorder %s33, 0
      %p102 = por %p100, %p101
      %s104 = sadd.s32 %s103, 1
      %p107 = scmp.eq.s32.totalorder %s27, 1
      %p108 = scmp.ne.s32.totalorder %s103, %s105
      %p109 = scmp.eq.s32.totalorder %s27, 0
      %p110 = por %p108, %p109
      %p111 = scmp.ne.s32.totalorder %s103, %s105
      %p112 = scmp.eq.s32.totalorder %s32, 1
      %p113 = por %p111, %p112
      %p114 = scmp.ne.s32.totalorder %s105, %s106
      %p115 = scmp.eq.s32.totalorder %s32, 0
      %p116 = por %p114, %p115
      %p117 = scmp.ne.s32.totalorder %s105, %s106
      %p118 = scmp.eq.s32.totalorder %s33, 1
      %p119 = por %p117, %p118
      %p121 = scmp.ne.s32.totalorder %s106, %s120
      %p122 = scmp.eq.s32.totalorder %s33, 0
      %p123 = por %p121, %p122
      %s125 = sadd.s32 %s124, 1
      %p128 = scmp.eq.s32.totalorder %s27, 1
      %p129 = scmp.ne.s32.totalorder %s124, %s126
      %p130 = scmp.eq.s32.totalorder %s27, 0
      %p131 = por %p129, %p130
      %p132 = scmp.ne.s32.totalorder %s124, %s126
      %p133 = scmp.eq.s32.totalorder %s32, 1
      %p134 = por %p132, %p133
      %p135 = scmp.ne.s32.totalorder %s126, %s127
      %p136 = scmp.eq.s32.totalorder %s32, 0
      %p137 = por %p135, %p136
      %p138 = scmp.ne.s32.totalorder %s126, %s127
      %p139 = scmp.eq.s32.totalorder %s33, 1
      %p140 = por %p138, %p139
      %p142 = scmp.ne.s32.totalorder %s127, %s141
      %p143 = scmp.eq.s32.totalorder %s33, 0
      %p144 = por %p142, %p143
      %s146 = sadd.s32 %s145, 1
      %p149 = scmp.eq.s32.totalorder %s27, 1
      %p150 = scmp.ne.s32.totalorder %s145, %s147
      %p151 = scmp.eq.s32.totalorder %s27, 0
      %p152 = por %p150, %p151
      %p153 = scmp.ne.s32.totalorder %s145, %s147
      %p154 = scmp.eq.s32.totalorder %s32, 1
      %p155 = por %p153, %p154
      %p156 = scmp.ne.s32.totalorder %s147, %s148
      %p157 = scmp.eq.s32.totalorder %s32, 0
      %p158 = por %p156, %p157
      %p159 = scmp.ne.s32.totalorder %s147, %s148
      %p160 = scmp.eq.s32.totalorder %s33, 1
      %p161 = por %p159, %p160
      %p163 = scmp.ne.s32.totalorder %s148, %s162
      %p164 = scmp.eq.s32.totalorder %s33, 0
      %p165 = por %p163, %p164
      %s167 = sadd.s32 %s166, 1
      %p170 = scmp.eq.s32.totalorder %s27, 1
      %p171 = scmp.ne.s32.totalorder %s166, %s168
      %p172 = scmp.eq.s32.totalorder %s27, 0
      %p173 = por %p171, %p172
      %p174 = scmp.ne.s32.totalorder %s166, %s168
      %p175 = scmp.eq.s32.totalorder %s32, 1
      %p176 = por %p174, %p175
      %p177 = scmp.ne.s32.totalorder %s168, %s169
      %p178 = scmp.eq.s32.totalorder %s32, 0
      %p179 = por %p177, %p178
      %p180 = scmp.ne.s32.totalorder %s168, %s169
      %p181 = scmp.eq.s32.totalorder %s33, 1
      %p182 = por %p180, %p181
      %p184 = scmp.ne.s32.totalorder %s169, %s183
      %p185 = scmp.eq.s32.totalorder %s33, 0
      %p186 = por %p184, %p185
      %s188 = sadd.s32 %s187, 1
      %p191 = scmp.eq.s32.totalorder %s27, 1
      %p192 = scmp.ne.s32.totalorder %s187, %s189
      %p193 = scmp.eq.s32.totalorder %s27, 0
      %p194 = por %p192, %p193
      %p195 = scmp.ne.s32.totalorder %s187, %s189
      %p196 = scmp.eq.s32.totalorder %s32, 1
      %p197 = por %p195, %p196
      %p198 = scmp.ne.s32.totalorder %s189, %s190
      %p199 = scmp.eq.s32.totalorder %s32, 0
      %p200 = por %p198, %p199
      %p201 = scmp.ne.s32.totalorder %s189, %s190
      %p202 = scmp.eq.s32.totalorder %s33, 1
      %p203 = por %p201, %p202
      %p205 = scmp.ne.s32.totalorder %s190, %s204
      %p206 = scmp.eq.s32.totalorder %s33, 0
      %p207 = por %p205, %p206
      %s209 = sadd.s32 %s208, 1
      %p212 = scmp.eq.s32.totalorder %s27, 1
      %p213 = scmp.ne.s32.totalorder %s208, %s210
      %p214 = scmp.eq.s32.totalorder %s27, 0
      %p215 = por %p213, %p214
      %p216 = scmp.ne.s32.totalorder %s208, %s210
      %p217 = scmp.eq.s32.totalorder %s32, 1
      %p218 = por %p216, %p217
      %p219 = scmp.ne.s32.totalorder %s210, %s211
      %p220 = scmp.eq.s32.totalorder %s32, 0
      %p221 = por %p219, %p220
      %p222 = scmp.ne.s32.totalorder %s210, %s211
      %p223 = scmp.eq.s32.totalorder %s33, 1
      %p224 = por %p222, %p223
      %p226 = scmp.ne.s32.totalorder %s211, %s225
      %p227 = scmp.eq.s32.totalorder %s33, 0
      %p228 = por %p226, %p227
      %s230 = sadd.s32 %s229, 1
      %p233 = scmp.eq.s32.totalorder %s27, 1
      %p234 = scmp.ne.s32.totalorder %s229, %s231
      %p235 = scmp.eq.s32.totalorder %s27, 0
      %p236 = por %p234, %p235
      %p237 = scmp.ne.s32.totalorder %s229, %s231
      %p238 = scmp.eq.s32.totalorder %s32, 1
      %p239 = por %p237, %p238
      %p240 = scmp.ne.s32.totalorder %s231, %s232
      %p241 = scmp.eq.s32.totalorder %s32, 0
      %p242 = por %p240, %p241
      %p243 = scmp.ne.s32.totalorder %s231, %s232
      %p244 = scmp.eq.s32.totalorder %s33, 1
      %p245 = por %p243, %p244
      %p247 = scmp.ne.s32.totalorder %s232, %s246
      %p248 = scmp.eq.s32.totalorder %s33, 0
      %p249 = por %p247, %p248
      %s251 = sadd.s32 %s250, 1
      %p254 = scmp.eq.s32.totalorder %s27, 1
      %p255 = scmp.ne.s32.totalorder %s250, %s252
      %p256 = scmp.eq.s32.totalorder %s27, 0
      %p257 = por %p255, %p256
      %p258 = scmp.ne.s32.totalorder %s250, %s252
      %p259 = scmp.eq.s32.totalorder %s32, 1
      %p260 = por %p258, %p259
      %p261 = scmp.ne.s32.totalorder %s252, %s253
      %p262 = scmp.eq.s32.totalorder %s32, 0
      %p263 = por %p261, %p262
      %p264 = scmp.ne.s32.totalorder %s252, %s253
      %p265 = scmp.eq.s32.totalorder %s33, 1
      %p266 = por %p264, %p265
      %p268 = scmp.ne.s32.totalorder %s253, %s267
      %p269 = scmp.eq.s32.totalorder %s33, 0
      %p270 = por %p268, %p269
      %s272 = sadd.s32 %s271, 1
      %p275 = scmp.eq.s32.totalorder %s27, 1
      %p276 = scmp.ne.s32.totalorder %s271, %s273
      %p277 = scmp.eq.s32.totalorder %s27, 0
      %p278 = por %p276, %p277
      %p279 = scmp.ne.s32.totalorder %s271, %s273
      %p280 = scmp.eq.s32.totalorder %s32, 1
      %p281 = por %p279, %p280
      %p282 = scmp.ne.s32.totalorder %s273, %s274
      %p283 = scmp.eq.s32.totalorder %s32, 0
      %p284 = por %p282, %p283
      %p285 = scmp.ne.s32.totalorder %s273, %s274
      %p286 = scmp.eq.s32.totalorder %s33, 1
      %p287 = por %p285, %p286
      %p289 = scmp.ne.s32.totalorder %s274, %s288
      %p290 = scmp.eq.s32.totalorder %s33, 0
      %p291 = por %p289, %p290
      %s293 = sadd.s32 %s292, 1
      %p296 = scmp.eq.s32.totalorder %s27, 1
      %p297 = scmp.ne.s32.totalorder %s292, %s294
      %p298 = scmp.eq.s32.totalorder %s27, 0
      %p299 = por %p297, %p298
      %p300 = scmp.ne.s32.totalorder %s292, %s294
      %p301 = scmp.eq.s32.totalorder %s32, 1
      %p302 = por %p300, %p301
      %p303 = scmp.ne.s32.totalorder %s294, %s295
      %p304 = scmp.eq.s32.totalorder %s32, 0
      %p305 = por %p303, %p304
      %p306 = scmp.ne.s32.totalorder %s294, %s295
      %p307 = scmp.eq.s32.totalorder %s33, 1
      %p308 = por %p306, %p307
      %p310 = scmp.ne.s32.totalorder %s295, %s309
      %p311 = scmp.eq.s32.totalorder %s33, 0
      %p312 = por %p310, %p311
      %s314 = sadd.s32 %s313, 1
      %p317 = scmp.eq.s32.totalorder %s27, 1
      %p318 = scmp.ne.s32.totalorder %s313, %s315
      %p319 = scmp.eq.s32.totalorder %s27, 0
      %p320 = por %p318, %p319
      %p321 = scmp.ne.s32.totalorder %s313, %s315
      %p322 = scmp.eq.s32.totalorder %s32, 1
      %p323 = por %p321, %p322
      %p324 = scmp.ne.s32.totalorder %s315, %s316
      %p325 = scmp.eq.s32.totalorder %s32, 0
      %p326 = por %p324, %p325
      %p327 = scmp.ne.s32.totalorder %s315, %s316
      %p328 = scmp.eq.s32.totalorder %s33, 1
      %p329 = por %p327, %p328
      %p331 = scmp.ne.s32.totalorder %s316, %s330
      %p332 = scmp.eq.s32.totalorder %s33, 0
      %p333 = por %p331, %p332
      %s334 = ssub.s32 %s27, %s34
      %p335 = scmp.eq.s32.totalorder %s334, 0
      %s337 = sadd.s32 %s336, 1
      %s338 = scalar_select %p335, %s336, %s337
      %p341 = pneg %p335
      %p342 = scmp.eq.s32.totalorder %s27, 1
      %p343 = por %p341, %p342
      %p344 = scmp.ne.s32.totalorder %s336, %s339
      %p345 = scmp.eq.s32.totalorder %s27, 0
      %p346 = por %p344, %p345
      %p347 = scmp.ne.s32.totalorder %s336, %s339
      %p348 = scmp.eq.s32.totalorder %s32, 1
      %p349 = por %p347, %p348
      %p350 = scmp.ne.s32.totalorder %s339, %s340
      %p351 = scmp.eq.s32.totalorder %s32, 0
      %p352 = por %p350, %p351
      %p353 = scmp.ne.s32.totalorder %s339, %s340
      %p354 = scmp.eq.s32.totalorder %s33, 1
      %p355 = por %p353, %p354
      %p357 = scmp.ne.s32.totalorder %s340, %s356
      %p358 = scmp.eq.s32.totalorder %s33, 0
      %p359 = por %p357, %p358
      %p360 = scmp.le.s32.totalorder 1, %s27
      %p361 = scmp.lt.s32.totalorder %s27, 3
      %p362 = pnand %p360, %p361
      %p363 = pneg %p362
      // Predicated region
      $region9: #{clip_encoder_layer.1} parent=5 // pred_check
        _
      $region10: #{clip_encoder_layer.1} parent=5 // pred_check_branch
        %365 = sbr.rel (%p362) target = $region12
      $region11: #{clip_encoder_layer.1} parent=5 // pred_region
        %s366 = ssub.s32 %s27, 1
        // Predicated region
        $region13: #{clip_encoder_layer.1} parent=11 // pred_check
          %p367 = pneg %p74
        $region14: #{clip_encoder_layer.1} parent=11 // pred_check_branch
          %369 = sbr.rel (%p367) target = $region16
        $region15: #{clip_encoder_layer.1} parent=11 // pred_region
          %s371 = ssub.s32 128, 128
          %372 = vsyncadd [#allocation4], %s371
          %s374 = sshll.u32 [#allocation3], 4
          %s375 = int_to_ptr.vmem [resolvable:$true] %s374
          %377 = dma.hbm_to_vmem [thread:$0]  %s1, 128, %s375, [#allocation4]
        $region16: #{clip_encoder_layer.1} parent=11 // pred_fallthru
          _
        // Predicated region
        $region17: #{clip_encoder_layer.1} parent=11 // pred_check
          %p378 = pneg %p95
        $region18: #{clip_encoder_layer.1} parent=11 // pred_check_branch
          %380 = sbr.rel (%p378) target = $region20
        $region19: #{clip_encoder_layer.1} parent=11 // pred_region
          _
        $region20: #{clip_encoder_layer.1} parent=11 // pred_fallthru
          _
        // Predicated region
        $region21: #{clip_encoder_layer.1} parent=11 // pred_check
          %p381 = pneg %p116
        $region22: #{clip_encoder_layer.1} parent=11 // pred_check_branch
          %383 = sbr.rel (%p381) target = $region24
        $region23: #{clip_encoder_layer.1} parent=11 // pred_region
          _
        $region24: #{clip_encoder_layer.1} parent=11 // pred_fallthru
          _
        // Predicated region
        $region25: #{clip_encoder_layer.1} parent=11 // pred_check
          %p384 = pneg %p137
        $region26: #{clip_encoder_layer.1} parent=11 // pred_check_branch
          %386 = sbr.rel (%p384) target = $region28
        $region27: #{clip_encoder_layer.1} parent=11 // pred_region
          _
        $region28: #{clip_encoder_layer.1} parent=11 // pred_fallthru
          _
        // Predicated region
        $region29: #{clip_encoder_layer.1} parent=11 // pred_check
          %p387 = pneg %p158
        $region30: #{clip_encoder_layer.1} parent=11 // pred_check_branch
          %389 = sbr.rel (%p387) target = $region32
        $region31: #{clip_encoder_layer.1} parent=11 // pred_region
          %s391 = ssub.s32 16, 16
          %392 = vsyncadd [#allocation7], %s391
          %s394 = sshll.u32 [#allocation6], 4
          %s395 = int_to_ptr.vmem [resolvable:$true] %s394
          %397 = dma.hbm_to_vmem [thread:$0]  %s5, 16, %s395, [#allocation7]
        $region32: #{clip_encoder_layer.1} parent=11 // pred_fallthru
          _
        // Predicated region
        $region33: #{clip_encoder_layer.1} parent=11 // pred_check
          %p398 = pneg %p179
        $region34: #{clip_encoder_layer.1} parent=11 // pred_check_branch
          %400 = sbr.rel (%p398) target = $region36
        $region35: #{clip_encoder_layer.1} parent=11 // pred_region
          _
        $region36: #{clip_encoder_layer.1} parent=11 // pred_fallthru
          _
        // Predicated region
        $region37: #{clip_encoder_layer.1} parent=11 // pred_check
          %p401 = pneg %p200
        $region38: #{clip_encoder_layer.1} parent=11 // pred_check_branch
          %403 = sbr.rel (%p401) target = $region40
        $region39: #{clip_encoder_layer.1} parent=11 // pred_region
          %s405 = ssub.s32 16, 16
          %406 = vsyncadd [#allocation7], %s405
          %s408 = sshll.u32 [#allocation8], 4
          %s409 = int_to_ptr.vmem [resolvable:$true] %s408
          %411 = dma.hbm_to_vmem [thread:$0]  %s7, 16, %s409, [#allocation7]
        $region40: #{clip_encoder_layer.1} parent=11 // pred_fallthru
          _
        // Predicated region
        $region41: #{clip_encoder_layer.1} parent=11 // pred_check
          %p412 = pneg %p221
        $region42: #{clip_encoder_layer.1} parent=11 // pred_check_branch
          %414 = sbr.rel (%p412) target = $region44
        $region43: #{clip_encoder_layer.1} parent=11 // pred_region
          %s416 = ssub.s32 16, 16
          %417 = vsyncadd [#allocation10], %s416
          %s419 = sshll.u32 [#allocation9], 4
          %s420 = int_to_ptr.vmem [resolvable:$true] %s419
          %422 = dma.hbm_to_vmem [thread:$0]  %s8, 16, %s420, [#allocation10]
        $region44: #{clip_encoder_layer.1} parent=11 // pred_fallthru
          _
        // Predicated region
        $region45: #{clip_encoder_layer.1} parent=11 // pred_check
          %p423 = pneg %p242
        $region46: #{clip_encoder_layer.1} parent=11 // pred_check_branch
          %425 = sbr.rel (%p423) target = $region48
        $region47: #{clip_encoder_layer.1} parent=11 // pred_region
          %s427 = ssub.s32 16, 16
          %428 = vsyncadd [#allocation10], %s427
          %s430 = sshll.u32 [#allocation11], 4
          %s431 = int_to_ptr.vmem [resolvable:$true] %s430
          %433 = dma.hbm_to_vmem [thread:$0]  %s9, 16, %s431, [#allocation10]
        $region48: #{clip_encoder_layer.1} parent=11 // pred_fallthru
          _
        // Predicated region
        $region49: #{clip_encoder_layer.1} parent=11 // pred_check
          %p434 = pneg %p263
        $region50: #{clip_encoder_layer.1} parent=11 // pred_check_branch
          %436 = sbr.rel (%p434) target = $region52
        $region51: #{clip_encoder_layer.1} parent=11 // pred_region
          _
        $region52: #{clip_encoder_layer.1} parent=11 // pred_fallthru
          _
        // Predicated region
        $region53: #{clip_encoder_layer.1} parent=11 // pred_check
          %p437 = pneg %p284
        $region54: #{clip_encoder_layer.1} parent=11 // pred_check_branch
          %439 = sbr.rel (%p437) target = $region56
        $region55: #{clip_encoder_layer.1} parent=11 // pred_region
          %s441 = ssub.s32 16, 16
          %442 = vsyncadd [#allocation13], %s441
          %s444 = sshll.u32 [#allocation12], 4
          %s445 = int_to_ptr.vmem [resolvable:$true] %s444
          %447 = dma.hbm_to_vmem [thread:$0]  %s11, 16, %s445, [#allocation13]
        $region56: #{clip_encoder_layer.1} parent=11 // pred_fallthru
          _
        // Predicated region
        $region57: #{clip_encoder_layer.1} parent=11 // pred_check
          %p448 = pneg %p305
        $region58: #{clip_encoder_layer.1} parent=11 // pred_check_branch
          %450 = sbr.rel (%p448) target = $region60
        $region59: #{clip_encoder_layer.1} parent=11 // pred_region
          _
        $region60: #{clip_encoder_layer.1} parent=11 // pred_fallthru
          _
        // Predicated region
        $region61: #{clip_encoder_layer.1} parent=11 // pred_check
          %p451 = pneg %p326
        $region62: #{clip_encoder_layer.1} parent=11 // pred_check_branch
          %453 = sbr.rel (%p451) target = $region64
        $region63: #{clip_encoder_layer.1} parent=11 // pred_region
          %s455 = ssub.s32 16, 16
          %456 = vsyncadd [#allocation13], %s455
          %s458 = sshll.u32 [#allocation14], 4
          %s459 = int_to_ptr.vmem [resolvable:$true] %s458
          %461 = dma.hbm_to_vmem [thread:$0]  %s13, 16, %s459, [#allocation13]
        $region64: #{clip_encoder_layer.1} parent=11 // pred_fallthru
          _
      $region12: #{clip_encoder_layer.1} parent=5 // pred_fallthru
        _
      %p462 = scmp.lt.s32.totalorder %s27, 2
      // Predicated region
      $region65: #{clip_encoder_layer.1} parent=5 // pred_check
        %p463 = pneg %p462
      $region66: #{clip_encoder_layer.1} parent=5 // pred_check_branch
        %465 = sbr.rel (%p463) target = $region68
      $region67: #{clip_encoder_layer.1} parent=5 // pred_region
        // Predicated region
        $region69: #{clip_encoder_layer.1} parent=67 // pred_check
          %p466 = pneg %p47
        $region70: #{clip_encoder_layer.1} parent=67 // pred_check_branch
          %468 = sbr.rel (%p466) target = $region72
        $region71: #{clip_encoder_layer.1} parent=67 // pred_region
          %p469 = scmp.lt.s32.totalorder %s27, 1
          %s470 = scalar_select %p469, %s27, 1
          %s471 = smul.addr %s470, 8
          %s472 = scalar_lea.vmem %s0, %s471
        $region72: #{clip_encoder_layer.1} parent=67 // pred_fallthru
          _
      $region68: #{clip_encoder_layer.1} parent=5 // pred_fallthru
        _
      %p473 = scmp.le.s32.totalorder 1, %s27
      %p474 = scmp.lt.s32.totalorder %s27, 3
      %p475 = pnand %p473, %p474
      %p476 = pneg %p475
      // Predicated region
      $region73: #{clip_encoder_layer.1} parent=5 // pred_check
        _
      $region74: #{clip_encoder_layer.1} parent=5 // pred_check_branch
        %478 = sbr.rel (%p475) target = $region76
      $region75: #{clip_encoder_layer.1} parent=5 // pred_region
        %s479 = ssub.s32 %s27, 1
        // Predicated region
        $region77: #{clip_encoder_layer.1} parent=75 // pred_check
          %p480 = pneg %p74
        $region78: #{clip_encoder_layer.1} parent=75 // pred_check_branch
          %482 = sbr.rel (%p480) target = $region80
        $region79: #{clip_encoder_layer.1} parent=75 // pred_region
          %483 = dma.done [#allocation4], 128
        $region80: #{clip_encoder_layer.1} parent=75 // pred_fallthru
          _
        // Predicated region
        $region81: #{clip_encoder_layer.1} parent=75 // pred_check
          %p484 = pneg %p158
        $region82: #{clip_encoder_layer.1} parent=75 // pred_check_branch
          %486 = sbr.rel (%p484) target = $region84
        $region83: #{clip_encoder_layer.1} parent=75 // pred_region
          %487 = dma.done [#allocation7], 16
        $region84: #{clip_encoder_layer.1} parent=75 // pred_fallthru
          _
        // Predicated region
        $region85: #{clip_encoder_layer.1} parent=75 // pred_check
          %p488 = pneg %p200
        $region86: #{clip_encoder_layer.1} parent=75 // pred_check_branch
          %490 = sbr.rel (%p488) target = $region88
        $region87: #{clip_encoder_layer.1} parent=75 // pred_region
          %491 = dma.done [#allocation7], 16
        $region88: #{clip_encoder_layer.1} parent=75 // pred_fallthru
          _
        // Predicated region
        $region89: #{clip_encoder_layer.1} parent=75 // pred_check
          %p492 = pneg %p221
        $region90: #{clip_encoder_layer.1} parent=75 // pred_check_branch
          %494 = sbr.rel (%p492) target = $region92
        $region91: #{clip_encoder_layer.1} parent=75 // pred_region
          %495 = dma.done [#allocation10], 16
        $region92: #{clip_encoder_layer.1} parent=75 // pred_fallthru
          _
        // Predicated region
        $region93: #{clip_encoder_layer.1} parent=75 // pred_check
          %p496 = pneg %p242
        $region94: #{clip_encoder_layer.1} parent=75 // pred_check_branch
          %498 = sbr.rel (%p496) target = $region96
        $region95: #{clip_encoder_layer.1} parent=75 // pred_region
          %499 = dma.done [#allocation10], 16
        $region96: #{clip_encoder_layer.1} parent=75 // pred_fallthru
          _
        // Predicated region
        $region97: #{clip_encoder_layer.1} parent=75 // pred_check
          %p500 = pneg %p284
        $region98: #{clip_encoder_layer.1} parent=75 // pred_check_branch
          %502 = sbr.rel (%p500) target = $region100
        $region99: #{clip_encoder_layer.1} parent=75 // pred_region
          %503 = dma.done [#allocation13], 16
        $region100: #{clip_encoder_layer.1} parent=75 // pred_fallthru
          _
        // Predicated region
        $region101: #{clip_encoder_layer.1} parent=75 // pred_check
          %p504 = pneg %p326
        $region102: #{clip_encoder_layer.1} parent=75 // pred_check_branch
          %506 = sbr.rel (%p504) target = $region104
        $region103: #{clip_encoder_layer.1} parent=75 // pred_region
          %507 = dma.done [#allocation13], 16
        $region104: #{clip_encoder_layer.1} parent=75 // pred_fallthru
          _
        %p508 = scmp.lt.s32.totalorder %s32, 1
        %s509 = scalar_select %p508, %s32, 1
        %s510 = smul.addr %s509, 8
        %s511 = scalar_lea.vmem %s0, %s510
        %p512 = pneg %p53
        %p513 = pneg %p50
        %p514 = pneg %p74
        %p515 = pneg %p71
        %p516 = pneg %p95
        %p517 = pneg %p92
        %p518 = pneg %p116
        %p519 = pneg %p113
        %p520 = pneg %p137
        %p521 = pneg %p134
        %p522 = pneg %p158
        %p523 = pneg %p155
        %p524 = pneg %p179
        %p525 = pneg %p176
        %p526 = pneg %p200
        %p527 = pneg %p197
        %p528 = pneg %p221
        %p529 = pneg %p218
        %p530 = pneg %p242
        %p531 = pneg %p239
        %p532 = pneg %p263
        %p533 = pneg %p260
        %p534 = pneg %p284
        %p535 = pneg %p281
        %p536 = pneg %p305
        %p537 = pneg %p302
        %p538 = pneg %p326
        %p539 = pneg %p323
        %p540 = pneg %p352
        %p541 = pneg %p349
        %s542 = sand.u32 %s339, 1
        %s543 = scalar_lea.sflag [#allocation5], %s542
        %s544 = sand.u32 %s339, 1
        %s545 = smul.addr %s544, 8
        %s546 = scalar_lea.vmem [#allocation15], %s545
        %p547 = scmp.lt.s32.totalorder %s32, 1
        %s548 = scalar_select %p547, %s32, 1
        %s549 = smul.addr %s548, 8
        %s550 = scalar_lea.vmem %s0, %s549
        %v552 = vld [vmem:[%s550] sm:$0xff]
        %v553 = vld [vmem:[%s2] sm:$0x1]
        %v554 = vld [vmem:[%s3] sm:$0x1]
        %vm555 = vcmask 261120
        %v556 = vsel %vm555, %v552, 0.0
        %557 = vadd.xlane.f32.xlu0 %v556
        %v558 = vpop.xlane.xlu0 %557
        %v559 = vrcp.pop 32.0
        %v560 = vmul.f32 %v558, %v559
        %v561 = vsub.f32 %v552, %v560
        %v562 = vmul.f32 %v561, %v561
        %v563 = vsel %vm555, %v562, 0.0
        %564 = vadd.xlane.f32.xlu0 %v563
        %v565 = vpop.xlane.xlu0 %564
        %v566 = vmul.f32 %v565, %v559
        %v567 = vadd.f32 %v566, 1e-05
        %v568 = vrsqrt.pop %v567
        %v569 = vmul.f32 %v561, %v568
        %v571 = vlaneseq
        %v572 = vshrl.u32 %v571, 7
        %v573 = vsub.s32 0, %v572
        %v574 = vrot.slane %v553, %v573
        %v576 = vmul.f32 %v569, %v574
        %v578 = vlaneseq
        %v579 = vshrl.u32 %v578, 7
        %v580 = vsub.s32 0, %v579
        %v581 = vrot.slane %v554, %v580
        %v583 = vadd.f32 %v576, %v581
        %v584 = vpack.c.bf16 %v583, %v583
        %v585 = vld [vmem:[#allocation3] sm:$0xff]
        %586 = vst.msk [vmem:[#allocation2] sm:$0xff] %vm555, 0.0
        %v587 = vld [vmem:[%s4] sm:$0xf]
        %v588 = vld [vmem:[%s4 + $0x4] sm:$0xf]
        %v589 = vld [vmem:[%s4 + $0x8] sm:$0xf]
        %v590 = vld [vmem:[%s4 + $0xc] sm:$0xf]
        %v591 = vld [vmem:[#allocation6] sm:$0x1]
        %v593 = vlaneseq
        %v594 = vshrl.u32 %v593, 7
        %v595 = vsub.s32 0, %v594
        %v596 = vrot.slane %v591, %v595
        %v602 = vunpack.c.l.b16 %v587
        %v603 = vunpack.c.l.b16 %v588
        %v604 = vunpack.c.l.b16 %v589
        %v605 = vunpack.c.l.b16 %v590
        %v606 = vpack.c.b16 %v603, %v602
        %v607 = vpack.c.b16 %v605, %v604
        %v611 = vsel %vm555, %v584, 0
        %613 = vmatprep.subr.bf16.mxu0 0
        %614 = vmatpush1.bf16.msra.mxu0 %v606
        %615 = vmatprep.subr.bf16.mxu0 0
        %616 = vmatpush1.bf16.msra.mxu0 %v607
        %617 = vmatprep.subr.bf16.mxu0 0
        %618 = vmatpush1.bf16.msra.mxu0 0
        %619 = vmatprep.subr.bf16.mxu0 0
        %620 = vmatpush1.bf16.msra.mxu0 0
        %621 = vmatprep.subr.bf16.mxu0 0
        %622 = vmatpush1.bf16.msra.mxu0 0
        %623 = vmatprep.subr.bf16.mxu0 0
        %624 = vmatpush1.bf16.msra.mxu0 0
        %625 = vmatprep.subr.bf16.mxu0 0
        %626 = vmatpush1.bf16.msra.mxu0 0
        %627 = vmatprep.subr.bf16.mxu0 0
        %628 = vmatpush1.bf16.msra.mxu0 0
        %629 = vmatprep.subr.bf16.mxu0 0
        %630 = vmatpush1.bf16.msra.mxu0 0
        %631 = vmatprep.subr.bf16.mxu0 0
        %632 = vmatpush1.bf16.msra.mxu0 0
        %633 = vmatprep.subr.bf16.mxu0 0
        %634 = vmatpush1.bf16.msra.mxu0 0
        %635 = vmatprep.subr.bf16.mxu0 0
        %636 = vmatpush1.bf16.msra.mxu0 0
        %637 = vmatprep.subr.bf16.mxu0 0
        %638 = vmatpush1.bf16.msra.mxu0 0
        %639 = vmatprep.subr.bf16.mxu0 0
        %640 = vmatpush1.bf16.msra.mxu0 0
        %641 = vmatprep.subr.bf16.mxu0 0
        %642 = vmatpush1.bf16.msra.mxu0 0
        %643 = vmatprep.subr.bf16.mxu0 0
        %644 = vmatpush1.bf16.msra.mxu0 0
        %645 = vmatprep.mubr.bf16.mxu0 0
        %646 = vmatmul.mubr.bf16.gmra.mrb[0].mxu0 %v611
        %v647 = vpop.f32.mrb[0].mxu0
        %v648 = vadd.f32 %v596, %v647
        %v649 = vpop.f32.mrb[0].mxu0
        %v650 = vpop.f32.mrb[0].mxu0
        %v651 = vpop.f32.mrb[0].mxu0
        %652 = vdwg.mxu0
        %v653 = vpack.c.bf16 %v648, %v648
        %655 = vrot.lane.b32.xlu0 %v653, 96
        %v656 = vpop.permute.xlu0 %655
        %vm657 = vcmask 64512
        %v659 = vsel %vm657, %v653, 0
        %v662 = vsel %vm657, %v656, 0
        %664 = vmatprep.subr.bf16.mxu0 0
        %665 = vmatpush1.bf16.xpose.msra.mxu0 %v662
        %666 = vmatprep.subr.bf16.mxu0 0
        %667 = vmatpush1.bf16.xpose.msra.mxu0 0
        %668 = vmatprep.subr.bf16.mxu0 0
        %669 = vmatpush1.bf16.xpose.msra.mxu0 0
        %670 = vmatprep.subr.bf16.mxu0 0
        %671 = vmatpush1.bf16.xpose.msra.mxu0 0
        %672 = vmatprep.subr.bf16.mxu0 0
        %673 = vmatpush1.bf16.xpose.msra.mxu0 0
        %674 = vmatprep.subr.bf16.mxu0 0
        %675 = vmatpush1.bf16.xpose.msra.mxu0 0
        %676 = vmatprep.subr.bf16.mxu0 0
        %677 = vmatpush1.bf16.xpose.msra.mxu0 0
        %678 = vmatprep.subr.bf16.mxu0 0
        %679 = vmatpush1.bf16.xpose.msra.mxu0 0
        %680 = vmatprep.subr.bf16.mxu0 0
        %681 = vmatpush1.bf16.xpose.msra.mxu0 0
        %682 = vmatprep.subr.bf16.mxu0 0
        %683 = vmatpush1.bf16.xpose.msra.mxu0 0
        %684 = vmatprep.subr.bf16.mxu0 0
        %685 = vmatpush1.bf16.xpose.msra.mxu0 0
        %686 = vmatprep.subr.bf16.mxu0 0
        %687 = vmatpush1.bf16.xpose.msra.mxu0 0
        %688 = vmatprep.subr.bf16.mxu0 0
        %689 = vmatpush1.bf16.xpose.msra.mxu0 0
        %690 = vmatprep.subr.bf16.mxu0 0
        %691 = vmatpush1.bf16.xpose.msra.mxu0 0
        %692 = vmatprep.subr.bf16.mxu0 0
        %693 = vmatpush1.bf16.xpose.msra.mxu0 0
        %694 = vmatprep.subr.bf16.mxu0 0
        %695 = vmatpush1.bf16.xpose.msra.mxu0 0
        %696 = vmatprep.mubr.bf16.mxu0 0
        %697 = vmatmul.mubr.bf16.gmra.mrb[0].mxu0 %v659
        %v698 = vpop.f32.mrb[0].mxu0
        %v699 = vadd.f32 %v585, %v698
        %v700 = vpop.f32.mrb[0].mxu0
        %v701 = vpop.f32.mrb[0].mxu0
        %v702 = vpop.f32.mrb[0].mxu0
        %703 = vdwg.mxu0
        %v704 = vsel %vm657, %v699, -inf
        %705 = vmax.xlane.f32.xlu0 %v704
        %v706 = vpop.xlane.xlu0 %705
        %v707 = vsub.f32 %v699, %v706
        %v708 = vmul.f32 %v707, 1.442695
        %v709 = vpow.pop %v708
        %v710 = vsel %vm657, %v709, 0.0
        %711 = vadd.xlane.f32.xlu0 %v710
        %v712 = vpop.xlane.xlu0 %711
        %v713 = vpack.c.bf16 %v709, %v709
        %714 = vrot.lane.b32.xlu0 %v653, 64
        %v715 = vpop.permute.xlu0 %714
        %v717 = vsel %vm657, %v713, 0
        %vm719 = vcmask 1043456
        %v721 = vsel %vm719, %v715, 0
        %723 = vmatprep.subr.bf16.mxu0 0
        %724 = vmatpush1.bf16.msra.mxu0 %v721
        %725 = vmatprep.subr.bf16.mxu0 0
        %726 = vmatpush1.bf16.msra.mxu0 0
        %727 = vmatprep.subr.bf16.mxu0 0
        %728 = vmatpush1.bf16.msra.mxu0 0
        %729 = vmatprep.subr.bf16.mxu0 0
        %730 = vmatpush1.bf16.msra.mxu0 0
        %731 = vmatprep.subr.bf16.mxu0 0
        %732 = vmatpush1.bf16.msra.mxu0 0
        %733 = vmatprep.subr.bf16.mxu0 0
        %734 = vmatpush1.bf16.msra.mxu0 0
        %735 = vmatprep.subr.bf16.mxu0 0
        %736 = vmatpush1.bf16.msra.mxu0 0
        %737 = vmatprep.subr.bf16.mxu0 0
        %738 = vmatpush1.bf16.msra.mxu0 0
        %739 = vmatprep.subr.bf16.mxu0 0
        %740 = vmatpush1.bf16.msra.mxu0 0
        %741 = vmatprep.subr.bf16.mxu0 0
        %742 = vmatpush1.bf16.msra.mxu0 0
        %743 = vmatprep.subr.bf16.mxu0 0
        %744 = vmatpush1.bf16.msra.mxu0 0
        %745 = vmatprep.subr.bf16.mxu0 0
        %746 = vmatpush1.bf16.msra.mxu0 0
        %747 = vmatprep.subr.bf16.mxu0 0
        %748 = vmatpush1.bf16.msra.mxu0 0
        %749 = vmatprep.subr.bf16.mxu0 0
        %750 = vmatpush1.bf16.msra.mxu0 0
        %751 = vmatprep.subr.bf16.mxu0 0
        %752 = vmatpush1.bf16.msra.mxu0 0
        %753 = vmatprep.subr.bf16.mxu0 0
        %754 = vmatpush1.bf16.msra.mxu0 0
        %755 = vmatprep.mubr.bf16.mxu0 0
        %756 = vmatmul.mubr.bf16.gmra.mrb[0].mxu0 %v717
        %v757 = vpop.f32.mrb[0].mxu0
        %v758 = vadd.f32 0.0, %v757
        %v759 = vpop.f32.mrb[0].mxu0
        %v760 = vpop.f32.mrb[0].mxu0
        %v761 = vpop.f32.mrb[0].mxu0
        %762 = vdwg.mxu0
        %v763 = vrcp.pop %v712
        %v764 = vmul.f32 %v758, %v763
        %v765 = vpack.c.bf16 %v764, %v764
        %766 = vrot.lane.b32.xlu0 %v653, 120
        %v767 = vpop.permute.xlu0 %766
        %768 = vrot.lane.b32.xlu0 %v653, 88
        %v769 = vpop.permute.xlu0 %768
        %v771 = vsel %vm657, %v767, 0
        %v774 = vsel %vm657, %v769, 0
        %776 = vmatprep.subr.bf16.mxu0 0
        %777 = vmatpush1.bf16.xpose.msra.mxu0 %v774
        %778 = vmatprep.subr.bf16.mxu0 0
        %779 = vmatpush1.bf16.xpose.msra.mxu0 0
        %780 = vmatprep.subr.bf16.mxu0 0
        %781 = vmatpush1.bf16.xpose.msra.mxu0 0
        %782 = vmatprep.subr.bf16.mxu0 0
        %783 = vmatpush1.bf16.xpose.msra.mxu0 0
        %784 = vmatprep.subr.bf16.mxu0 0
        %785 = vmatpush1.bf16.xpose.msra.mxu0 0
        %786 = vmatprep.subr.bf16.mxu0 0
        %787 = vmatpush1.bf16.xpose.msra.mxu0 0
        %788 = vmatprep.subr.bf16.mxu0 0
        %789 = vmatpush1.bf16.xpose.msra.mxu0 0
        %790 = vmatprep.subr.bf16.mxu0 0
        %791 = vmatpush1.bf16.xpose.msra.mxu0 0
        %792 = vmatprep.subr.bf16.mxu0 0
        %793 = vmatpush1.bf16.xpose.msra.mxu0 0
        %794 = vmatprep.subr.bf16.mxu0 0
        %795 = vmatpush1.bf16.xpose.msra.mxu0 0
        %796 = vmatprep.subr.bf16.mxu0 0
        %797 = vmatpush1.bf16.xpose.msra.mxu0 0
        %798 = vmatprep.subr.bf16.mxu0 0
        %799 = vmatpush1.bf16.xpose.msra.mxu0 0
        %800 = vmatprep.subr.bf16.mxu0 0
        %801 = vmatpush1.bf16.xpose.msra.mxu0 0
        %802 = vmatprep.subr.bf16.mxu0 0
        %803 = vmatpush1.bf16.xpose.msra.mxu0 0
        %804 = vmatprep.subr.bf16.mxu0 0
        %805 = vmatpush1.bf16.xpose.msra.mxu0 0
        %806 = vmatprep.subr.bf16.mxu0 0
        %807 = vmatpush1.bf16.xpose.msra.mxu0 0
        %808 = vmatprep.mubr.bf16.mxu0 0
        %809 = vmatmul.mubr.bf16.gmra.mrb[0].mxu0 %v771
        %v810 = vpop.f32.mrb[0].mxu0
        %v811 = vadd.f32 %v585, %v810
        %v812 = vpop.f32.mrb[0].mxu0
        %v813 = vpop.f32.mrb[0].mxu0
        %v814 = vpop.f32.mrb[0].mxu0
        %815 = vdwg.mxu0
        %v816 = vsel %vm657, %v811, -inf
        %817 = vmax.xlane.f32.xlu0 %v816
        %v818 = vpop.xlane.xlu0 %817
        %v819 = vsub.f32 %v811, %v818
        %v820 = vmul.f32 %v819, 1.442695
        %v821 = vpow.pop %v820
        %v822 = vsel %vm657, %v821, 0.0
        %823 = vadd.xlane.f32.xlu0 %v822
        %v824 = vpop.xlane.xlu0 %823
        %v825 = vpack.c.bf16 %v821, %v821
        %826 = vrot.lane.b32.xlu0 %v653, 56
        %v827 = vpop.permute.xlu0 %826
        %v829 = vsel %vm657, %v825, 0
        %v832 = vsel %vm719, %v827, 0
        %834 = vmatprep.subr.bf16.mxu0 0
        %835 = vmatpush1.bf16.msra.mxu0 %v832
        %836 = vmatprep.subr.bf16.mxu0 0
        %837 = vmatpush1.bf16.msra.mxu0 0
        %838 = vmatprep.subr.bf16.mxu0 0
        %839 = vmatpush1.bf16.msra.mxu0 0
        %840 = vmatprep.subr.bf16.mxu0 0
        %841 = vmatpush1.bf16.msra.mxu0 0
        %842 = vmatprep.subr.bf16.mxu0 0
        %843 = vmatpush1.bf16.msra.mxu0 0
        %844 = vmatprep.subr.bf16.mxu0 0
        %845 = vmatpush1.bf16.msra.mxu0 0
        %846 = vmatprep.subr.bf16.mxu0 0
        %847 = vmatpush1.bf16.msra.mxu0 0
        %848 = vmatprep.subr.bf16.mxu0 0
        %849 = vmatpush1.bf16.msra.mxu0 0
        %850 = vmatprep.subr.bf16.mxu0 0
        %851 = vmatpush1.bf16.msra.mxu0 0
        %852 = vmatprep.subr.bf16.mxu0 0
        %853 = vmatpush1.bf16.msra.mxu0 0
        %854 = vmatprep.subr.bf16.mxu0 0
        %855 = vmatpush1.bf16.msra.mxu0 0
        %856 = vmatprep.subr.bf16.mxu0 0
        %857 = vmatpush1.bf16.msra.mxu0 0
        %858 = vmatprep.subr.bf16.mxu0 0
        %859 = vmatpush1.bf16.msra.mxu0 0
        %860 = vmatprep.subr.bf16.mxu0 0
        %861 = vmatpush1.bf16.msra.mxu0 0
        %862 = vmatprep.subr.bf16.mxu0 0
        %863 = vmatpush1.bf16.msra.mxu0 0
        %864 = vmatprep.subr.bf16.mxu0 0
        %865 = vmatpush1.bf16.msra.mxu0 0
        %866 = vmatprep.mubr.bf16.mxu0 0
        %867 = vmatmul.mubr.bf16.gmra.mrb[0].mxu0 %v829
        %v868 = vpop.f32.mrb[0].mxu0
        %v869 = vadd.f32 0.0, %v868
        %v870 = vpop.f32.mrb[0].mxu0
        %v871 = vpop.f32.mrb[0].mxu0
        %v872 = vpop.f32.mrb[0].mxu0
        %873 = vdwg.mxu0
        %v874 = vrcp.pop %v824
        %v875 = vmul.f32 %v869, %v874
        %v876 = vpack.c.bf16 %v875, %v875
        %877 = vrot.lane.b32.xlu0 %v653, 112
        %v878 = vpop.permute.xlu0 %877
        %879 = vrot.lane.b32.xlu0 %v653, 80
        %v880 = vpop.permute.xlu0 %879
        %v882 = vsel %vm657, %v878, 0
        %v885 = vsel %vm657, %v880, 0
        %887 = vmatprep.subr.bf16.mxu0 0
        %888 = vmatpush1.bf16.xpose.msra.mxu0 %v885
        %889 = vmatprep.subr.bf16.mxu0 0
        %890 = vmatpush1.bf16.xpose.msra.mxu0 0
        %891 = vmatprep.subr.bf16.mxu0 0
        %892 = vmatpush1.bf16.xpose.msra.mxu0 0
        %893 = vmatprep.subr.bf16.mxu0 0
        %894 = vmatpush1.bf16.xpose.msra.mxu0 0
        %895 = vmatprep.subr.bf16.mxu0 0
        %896 = vmatpush1.bf16.xpose.msra.mxu0 0
        %897 = vmatprep.subr.bf16.mxu0 0
        %898 = vmatpush1.bf16.xpose.msra.mxu0 0
        %899 = vmatprep.subr.bf16.mxu0 0
        %900 = vmatpush1.bf16.xpose.msra.mxu0 0
        %901 = vmatprep.subr.bf16.mxu0 0
        %902 = vmatpush1.bf16.xpose.msra.mxu0 0
        %903 = vmatprep.subr.bf16.mxu0 0
        %904 = vmatpush1.bf16.xpose.msra.mxu0 0
        %905 = vmatprep.subr.bf16.mxu0 0
        %906 = vmatpush1.bf16.xpose.msra.mxu0 0
        %907 = vmatprep.subr.bf16.mxu0 0
        %908 = vmatpush1.bf16.xpose.msra.mxu0 0
        %909 = vmatprep.subr.bf16.mxu0 0
        %910 = vmatpush1.bf16.xpose.msra.mxu0 0
        %911 = vmatprep.subr.bf16.mxu0 0
        %912 = vmatpush1.bf16.xpose.msra.mxu0 0
        %913 = vmatprep.subr.bf16.mxu0 0
        %914 = vmatpush1.bf16.xpose.msra.mxu0 0
        %915 = vmatprep.subr.bf16.mxu0 0
        %916 = vmatpush1.bf16.xpose.msra.mxu0 0
        %917 = vmatprep.subr.bf16.mxu0 0
        %918 = vmatpush1.bf16.xpose.msra.mxu0 0
        %919 = vmatprep.mubr.bf16.mxu0 0
        %920 = vmatmul.mubr.bf16.gmra.mrb[0].mxu0 %v882
        %v921 = vpop.f32.mrb[0].mxu0
        %v922 = vadd.f32 %v585, %v921
        %v923 = vpop.f32.mrb[0].mxu0
        %v924 = vpop.f32.mrb[0].mxu0
        %v925 = vpop.f32.mrb[0].mxu0
        %926 = vdwg.mxu0
        %v927 = vsel %vm657, %v922, -inf
        %928 = vmax.xlane.f32.xlu0 %v927
        %v929 = vpop.xlane.xlu0 %928
        %v930 = vsub.f32 %v922, %v929
        %v931 = vmul.f32 %v930, 1.442695
        %v932 = vpow.pop %v931
        %v933 = vsel %vm657, %v932, 0.0
        %934 = vadd.xlane.f32.xlu0 %v933
        %v935 = vpop.xlane.xlu0 %934
        %v936 = vpack.c.bf16 %v932, %v932
        %937 = vrot.lane.b32.xlu0 %v653, 48
        %v938 = vpop.permute.xlu0 %937
        %v940 = vsel %vm657, %v936, 0
        %v943 = vsel %vm719, %v938, 0
        %945 = vmatprep.subr.bf16.mxu0 0
        %946 = vmatpush1.bf16.msra.mxu0 %v943
        %947 = vmatprep.subr.bf16.mxu0 0
        %948 = vmatpush1.bf16.msra.mxu0 0
        %949 = vmatprep.subr.bf16.mxu0 0
        %950 = vmatpush1.bf16.msra.mxu0 0
        %951 = vmatprep.subr.bf16.mxu0 0
        %952 = vmatpush1.bf16.msra.mxu0 0
        %953 = vmatprep.subr.bf16.mxu0 0
        %954 = vmatpush1.bf16.msra.mxu0 0
        %955 = vmatprep.subr.bf16.mxu0 0
        %956 = vmatpush1.bf16.msra.mxu0 0
        %957 = vmatprep.subr.bf16.mxu0 0
        %958 = vmatpush1.bf16.msra.mxu0 0
        %959 = vmatprep.subr.bf16.mxu0 0
        %960 = vmatpush1.bf16.msra.mxu0 0
        %961 = vmatprep.subr.bf16.mxu0 0
        %962 = vmatpush1.bf16.msra.mxu0 0
        %963 = vmatprep.subr.bf16.mxu0 0
        %964 = vmatpush1.bf16.msra.mxu0 0
        %965 = vmatprep.subr.bf16.mxu0 0
        %966 = vmatpush1.bf16.msra.mxu0 0
        %967 = vmatprep.subr.bf16.mxu0 0
        %968 = vmatpush1.bf16.msra.mxu0 0
        %969 = vmatprep.subr.bf16.mxu0 0
        %970 = vmatpush1.bf16.msra.mxu0 0
        %971 = vmatprep.subr.bf16.mxu0 0
        %972 = vmatpush1.bf16.msra.mxu0 0
        %973 = vmatprep.subr.bf16.mxu0 0
        %974 = vmatpush1.bf16.msra.mxu0 0
        %975 = vmatprep.subr.bf16.mxu0 0
        %976 = vmatpush1.bf16.msra.mxu0 0
        %977 = vmatprep.mubr.bf16.mxu0 0
        %978 = vmatmul.mubr.bf16.gmra.mrb[0].mxu0 %v940
        %v979 = vpop.f32.mrb[0].mxu0
        %v980 = vadd.f32 0.0, %v979
        %v981 = vpop.f32.mrb[0].mxu0
        %v982 = vpop.f32.mrb[0].mxu0
        %v983 = vpop.f32.mrb[0].mxu0
        %984 = vdwg.mxu0
        %v985 = vrcp.pop %v935
        %v986 = vmul.f32 %v980, %v985
        %v987 = vpack.c.bf16 %v986, %v986
        %988 = vrot.lane.b32.xlu0 %v653, 104
        %v989 = vpop.permute.xlu0 %988
        %990 = vrot.lane.b32.xlu0 %v653, 72
        %v991 = vpop.permute.xlu0 %990
        %v993 = vsel %vm657, %v989, 0
        %v996 = vsel %vm657, %v991, 0
        %998 = vmatprep.subr.bf16.mxu0 0
        %999 = vmatpush1.bf16.xpose.msra.mxu0 %v996
        %1000 = vmatprep.subr.bf16.mxu0 0
        %1001 = vmatpush1.bf16.xpose.msra.mxu0 0
        %1002 = vmatprep.subr.bf16.mxu0 0
        %1003 = vmatpush1.bf16.xpose.msra.mxu0 0
        %1004 = vmatprep.subr.bf16.mxu0 0
        %1005 = vmatpush1.bf16.xpose.msra.mxu0 0
        %1006 = vmatprep.subr.bf16.mxu0 0
        %1007 = vmatpush1.bf16.xpose.msra.mxu0 0
        %1008 = vmatprep.subr.bf16.mxu0 0
        %1009 = vmatpush1.bf16.xpose.msra.mxu0 0
        %1010 = vmatprep.subr.bf16.mxu0 0
        %1011 = vmatpush1.bf16.xpose.msra.mxu0 0
        %1012 = vmatprep.subr.bf16.mxu0 0
        %1013 = vmatpush1.bf16.xpose.msra.mxu0 0
        %1014 = vmatprep.subr.bf16.mxu0 0
        %1015 = vmatpush1.bf16.xpose.msra.mxu0 0
        %1016 = vmatprep.subr.bf16.mxu0 0
        %1017 = vmatpush1.bf16.xpose.msra.mxu0 0
        %1018 = vmatprep.subr.bf16.mxu0 0
        %1019 = vmatpush1.bf16.xpose.msra.mxu0 0
        %1020 = vmatprep.subr.bf16.mxu0 0
        %1021 = vmatpush1.bf16.xpose.msra.mxu0 0
        %1022 = vmatprep.subr.bf16.mxu0 0
        %1023 = vmatpush1.bf16.xpose.msra.mxu0 0
        %1024 = vmatprep.subr.bf16.mxu0 0
        %1025 = vmatpush1.bf16.xpose.msra.mxu0 0
        %1026 = vmatprep.subr.bf16.mxu0 0
        %1027 = vmatpush1.bf16.xpose.msra.mxu0 0
        %1028 = vmatprep.subr.bf16.mxu0 0
        %1029 = vmatpush1.bf16.xpose.msra.mxu0 0
        %1030 = vmatprep.mubr.bf16.mxu0 0
        %1031 = vmatmul.mubr.bf16.gmra.mrb[0].mxu0 %v993
        %v1032 = vpop.f32.mrb[0].mxu0
        %v1033 = vadd.f32 %v585, %v1032
        %v1034 = vpop.f32.mrb[0].mxu0
        %v1035 = vpop.f32.mrb[0].mxu0
        %v1036 = vpop.f32.mrb[0].mxu0
        %1037 = vdwg.mxu0
        %v1038 = vsel %vm657, %v1033, -inf
        %1039 = vmax.xlane.f32.xlu0 %v1038
        %v1040 = vpop.xlane.xlu0 %1039
        %v1041 = vsub.f32 %v1033, %v1040
        %v1042 = vmul.f32 %v1041, 1.442695
        %v1043 = vpow.pop %v1042
        %v1044 = vsel %vm657, %v1043, 0.0
        %1045 = vadd.xlane.f32.xlu0 %v1044
        %v1046 = vpop.xlane.xlu0 %1045
        %v1047 = vpack.c.bf16 %v1043, %v1043
        %1048 = vrot.lane.b32.xlu0 %v653, 40
        %v1049 = vpop.permute.xlu0 %1048
        %v1051 = vsel %vm657, %v1047, 0
        %v1054 = vsel %vm719, %v1049, 0
        %1056 = vmatprep.subr.bf16.mxu0 0
        %1057 = vmatpush1.bf16.msra.mxu0 %v1054
        %1058 = vmatprep.subr.bf16.mxu0 0
        %1059 = vmatpush1.bf16.msra.mxu0 0
        %1060 = vmatprep.subr.bf16.mxu0 0
        %1061 = vmatpush1.bf16.msra.mxu0 0
        %1062 = vmatprep.subr.bf16.mxu0 0
        %1063 = vmatpush1.bf16.msra.mxu0 0
        %1064 = vmatprep.subr.bf16.mxu0 0
        %1065 = vmatpush1.bf16.msra.mxu0 0
        %1066 = vmatprep.subr.bf16.mxu0 0
        %1067 = vmatpush1.bf16.msra.mxu0 0
        %1068 = vmatprep.subr.bf16.mxu0 0
        %1069 = vmatpush1.bf16.msra.mxu0 0
        %1070 = vmatprep.subr.bf16.mxu0 0
        %1071 = vmatpush1.bf16.msra.mxu0 0
        %1072 = vmatprep.subr.bf16.mxu0 0
        %1073 = vmatpush1.bf16.msra.mxu0 0
        %1074 = vmatprep.subr.bf16.mxu0 0
        %1075 = vmatpush1.bf16.msra.mxu0 0
        %1076 = vmatprep.subr.bf16.mxu0 0
        %1077 = vmatpush1.bf16.msra.mxu0 0
        %1078 = vmatprep.subr.bf16.mxu0 0
        %1079 = vmatpush1.bf16.msra.mxu0 0
        %1080 = vmatprep.subr.bf16.mxu0 0
        %1081 = vmatpush1.bf16.msra.mxu0 0
        %1082 = vmatprep.subr.bf16.mxu0 0
        %1083 = vmatpush1.bf16.msra.mxu0 0
        %1084 = vmatprep.subr.bf16.mxu0 0
        %1085 = vmatpush1.bf16.msra.mxu0 0
        %1086 = vmatprep.subr.bf16.mxu0 0
        %1087 = vmatpush1.bf16.msra.mxu0 0
        %1088 = vmatprep.mubr.bf16.mxu0 0
        %1089 = vmatmul.mubr.bf16.gmra.mrb[0].mxu0 %v1051
        %v1090 = vpop.f32.mrb[0].mxu0
        %v1091 = vadd.f32 0.0, %v1090
        %v1092 = vpop.f32.mrb[0].mxu0
        %v1093 = vpop.f32.mrb[0].mxu0
        %v1094 = vpop.f32.mrb[0].mxu0
        %1095 = vdwg.mxu0
        %v1096 = vrcp.pop %v1046
        %v1097 = vmul.f32 %v1091, %v1096
        %v1098 = vpack.c.bf16 %v1097, %v1097
        %1100 = vrot.lane.b32.xlu0 %v876, 8
        %v1101 = vpop.permute.xlu0 %1100
        %1103 = vrot.lane.b32.xlu0 %v987, 16
        %v1104 = vpop.permute.xlu0 %1103
        %1106 = vrot.lane.b32.xlu0 %v1098, 24
        %v1107 = vpop.permute.xlu0 %1106
        %v1110 = vsel %vm657, %v765, %v1101
        %vm1111 = vcmask 130048
        %v1113 = vsel %vm1111, %v1110, %v1104
        %vm1114 = vcmask 195584
        %v1116 = vsel %vm1114, %v1113, %v1107
        %v1117 = vld [vmem:[#allocation2] sm:$0xff]
        %v1118 = vld [vmem:[%s6] sm:$0xf]
        %v1119 = vld [vmem:[%s6 + $0x4] sm:$0xf]
        %v1120 = vld [vmem:[%s6 + $0x8] sm:$0xf]
        %v1121 = vld [vmem:[%s6 + $0xc] sm:$0xf]
        %v1126 = vunpack.c.l.b16 %v1118
        %v1127 = vunpack.c.l.b16 %v1119
        %v1128 = vunpack.c.l.b16 %v1120
        %v1129 = vunpack.c.l.b16 %v1121
        %v1130 = vpack.c.b16 %v1127, %v1126
        %v1131 = vpack.c.b16 %v1129, %v1128
        %v1134 = vsel %vm555, %v1116, 0
        %1136 = vmatprep.subr.bf16.mxu0 0
        %1137 = vmatpush1.bf16.msra.mxu0 %v1130
        %1138 = vmatprep.subr.bf16.mxu0 0
        %1139 = vmatpush1.bf16.msra.mxu0 %v1131
        %1140 = vmatprep.subr.bf16.mxu0 0
        %1141 = vmatpush1.bf16.msra.mxu0 0
        %1142 = vmatprep.subr.bf16.mxu0 0
        %1143 = vmatpush1.bf16.msra.mxu0 0
        %1144 = vmatprep.subr.bf16.mxu0 0
        %1145 = vmatpush1.bf16.msra.mxu0 0
        %1146 = vmatprep.subr.bf16.mxu0 0
        %1147 = vmatpush1.bf16.msra.mxu0 0
        %1148 = vmatprep.subr.bf16.mxu0 0
        %1149 = vmatpush1.bf16.msra.mxu0 0
        %1150 = vmatprep.subr.bf16.mxu0 0
        %1151 = vmatpush1.bf16.msra.mxu0 0
        %1152 = vmatprep.subr.bf16.mxu0 0
        %1153 = vmatpush1.bf16.msra.mxu0 0
        %1154 = vmatprep.subr.bf16.mxu0 0
        %1155 = vmatpush1.bf16.msra.mxu0 0
        %1156 = vmatprep.subr.bf16.mxu0 0
        %1157 = vmatpush1.bf16.msra.mxu0 0
        %1158 = vmatprep.subr.bf16.mxu0 0
        %1159 = vmatpush1.bf16.msra.mxu0 0
        %1160 = vmatprep.subr.bf16.mxu0 0
        %1161 = vmatpush1.bf16.msra.mxu0 0
        %1162 = vmatprep.subr.bf16.mxu0 0
        %1163 = vmatpush1.bf16.msra.mxu0 0
        %1164 = vmatprep.subr.bf16.mxu0 0
        %1165 = vmatpush1.bf16.msra.mxu0 0
        %1166 = vmatprep.subr.bf16.mxu0 0
        %1167 = vmatpush1.bf16.msra.mxu0 0
        %1168 = vmatprep.mubr.bf16.mxu0 0
        %1169 = vmatmul.mubr.bf16.gmra.mrb[0].mxu0 %v1134
        %v1170 = vpop.f32.mrb[0].mxu0
        %v1171 = vadd.f32 0.0, %v1170
        %v1172 = vpop.f32.mrb[0].mxu0
        %v1173 = vpop.f32.mrb[0].mxu0
        %v1174 = vpop.f32.mrb[0].mxu0
        %1175 = vdwg.mxu0
        %v1176 = vadd.f32 %v1117, %v1171
        %1177 = vst.msk [vmem:[#allocation2] sm:$0xff] %vm555, %v1176
        %v1178 = vld [vmem:[#allocation2] sm:$0xff]
        %v1179 = vadd.f32 %v552, %v1178
        %v1180 = vld [vmem:[#allocation8] sm:$0x1]
        %v1182 = vlaneseq
        %v1183 = vshrl.u32 %v1182, 7
        %v1184 = vsub.s32 0, %v1183
        %v1185 = vrot.slane %v1180, %v1184
        %v1187 = vadd.f32 %v1179, %v1185
        %v1188 = vld [vmem:[#allocation9] sm:$0x1]
        %v1189 = vld [vmem:[#allocation11] sm:$0x1]
        %v1190 = vsel %vm555, %v1187, 0.0
        %1191 = vadd.xlane.f32.xlu0 %v1190
        %v1192 = vpop.xlane.xlu0 %1191
        %v1193 = vmul.f32 %v1192, %v559
        %v1194 = vsub.f32 %v1187, %v1193
        %v1195 = vmul.f32 %v1194, %v1194
        %v1196 = vsel %vm555, %v1195, 0.0
        %1197 = vadd.xlane.f32.xlu0 %v1196
        %v1198 = vpop.xlane.xlu0 %1197
        %v1199 = vmul.f32 %v1198, %v559
        %v1200 = vadd.f32 %v1199, 1e-05
        %v1201 = vrsqrt.pop %v1200
        %v1202 = vmul.f32 %v1194, %v1201
        %v1204 = vlaneseq
        %v1205 = vshrl.u32 %v1204, 7
        %v1206 = vsub.s32 0, %v1205
        %v1207 = vrot.slane %v1188, %v1206
        %v1209 = vmul.f32 %v1202, %v1207
        %v1211 = vlaneseq
        %v1212 = vshrl.u32 %v1211, 7
        %v1213 = vsub.s32 0, %v1212
        %v1214 = vrot.slane %v1189, %v1213
        %v1216 = vadd.f32 %v1209, %v1214
        %v1217 = vpack.c.bf16 %v1216, %v1216
        %v1218 = vld [vmem:[%s10] sm:$0xf]
        %v1219 = vld [vmem:[%s10 + $0x4] sm:$0xf]
        %v1220 = vld [vmem:[%s10 + $0x8] sm:$0xf]
        %v1221 = vld [vmem:[%s10 + $0xc] sm:$0xf]
        %v1222 = vld [vmem:[#allocation12] sm:$0x1]
        %v1224 = vlaneseq
        %v1225 = vshrl.u32 %v1224, 7
        %v1226 = vsub.s32 0, %v1225
        %v1227 = vrot.slane %v1222, %v1226
        %v1233 = vunpack.c.l.b16 %v1218
        %v1234 = vunpack.c.l.b16 %v1219
        %v1235 = vunpack.c.l.b16 %v1220
        %v1236 = vunpack.c.l.b16 %v1221
        %v1237 = vpack.c.b16 %v1234, %v1233
        %v1238 = vpack.c.b16 %v1236, %v1235
        %v1242 = vsel %vm555, %v1217, 0
        %1244 = vmatprep.subr.bf16.mxu0 0
        %1245 = vmatpush1.bf16.msra.mxu0 %v1237
        %1246 = vmatprep.subr.bf16.mxu0 0
        %1247 = vmatpush1.bf16.msra.mxu0 %v1238
        %1248 = vmatprep.subr.bf16.mxu0 0
        %1249 = vmatpush1.bf16.msra.mxu0 0
        %1250 = vmatprep.subr.bf16.mxu0 0
        %1251 = vmatpush1.bf16.msra.mxu0 0
        %1252 = vmatprep.subr.bf16.mxu0 0
        %1253 = vmatpush1.bf16.msra.mxu0 0
        %1254 = vmatprep.subr.bf16.mxu0 0
        %1255 = vmatpush1.bf16.msra.mxu0 0
        %1256 = vmatprep.subr.bf16.mxu0 0
        %1257 = vmatpush1.bf16.msra.mxu0 0
        %1258 = vmatprep.subr.bf16.mxu0 0
        %1259 = vmatpush1.bf16.msra.mxu0 0
        %1260 = vmatprep.subr.bf16.mxu0 0
        %1261 = vmatpush1.bf16.msra.mxu0 0
        %1262 = vmatprep.subr.bf16.mxu0 0
        %1263 = vmatpush1.bf16.msra.mxu0 0
        %1264 = vmatprep.subr.bf16.mxu0 0
        %1265 = vmatpush1.bf16.msra.mxu0 0
        %1266 = vmatprep.subr.bf16.mxu0 0
        %1267 = vmatpush1.bf16.msra.mxu0 0
        %1268 = vmatprep.subr.bf16.mxu0 0
        %1269 = vmatpush1.bf16.msra.mxu0 0
        %1270 = vmatprep.subr.bf16.mxu0 0
        %1271 = vmatpush1.bf16.msra.mxu0 0
        %1272 = vmatprep.subr.bf16.mxu0 0
        %1273 = vmatpush1.bf16.msra.mxu0 0
        %1274 = vmatprep.subr.bf16.mxu0 0
        %1275 = vmatpush1.bf16.msra.mxu0 0
        %1276 = vmatprep.mubr.bf16.mxu0 0
        %1277 = vmatmul.mubr.bf16.gmra.mrb[0].mxu0 %v1242
        %v1278 = vpop.f32.mrb[0].mxu0
        %v1279 = vadd.f32 %v1227, %v1278
        %v1280 = vpop.f32.mrb[0].mxu0
        %v1281 = vpop.f32.mrb[0].mxu0
        %v1282 = vpop.f32.mrb[0].mxu0
        %1283 = vdwg.mxu0
        %v1284 = vmul.f32 %v1279, 1.702
        %v1285 = vxor.u32 %v1284, 2147483648
        %v1286 = vmul.f32 %v1285, 1.442695
        %v1287 = vpow.pop %v1286
        %v1288 = vadd.f32 %v1287, 1.0
        %v1289 = vrcp.pop %v1288
        %v1290 = vmul.f32 1.0, %v1289
        %v1291 = vmul.f32 %v1279, %v1290
        %v1292 = vpack.c.bf16 %v1291, %v1291
        %v1293 = vld [vmem:[%s12] sm:$0xf]
        %v1294 = vld [vmem:[%s12 + $0x4] sm:$0xf]
        %v1295 = vld [vmem:[%s12 + $0x8] sm:$0xf]
        %v1296 = vld [vmem:[%s12 + $0xc] sm:$0xf]
        %v1297 = vld [vmem:[%s12 + $0x10] sm:$0xf]
        %v1298 = vld [vmem:[%s12 + $0x14] sm:$0xf]
        %v1299 = vld [vmem:[%s12 + $0x18] sm:$0xf]
        %v1300 = vld [vmem:[%s12 + $0x1c] sm:$0xf]
        %v1301 = vld [vmem:[#allocation14] sm:$0x1]
        %v1303 = vlaneseq
        %v1304 = vshrl.u32 %v1303, 7
        %v1305 = vsub.s32 0, %v1304
        %v1306 = vrot.slane %v1301, %v1305
        %v1316 = vunpack.c.l.b16 %v1293
        %v1317 = vunpack.c.l.b16 %v1294
        %v1318 = vunpack.c.l.b16 %v1295
        %v1319 = vunpack.c.l.b16 %v1296
        %v1320 = vunpack.c.l.b16 %v1297
        %v1321 = vunpack.c.l.b16 %v1298
        %v1322 = vunpack.c.l.b16 %v1299
        %v1323 = vunpack.c.l.b16 %v1300
        %v1324 = vpack.c.b16 %v1317, %v1316
        %v1325 = vpack.c.b16 %v1319, %v1318
        %v1326 = vpack.c.b16 %v1321, %v1320
        %v1327 = vpack.c.b16 %v1323, %v1322
        %vm1332 = vcmask 523264
        %v1334 = vsel %vm1332, %v1292, 0
        %1336 = vmatprep.subr.bf16.mxu0 0
        %1337 = vmatpush1.bf16.msra.mxu0 %v1324
        %1338 = vmatprep.subr.bf16.mxu0 0
        %1339 = vmatpush1.bf16.msra.mxu0 %v1325
        %1340 = vmatprep.subr.bf16.mxu0 0
        %1341 = vmatpush1.bf16.msra.mxu0 %v1326
        %1342 = vmatprep.subr.bf16.mxu0 0
        %1343 = vmatpush1.bf16.msra.mxu0 %v1327
        %1344 = vmatprep.subr.bf16.mxu0 0
        %1345 = vmatpush1.bf16.msra.mxu0 0
        %1346 = vmatprep.subr.bf16.mxu0 0
        %1347 = vmatpush1.bf16.msra.mxu0 0
        %1348 = vmatprep.subr.bf16.mxu0 0
        %1349 = vmatpush1.bf16.msra.mxu0 0
        %1350 = vmatprep.subr.bf16.mxu0 0
        %1351 = vmatpush1.bf16.msra.mxu0 0
        %1352 = vmatprep.subr.bf16.mxu0 0
        %1353 = vmatpush1.bf16.msra.mxu0 0
        %1354 = vmatprep.subr.bf16.mxu0 0
        %1355 = vmatpush1.bf16.msra.mxu0 0
        %1356 = vmatprep.subr.bf16.mxu0 0
        %1357 = vmatpush1.bf16.msra.mxu0 0
        %1358 = vmatprep.subr.bf16.mxu0 0
        %1359 = vmatpush1.bf16.msra.mxu0 0
        %1360 = vmatprep.subr.bf16.mxu0 0
        %1361 = vmatpush1.bf16.msra.mxu0 0
        %1362 = vmatprep.subr.bf16.mxu0 0
        %1363 = vmatpush1.bf16.msra.mxu0 0
        %1364 = vmatprep.subr.bf16.mxu0 0
        %1365 = vmatpush1.bf16.msra.mxu0 0
        %1366 = vmatprep.subr.bf16.mxu0 0
        %1367 = vmatpush1.bf16.msra.mxu0 0
        %1368 = vmatprep.mubr.bf16.mxu0 0
        %1369 = vmatmul.mubr.bf16.gmra.mrb[0].mxu0 %v1334
        %v1370 = vpop.f32.mrb[0].mxu0
        %v1371 = vadd.f32 %v1306, %v1370
        %v1372 = vpop.f32.mrb[0].mxu0
        %v1373 = vpop.f32.mrb[0].mxu0
        %v1374 = vpop.f32.mrb[0].mxu0
        %1375 = vdwg.mxu0
        %v1376 = vadd.f32 %v1187, %v1371
        %1377 = vst.msk [vmem:[%s546] sm:$0xff] %vm555, %v1376
        %s1378 = sand.u32 %s339, 1
        %s1379 = scalar_lea.sflag [#allocation5], %s1378
        %s1380 = sand.u32 %s339, 1
        %s1381 = smul.addr %s1380, 8
        %s1382 = scalar_lea.vmem [#allocation15], %s1381
        // Predicated region
        $region105: #{clip_encoder_layer.1} parent=75 // pred_check
          %p1383 = pneg %p349
        $region106: #{clip_encoder_layer.1} parent=75 // pred_check_branch
          %1385 = sbr.rel (%p1383) target = $region108
        $region107: #{clip_encoder_layer.1} parent=75 // pred_region
          %s1387 = ssub.s32 128, 128
          %1388 = vsyncadd %s1379, %s1387
          %s1389 = smul.addr %s32, 128
          %s1390 = scalar_lea.hbm %s14, %s1389
          %s1392 = sshll.u32 %s1382, 4
          %s1393 = int_to_ptr.vmem [resolvable:$true] %s1392
          %1395 = dma.vmem_to_hbm [thread:$0]  %s1393, 128, %s1390, %s1379
        $region108: #{clip_encoder_layer.1} parent=75 // pred_fallthru
          _
      $region76: #{clip_encoder_layer.1} parent=5 // pred_fallthru
        _
      %p1396 = scmp.le.s32.totalorder 2, %s27
      // Predicated region
      $region109: #{clip_encoder_layer.1} parent=5 // pred_check
        %p1397 = pneg %p1396
      $region110: #{clip_encoder_layer.1} parent=5 // pred_check_branch
        %1399 = sbr.rel (%p1397) target = $region112
      $region111: #{clip_encoder_layer.1} parent=5 // pred_region
        %s1400 = ssub.s32 %s27, 2
        // Predicated region
        $region113: #{clip_encoder_layer.1} parent=111 // pred_check
          %p1401 = pneg %p355
        $region114: #{clip_encoder_layer.1} parent=111 // pred_check_branch
          %1403 = sbr.rel (%p1401) target = $region116
        $region115: #{clip_encoder_layer.1} parent=111 // pred_region
          %s1404 = sand.u32 %s340, 1
          %s1405 = scalar_lea.sflag [#allocation5], %s1404
          %s1406 = sand.u32 %s340, 1
          %s1407 = smul.addr %s1406, 8
          %s1408 = scalar_lea.vmem [#allocation15], %s1407
          %1409 = dma.done %s1405, 128
        $region116: #{clip_encoder_layer.1} parent=111 // pred_fallthru
          _
      $region112: #{clip_encoder_layer.1} parent=5 // pred_fallthru
        _
    $region6: #{clip_encoder_layer.1} parent=1 // loop_footer
      %s31 = sadd.s32 1, %s27
    $region7: #{clip_encoder_layer.1} parent=1 // loop_footer_branch
      %26 = sbr.rel target = $region3
    $region8: #{clip_encoder_layer.1} parent=1 // loop_exit
      _
    %1410 = vsyncpa [#allocation4], 1
    %s1411 = scalar_lea.sflag [#allocation4], 1
    %1412 = vsyncpa %s1411, 1
    %1413 = vsyncpa [#allocation7], 1
    %1414 = vsyncpa [#allocation10], 1
    %1415 = vsyncpa [#allocation13], 1
    %1416 = vsyncpa [#allocation5], 1
    %s1417 = scalar_lea.sflag [#allocation5], 1
    %1418 = vsyncpa %s1417, 1

</llo_original>
